<compile_context>
chip_gen: v7x
topology: tpu7x:2x2x1
jax: 0.10.0
libtpu: 0.0.40
codegen_flags: <defaults>
</compile_context>

<pallas_src>
import functools

import jax
import jax.numpy as jnp
import numpy as np
from jax import lax
from jax.experimental import pallas as pl
from jax.experimental.pallas import tpu as pltpu

LN_EPS = 1e-5
RMS_EPS = 1e-5
_INV_SQRT2 = 0.7071067811865476


# ----------------------------- fused stack kernel ---------------------------


def _decoder_stack_kernel(
    scal_ref, x_ref, enc_ref, ln_ref,
    ca_wqkv_ref, ca_wo_ref, ca_g_ref,
    sa_wqkv_ref, sa_wo_ref, sa_g_ref,
    w1_ref, b1_ref, w2_ref, b2_ref,
    o_ref, *, num_heads,
):
    l = pl.program_id(0)                       # layer index (grid axis, "arbitrary")
    B, N, D = x_ref.shape
    S = enc_ref.shape[1]
    H = num_heads
    dh = D // (2 * H)                          # per sub-head dim

    # Layer 0: seed the resident output block (residual stream) from the input.
    @pl.when(l == 0)
    def _():
        o_ref[...] = x_ref[...]

    def layer_norm(v, row):                    # v: (B*N, D) f32; rows of ln_ref
        g = ln_ref[row:row + 1, :]
        b = ln_ref[row + 1:row + 2, :]
        mu = jnp.mean(v, axis=-1, keepdims=True)
        var = jnp.mean(jnp.square(v - mu), axis=-1, keepdims=True)
        return (v - mu) * lax.rsqrt(var + LN_EPS) * g + b

    def softmax(s):                            # reduce over last (lane) axis
        m = jnp.max(s, axis=-1, keepdims=True)
        e = jnp.exp(s - m)
        # approx reciprocal runs on the EUP slot; ~2^-12 rel. error accepted.
        return e * pl.reciprocal(jnp.sum(e, axis=-1, keepdims=True), approx=True)

    def to_heads(t, rows, width, nh):
        # (B*rows, nh*width) f32 -> (B*nh, rows, width) bf16, head-major.
        # Only leading-dim reshapes + static lane slices + leading concat.
        t3 = t.reshape(B, rows, nh * width)
        parts = [t3[:, :, i * width:(i + 1) * width] for i in range(nh)]
        return jnp.stack(parts, axis=1).reshape(B * nh, rows, width).astype(jnp.bfloat16)

    def diff_attn(xq, src_b, rows_kv, wqkv_ref, wo_ref, g_ref, lam):
        xq_b = xq.astype(jnp.bfloat16)
        if src_b is None:                      # self-attention: one fused QKV matmul
            qkv = jnp.dot(xq_b, wqkv_ref[...], preferred_element_type=jnp.float32)
            q, k, v = qkv[:, :D], qkv[:, D:2 * D], qkv[:, 2 * D:]
        else:                                  # cross-attention: Q + fused KV matmuls
            q = jnp.dot(xq_b, wqkv_ref[:, :D], preferred_element_type=jnp.float32)
            kv = jnp.dot(src_b, wqkv_ref[:, D:], preferred_element_type=jnp.float32)
            k, v = kv[:, :D], kv[:, D:]

        # head-major layouts (q/k columns are sub-head-major; scaling already folded in)
        qh = to_heads(q, N, dh, 2 * H)         # (B*2H, N,   dh)
        kh = to_heads(k, rows_kv, dh, 2 * H)   # (B*2H, Skv, dh)
        vh = to_heads(v, rows_kv, 2 * dh, H)   # (B*H,  Skv, 2dh)

        # single batched score matmul over all (batch, sub-head) pairs
        s = lax.dot_general(qh, kh, (((2,), (2,)), ((0,), (0,))),
                            preferred_element_type=jnp.float32)      # (B*2H, N, Skv)
        sm = softmax(s).reshape(B, 2 * H, N, rows_kv)
        # sub-head 1 = first H entries, sub-head 2 = last H (contiguous slices)
        p = sm[:, :H] - lam * sm[:, H:]                               # (B, H, N, Skv)
        p = p.reshape(B * H, N, rows_kv).astype(jnp.bfloat16)

        o = lax.dot_general(p, vh, (((2,), (1,)), ((0,), (0,))),
                            preferred_element_type=jnp.float32)      # (B*H, N, 2dh)
        ms = jnp.mean(o * o, axis=-1, keepdims=True)                 # per-head RMSNorm
        o = o * lax.rsqrt(ms + RMS_EPS) * g_ref[...]                 # g includes (1-lambda_init)

        o4 = o.reshape(B, H, N, 2 * dh)
        merged = jnp.concatenate([o4[:, h] for h in range(H)], axis=-1)   # (B, N, D)
        merged = merged.reshape(B * N, D).astype(jnp.bfloat16)
        return jnp.dot(merged, wo_ref[...], preferred_element_type=jnp.float32)

    ca_lam = scal_ref[l, 0]
    sa_lam = scal_ref[l, 1]

    x = o_ref[...].astype(jnp.float32).reshape(B * N, D)      # residual stream, f32
    enc_b = enc_ref[...].reshape(B * S, D)                     # bf16 text context

    # cross-attention (text -> stocks): pre-norm + residual   (dropout = identity)
    h = layer_norm(x, 0)
    x = x + diff_attn(h, enc_b, S, ca_wqkv_ref, ca_wo_ref, ca_g_ref, ca_lam)

    # self-attention (stock <-> stock): pre-norm + residual
    h = layer_norm(x, 2)
    x = x + diff_attn(h, None, N, sa_wqkv_ref, sa_wo_ref, sa_g_ref, sa_lam)

    # feed-forward (exact erf GELU, matching nn.GELU()): pre-norm + residual
    h = layer_norm(x, 4)
    f = jnp.dot(h.astype(jnp.bfloat16), w1_ref[...],
                preferred_element_type=jnp.float32) + b1_ref[...]
    f = 0.5 * f * (1.0 + lax.erf(f * _INV_SQRT2))
    f = jnp.dot(f.astype(jnp.bfloat16), w2_ref[...],
                preferred_element_type=jnp.float32) + b2_ref[...]

    o_ref[...] = (x + f).reshape(B, N, D).astype(o_ref.dtype)


# --------------------------------- wrapper -----------------------------------


def stock_decoder(x, encoder_output, params, num_heads):
    """x: (B, N, D) f32, encoder_output: (B, S, D) f32, params: stacked per layer."""
    B, N, D = x.shape
    S = encoder_output.shape[1]
    L = int(params["scalars"].shape[0])

    enc_b = encoder_output.astype(jnp.bfloat16)   # k/v projection operands are bf16 anyway

    weight_names = ["ln", "ca_wqkv", "ca_wo", "ca_g", "sa_wqkv", "sa_wo", "sa_g",
                    "w_ff1", "b_ff1", "w_ff2", "b_ff2"]
    weights = [params[n] for n in weight_names]   # each (L, a, b), layer-stacked

    def wspec(arr):                                # select layer l, squeeze layer axis
        return pl.BlockSpec((None,) + arr.shape[1:], lambda l: (l, 0, 0))

    in_specs = [
        pl.BlockSpec(memory_space=pltpu.MemorySpace.SMEM),   # per-layer lambda scalars
        pl.BlockSpec((B, N, D), lambda l: (0, 0, 0)),        # x (seed, constant block)
        pl.BlockSpec((B, S, D), lambda l: (0, 0, 0)),        # encoder output (constant)
    ] + [wspec(w) for w in weights]

    # VMEM budget: double-buffered per-layer operands + resident activations + headroom.
    per_step = sum(int(np.prod(w.shape[1:])) * w.dtype.itemsize for w in weights)
    per_step += 2 * x.size * x.dtype.itemsize + enc_b.size * enc_b.dtype.itemsize
    vmem_limit = int(min(max(2 * per_step + (16 << 20), 32 << 20), 100 << 20))

    # Advisory cost estimate (helps XLA schedule around the custom call).
    bn, bs = B * N, B * S
    flops_layer = (2 * bn * D * D            # cross q proj
                   + 2 * bs * D * 2 * D      # cross kv proj
                   + 4 * B * N * S * D       # cross scores + PV
                   + 2 * bn * D * D          # cross out proj
                   + 2 * bn * D * 3 * D      # self qkv proj
                   + 4 * B * N * N * D       # self scores + PV
                   + 2 * bn * D * D          # self out proj
                   + 16 * bn * D * D)        # FFN
    transc_layer = 2 * B * num_heads * N * (S + N) + bn * 4 * D
    bytes_accessed = (2 * x.size * x.dtype.itemsize
                      + enc_b.size * enc_b.dtype.itemsize
                      + sum(int(w.size) * w.dtype.itemsize for w in weights)
                      + int(params["scalars"].size) * 4)

    kernel = functools.partial(_decoder_stack_kernel, num_heads=num_heads)
    return pl.pallas_call(
        kernel,
        out_shape=jax.ShapeDtypeStruct((B, N, D), x.dtype),
        grid=(L,),
        in_specs=in_specs,
        out_specs=pl.BlockSpec((B, N, D), lambda l: (0, 0, 0)),   # resident across layers
        compiler_params=pltpu.CompilerParams(
            dimension_semantics=("arbitrary",),
            vmem_limit_bytes=vmem_limit),
        cost_estimate=pl.CostEstimate(
            flops=L * flops_layer,
            transcendentals=L * transc_layer,
            bytes_accessed=int(bytes_accessed)),
    )(params["scalars"], x, enc_b, *weights)


# --------------------------- parameter creation ------------------------------


def _init_diff_attn(key, hidden_dim, num_heads, depth):
    D, H = hidden_dim, num_heads
    dh = D // H // 2
    ks = jax.random.split(key, 8)
    std = 0.02
    wq = np.asarray(jax.random.normal(ks[0], (D, D), jnp.float32)) * std
    wk = np.asarray(jax.random.normal(ks[1], (D, D), jnp.float32)) * std
    wv = np.asarray(jax.random.normal(ks[2], (D, D), jnp.float32)) * std
    wo = np.asarray(jax.random.normal(ks[3], (D, D), jnp.float32)) * std
    lq1 = np.asarray(jax.random.normal(ks[4], (dh,), jnp.float32)) * 0.1
    lk1 = np.asarray(jax.random.normal(ks[5], (dh,), jnp.float32)) * 0.1
    lq2 = np.asarray(jax.random.normal(ks[6], (dh,), jnp.float32)) * 0.1
    lk2 = np.asarray(jax.random.normal(ks[7], (dh,), jnp.float32)) * 0.1
    lambda_init = float(0.8 - 0.6 * np.exp(-0.3 * depth))
    lambda_full = float(np.exp(np.sum(lq1 * lk1)) - np.exp(np.sum(lq2 * lk2)) + lambda_init)

    def subhead_major(w):
        # output columns [h0s1,h0s2,h1s1,...] -> [h0s1,h1s1,...,h0s2,h1s2,...]
        # (when importing PyTorch weights, apply this same permutation to W_q.T / W_k.T)
        return w.reshape(D, H, 2, dh).transpose(0, 2, 1, 3).reshape(D, D)

    wq = subhead_major(wq * (dh ** -0.5))        # fold dh**-0.5 q-scaling into projection
    wk = subhead_major(wk)
    wqkv = jnp.asarray(np.concatenate([wq, wk, wv], axis=1), jnp.bfloat16)
    # per-head RMSNorm gain with (1 - lambda_init) folded in
    g = jnp.full((1, 2 * dh), 1.0 - lambda_init, jnp.float32)
    return dict(wqkv=wqkv, wo=jnp.asarray(wo, jnp.bfloat16), g=g), lambda_full


def _init_layer(key, hidden_dim, num_heads, depth):
    D = hidden_dim
    ks = jax.random.split(key, 4)
    std = 0.02
    ca, ca_lam = _init_diff_attn(ks[0], D, num_heads, depth)
    sa, sa_lam = _init_diff_attn(ks[1], D, num_heads, depth)
    ones = jnp.ones((D,), jnp.float32)
    zeros = jnp.zeros((D,), jnp.float32)
    return dict(
        scalars=jnp.array([ca_lam, sa_lam], jnp.float32),
        ln=jnp.stack([ones, zeros, ones, zeros, ones, zeros], axis=0),   # norm1/2/3 g,b
        ca_wqkv=ca["wqkv"], ca_wo=ca["wo"], ca_g=ca["g"],
        sa_wqkv=sa["wqkv"], sa_wo=sa["wo"], sa_g=sa["g"],
        w_ff1=(jax.random.normal(ks[2], (D, 4 * D), jnp.float32) * std).astype(jnp.bfloat16),
        b_ff1=jnp.zeros((1, 4 * D), jnp.float32),
        w_ff2=(jax.random.normal(ks[3], (4 * D, D), jnp.float32) * std).astype(jnp.bfloat16),
        b_ff2=jnp.zeros((1, D), jnp.float32),
    )


def init_stock_decoder_params(key, num_layers, hidden_dim, num_heads):
    layer_keys = jax.random.split(key, num_layers)
    layers = [_init_layer(layer_keys[i], hidden_dim, num_heads, depth=i)
              for i in range(num_layers)]
    return {name: jnp.stack([lp[name] for lp in layers], axis=0) for name in layers[0]}


# ---------------------------------- main -------------------------------------

if __name__ == "__main__":
    num_layers = 2
    hidden_dim = 128      # lane-dense: every block's last dim is a full 128 lanes
    num_heads = 4         # sub-head dim dh = 128 / (2*4) = 16
    batch = 2
    num_stocks = 8
    seq_len = 16

    root = jax.random.PRNGKey(0)
    k_x, k_enc, k_params = jax.random.split(root, 3)

    x = jax.random.normal(k_x, (batch, num_stocks, hidden_dim), jnp.float32)
    encoder_output = jax.random.normal(k_enc, (batch, seq_len, hidden_dim), jnp.float32)

    params = init_stock_decoder_params(k_params, num_layers, hidden_dim, num_heads)

    fwd = jax.jit(functools.partial(stock_decoder, num_heads=num_heads))
    out = fwd(x, encoder_output, params)
    out = jax.block_until_ready(out)
    assert out.shape == (batch, num_stocks, hidden_dim)
    assert bool(jnp.all(jnp.isfinite(out)))
    print("KERNEL_OK")
</pallas_src>

<mosaic_0001>
module attributes {stable_mosaic.version = 11 : i64} {
  func.func @_decoder_stack_kernel(%arg0: i32, %arg1: memref<2x2xf32, #tpu.memory_space<smem>>, %arg2: memref<2x8x128xf32, #tpu.memory_space<vmem>>, %arg3: memref<2x16x128xbf16, #tpu.memory_space<vmem>>, %arg4: memref<1x6x128xf32, #tpu.memory_space<vmem>>, %arg5: memref<1x128x384xbf16, #tpu.memory_space<vmem>>, %arg6: memref<1x128x128xbf16, #tpu.memory_space<vmem>>, %arg7: memref<1x1x32xf32, #tpu.memory_space<vmem>>, %arg8: memref<1x128x384xbf16, #tpu.memory_space<vmem>>, %arg9: memref<1x128x128xbf16, #tpu.memory_space<vmem>>, %arg10: memref<1x1x32xf32, #tpu.memory_space<vmem>>, %arg11: memref<1x128x512xbf16, #tpu.memory_space<vmem>>, %arg12: memref<1x1x512xf32, #tpu.memory_space<vmem>>, %arg13: memref<1x512x128xbf16, #tpu.memory_space<vmem>>, %arg14: memref<1x1x128xf32, #tpu.memory_space<vmem>>, %arg15: memref<2x8x128xf32, #tpu.memory_space<vmem>>) attributes {dimension_semantics = [#tpu.dimension_semantics<arbitrary>], iteration_bounds = array<i64: 2>, scalar_prefetch = 0 : i64, scratch_operands = 0 : i64, tpu.core_type = #tpu.core_type<tc>, window_params = [{transform_indices = @transform_0, window_bounds = array<i64: 2, 2>}, {pipeline_mode = #tpu.pipeline_mode<synchronous>, transform_indices = @transform_1, window_bounds = array<i64: 2, 8, 128>}, {pipeline_mode = #tpu.pipeline_mode<synchronous>, transform_indices = @transform_2, window_bounds = array<i64: 2, 16, 128>}, {transform_indices = @transform_3, window_bounds = array<i64: 1, 6, 128>}, {transform_indices = @transform_4, window_bounds = array<i64: 1, 128, 384>}, {transform_indices = @transform_5, window_bounds = array<i64: 1, 128, 128>}, {transform_indices = @transform_6, window_bounds = array<i64: 1, 1, 32>}, {transform_indices = @transform_7, window_bounds = array<i64: 1, 128, 384>}, {transform_indices = @transform_8, window_bounds = array<i64: 1, 128, 128>}, {transform_indices = @transform_9, window_bounds = array<i64: 1, 1, 32>}, {transform_indices = @transform_10, window_bounds = array<i64: 1, 128, 512>}, {transform_indices = @transform_11, window_bounds = array<i64: 1, 1, 512>}, {transform_indices = @transform_12, window_bounds = array<i64: 1, 512, 128>}, {transform_indices = @transform_13, window_bounds = array<i64: 1, 1, 128>}, {pipeline_mode = #tpu.pipeline_mode<synchronous>, transform_indices = @transform_14, window_bounds = array<i64: 2, 8, 128>}]} {
    %c0_i32 = arith.constant 0 : i32
    %0 = arith.cmpi eq, %arg0, %c0_i32 : i32
    %1 = arith.extui %0 : i1 to i32
    %c0_i32_0 = arith.constant 0 : i32
    %2 = arith.cmpi ne, %1, %c0_i32_0 : i32
    scf.if %2 {
      %c0_94 = arith.constant 0 : index
      %c0_95 = arith.constant 0 : index
      %c0_96 = arith.constant 0 : index
      %338 = vector.load %arg2[%c0_94, %c0_95, %c0_96] : memref<2x8x128xf32, #tpu.memory_space<vmem>>, vector<2x8x128xf32>
      %c0_97 = arith.constant 0 : index
      %c0_98 = arith.constant 0 : index
      %c0_99 = arith.constant 0 : index
      %339 = vector.load %arg15[%c0_97, %c0_98, %c0_99] : memref<2x8x128xf32, #tpu.memory_space<vmem>>, vector<2x8x128xf32>
      tpu.vector_store %arg15[%c0_97, %c0_98, %c0_99], %338 {strides = array<i32>} : memref<2x8x128xf32, #tpu.memory_space<vmem>>, vector<2x8x128xf32>,
    } else {
    }
    %3 = arith.index_cast %arg0 : i32 to index
    %c0 = arith.constant 0 : index
    %4 = memref.load %arg1[%3, %c0] : memref<2x2xf32, #tpu.memory_space<smem>>
    %5 = arith.index_cast %arg0 : i32 to index
    %c1 = arith.constant 1 : index
    %6 = memref.load %arg1[%5, %c1] : memref<2x2xf32, #tpu.memory_space<smem>>
    %c0_1 = arith.constant 0 : index
    %c0_2 = arith.constant 0 : index
    %c0_3 = arith.constant 0 : index
    %7 = vector.load %arg15[%c0_1, %c0_2, %c0_3] : memref<2x8x128xf32, #tpu.memory_space<vmem>>, vector<2x8x128xf32>
    %8 = vector.shape_cast %7 : vector<2x8x128xf32> to vector<16x128xf32>
    %c0_4 = arith.constant 0 : index
    %c0_5 = arith.constant 0 : index
    %c0_6 = arith.constant 0 : index
    %9 = vector.load %arg3[%c0_4, %c0_5, %c0_6] : memref<2x16x128xbf16, #tpu.memory_space<vmem>>, vector<2x16x128xbf16>
    %10 = vector.shape_cast %9 : vector<2x16x128xbf16> to vector<32x128xbf16>
    %c0_7 = arith.constant 0 : index
    %c0_8 = arith.constant 0 : index
    %c0_9 = arith.constant 0 : index
    %11 = vector.load %arg4[%c0_7, %c0_8, %c0_9] : memref<1x6x128xf32, #tpu.memory_space<vmem>>, vector<1x1x128xf32>
    %12 = vector.shape_cast %11 : vector<1x1x128xf32> to vector<1x128xf32>
    %c0_10 = arith.constant 0 : index
    %c1_11 = arith.constant 1 : index
    %c0_12 = arith.constant 0 : index
    %13 = vector.load %arg4[%c0_10, %c1_11, %c0_12] : memref<1x6x128xf32, #tpu.memory_space<vmem>>, vector<1x1x128xf32>
    %14 = vector.shape_cast %13 : vector<1x1x128xf32> to vector<1x128xf32>
    %cst = arith.constant dense<0.000000e+00> : vector<16xf32>
    %15 = vector.multi_reduction <add>, %8, %cst [1] : vector<16x128xf32> to vector<16xf32>
    %16 = vector.shape_cast %15 : vector<16xf32> to vector<16x1xf32>
    %cst_13 = arith.constant 1.280000e+02 : f32
    %17 = vector.broadcast %cst_13 : f32 to vector<16x1xf32>
    %18 = arith.divf %16, %17 : vector<16x1xf32>
    %19 = vector.broadcast %18 : vector<16x1xf32> to vector<16x128xf32>
    %20 = arith.subf %8, %19 : vector<16x128xf32>
    %21 = arith.mulf %20, %20 : vector<16x128xf32>
    %cst_14 = arith.constant dense<0.000000e+00> : vector<16xf32>
    %22 = vector.multi_reduction <add>, %21, %cst_14 [1] : vector<16x128xf32> to vector<16xf32>
    %23 = vector.shape_cast %22 : vector<16xf32> to vector<16x1xf32>
    %cst_15 = arith.constant 1.280000e+02 : f32
    %24 = vector.broadcast %cst_15 : f32 to vector<16x1xf32>
    %25 = arith.divf %23, %24 : vector<16x1xf32>
    %26 = vector.broadcast %18 : vector<16x1xf32> to vector<16x128xf32>
    %27 = arith.subf %8, %26 : vector<16x128xf32>
    %cst_16 = arith.constant 9.99999974E-6 : f32
    %28 = vector.broadcast %cst_16 : f32 to vector<16x1xf32>
    %29 = arith.addf %25, %28 : vector<16x1xf32>
    %30 = math.rsqrt %29 : vector<16x1xf32>
    %31 = vector.broadcast %30 : vector<16x1xf32> to vector<16x128xf32>
    %32 = arith.mulf %27, %31 : vector<16x128xf32>
    %33 = vector.broadcast %12 : vector<1x128xf32> to vector<16x128xf32>
    %34 = arith.mulf %32, %33 : vector<16x128xf32>
    %35 = vector.broadcast %14 : vector<1x128xf32> to vector<16x128xf32>
    %36 = arith.addf %34, %35 : vector<16x128xf32>
    %37 = arith.truncf %36 : vector<16x128xf32> to vector<16x128xbf16>
    %c0_17 = arith.constant 0 : index
    %c0_18 = arith.constant 0 : index
    %c0_19 = arith.constant 0 : index
    %38 = vector.load %arg5[%c0_17, %c0_18, %c0_19] : memref<1x128x384xbf16, #tpu.memory_space<vmem>>, vector<1x128x128xbf16>
    %39 = vector.shape_cast %38 : vector<1x128x128xbf16> to vector<128x128xbf16>
    %cst_20 = arith.constant dense<0.000000e+00> : vector<16x128xf32>
    %40 = tpu.matmul %37, %39, %cst_20 {dimension_numbers = #tpu.dot_dimension_numbers<[1], [0], [0], [1], [0, 0, 1, 1], [], []>} : vector<16x128xbf16>, vector<128x128xbf16>, vector<16x128xf32> -> vector<16x128xf32>
    %c0_21 = arith.constant 0 : index
    %c0_22 = arith.constant 0 : index
    %c128 = arith.constant 128 : index
    %41 = vector.load %arg5[%c0_21, %c0_22, %c128] : memref<1x128x384xbf16, #tpu.memory_space<vmem>>, vector<1x128x256xbf16>
    %42 = vector.shape_cast %41 : vector<1x128x256xbf16> to vector<128x256xbf16>
    %cst_23 = arith.constant dense<0.000000e+00> : vector<32x256xf32>
    %43 = tpu.matmul %10, %42, %cst_23 {dimension_numbers = #tpu.dot_dimension_numbers<[1], [0], [0], [1], [0, 0, 1, 1], [], []>} : vector<32x128xbf16>, vector<128x256xbf16>, vector<32x256xf32> -> vector<32x256xf32>
    %44 = vector.extract_strided_slice %43 {offsets = [0, 0], sizes = [32, 128], strides = [1, 1]} : vector<32x256xf32> to vector<32x128xf32>
    %45 = vector.extract_strided_slice %43 {offsets = [0, 128], sizes = [32, 128], strides = [1, 1]} : vector<32x256xf32> to vector<32x128xf32>
    %46 = vector.shape_cast %40 : vector<16x128xf32> to vector<2x8x128xf32>
    %47 = vector.extract_strided_slice %46 {offsets = [0, 0, 0], sizes = [2, 8, 16], strides = [1, 1, 1]} : vector<2x8x128xf32> to vector<2x8x16xf32>
    %48 = vector.extract_strided_slice %46 {offsets = [0, 0, 16], sizes = [2, 8, 16], strides = [1, 1, 1]} : vector<2x8x128xf32> to vector<2x8x16xf32>
    %49 = vector.extract_strided_slice %46 {offsets = [0, 0, 32], sizes = [2, 8, 16], strides = [1, 1, 1]} : vector<2x8x128xf32> to vector<2x8x16xf32>
    %50 = vector.extract_strided_slice %46 {offsets = [0, 0, 48], sizes = [2, 8, 16], strides = [1, 1, 1]} : vector<2x8x128xf32> to vector<2x8x16xf32>
    %51 = vector.extract_strided_slice %46 {offsets = [0, 0, 64], sizes = [2, 8, 16], strides = [1, 1, 1]} : vector<2x8x128xf32> to vector<2x8x16xf32>
    %52 = vector.extract_strided_slice %46 {offsets = [0, 0, 80], sizes = [2, 8, 16], strides = [1, 1, 1]} : vector<2x8x128xf32> to vector<2x8x16xf32>
    %53 = vector.extract_strided_slice %46 {offsets = [0, 0, 96], sizes = [2, 8, 16], strides = [1, 1, 1]} : vector<2x8x128xf32> to vector<2x8x16xf32>
    %54 = vector.extract_strided_slice %46 {offsets = [0, 0, 112], sizes = [2, 8, 16], strides = [1, 1, 1]} : vector<2x8x128xf32> to vector<2x8x16xf32>
    %55 = vector.shape_cast %47 : vector<2x8x16xf32> to vector<2x1x8x16xf32>
    %56 = vector.shape_cast %48 : vector<2x8x16xf32> to vector<2x1x8x16xf32>
    %57 = vector.shape_cast %49 : vector<2x8x16xf32> to vector<2x1x8x16xf32>
    %58 = vector.shape_cast %50 : vector<2x8x16xf32> to vector<2x1x8x16xf32>
    %59 = vector.shape_cast %51 : vector<2x8x16xf32> to vector<2x1x8x16xf32>
    %60 = vector.shape_cast %52 : vector<2x8x16xf32> to vector<2x1x8x16xf32>
    %61 = vector.shape_cast %53 : vector<2x8x16xf32> to vector<2x1x8x16xf32>
    %62 = vector.shape_cast %54 : vector<2x8x16xf32> to vector<2x1x8x16xf32>
    %63 = tpu.concatenate %55, %56, %57, %58, %59, %60, %61, %62 in 1 : vector<2x1x8x16xf32>, vector<2x1x8x16xf32>, vector<2x1x8x16xf32>, vector<2x1x8x16xf32>, vector<2x1x8x16xf32>, vector<2x1x8x16xf32>, vector<2x1x8x16xf32>, vector<2x1x8x16xf32> -> vector<2x8x8x16xf32>
    %64 = vector.shape_cast %63 : vector<2x8x8x16xf32> to vector<16x8x16xf32>
    %65 = arith.truncf %64 : vector<16x8x16xf32> to vector<16x8x16xbf16>
    %66 = vector.shape_cast %44 : vector<32x128xf32> to vector<2x16x128xf32>
    %67 = vector.extract_strided_slice %66 {offsets = [0, 0, 0], sizes = [2, 16, 16], strides = [1, 1, 1]} : vector<2x16x128xf32> to vector<2x16x16xf32>
    %68 = vector.extract_strided_slice %66 {offsets = [0, 0, 16], sizes = [2, 16, 16], strides = [1, 1, 1]} : vector<2x16x128xf32> to vector<2x16x16xf32>
    %69 = vector.extract_strided_slice %66 {offsets = [0, 0, 32], sizes = [2, 16, 16], strides = [1, 1, 1]} : vector<2x16x128xf32> to vector<2x16x16xf32>
    %70 = vector.extract_strided_slice %66 {offsets = [0, 0, 48], sizes = [2, 16, 16], strides = [1, 1, 1]} : vector<2x16x128xf32> to vector<2x16x16xf32>
    %71 = vector.extract_strided_slice %66 {offsets = [0, 0, 64], sizes = [2, 16, 16], strides = [1, 1, 1]} : vector<2x16x128xf32> to vector<2x16x16xf32>
    %72 = vector.extract_strided_slice %66 {offsets = [0, 0, 80], sizes = [2, 16, 16], strides = [1, 1, 1]} : vector<2x16x128xf32> to vector<2x16x16xf32>
    %73 = vector.extract_strided_slice %66 {offsets = [0, 0, 96], sizes = [2, 16, 16], strides = [1, 1, 1]} : vector<2x16x128xf32> to vector<2x16x16xf32>
    %74 = vector.extract_strided_slice %66 {offsets = [0, 0, 112], sizes = [2, 16, 16], strides = [1, 1, 1]} : vector<2x16x128xf32> to vector<2x16x16xf32>
    %75 = vector.shape_cast %67 : vector<2x16x16xf32> to vector<2x1x16x16xf32>
    %76 = vector.shape_cast %68 : vector<2x16x16xf32> to vector<2x1x16x16xf32>
    %77 = vector.shape_cast %69 : vector<2x16x16xf32> to vector<2x1x16x16xf32>
    %78 = vector.shape_cast %70 : vector<2x16x16xf32> to vector<2x1x16x16xf32>
    %79 = vector.shape_cast %71 : vector<2x16x16xf32> to vector<2x1x16x16xf32>
    %80 = vector.shape_cast %72 : vector<2x16x16xf32> to vector<2x1x16x16xf32>
    %81 = vector.shape_cast %73 : vector<2x16x16xf32> to vector<2x1x16x16xf32>
    %82 = vector.shape_cast %74 : vector<2x16x16xf32> to vector<2x1x16x16xf32>
    %83 = tpu.concatenate %75, %76, %77, %78, %79, %80, %81, %82 in 1 : vector<2x1x16x16xf32>, vector<2x1x16x16xf32>, vector<2x1x16x16xf32>, vector<2x1x16x16xf32>, vector<2x1x16x16xf32>, vector<2x1x16x16xf32>, vector<2x1x16x16xf32>, vector<2x1x16x16xf32> -> vector<2x8x16x16xf32>
    %84 = vector.shape_cast %83 : vector<2x8x16x16xf32> to vector<16x16x16xf32>
    %85 = arith.truncf %84 : vector<16x16x16xf32> to vector<16x16x16xbf16>
    %86 = vector.shape_cast %45 : vector<32x128xf32> to vector<2x16x128xf32>
    %87 = vector.extract_strided_slice %86 {offsets = [0, 0, 0], sizes = [2, 16, 32], strides = [1, 1, 1]} : vector<2x16x128xf32> to vector<2x16x32xf32>
    %88 = vector.extract_strided_slice %86 {offsets = [0, 0, 32], sizes = [2, 16, 32], strides = [1, 1, 1]} : vector<2x16x128xf32> to vector<2x16x32xf32>
    %89 = vector.extract_strided_slice %86 {offsets = [0, 0, 64], sizes = [2, 16, 32], strides = [1, 1, 1]} : vector<2x16x128xf32> to vector<2x16x32xf32>
    %90 = vector.extract_strided_slice %86 {offsets = [0, 0, 96], sizes = [2, 16, 32], strides = [1, 1, 1]} : vector<2x16x128xf32> to vector<2x16x32xf32>
    %91 = vector.shape_cast %87 : vector<2x16x32xf32> to vector<2x1x16x32xf32>
    %92 = vector.shape_cast %88 : vector<2x16x32xf32> to vector<2x1x16x32xf32>
    %93 = vector.shape_cast %89 : vector<2x16x32xf32> to vector<2x1x16x32xf32>
    %94 = vector.shape_cast %90 : vector<2x16x32xf32> to vector<2x1x16x32xf32>
    %95 = tpu.concatenate %91, %92, %93, %94 in 1 : vector<2x1x16x32xf32>, vector<2x1x16x32xf32>, vector<2x1x16x32xf32>, vector<2x1x16x32xf32> -> vector<2x4x16x32xf32>
    %96 = vector.shape_cast %95 : vector<2x4x16x32xf32> to vector<8x16x32xf32>
    %97 = arith.truncf %96 : vector<8x16x32xf32> to vector<8x16x32xbf16>
    %cst_24 = arith.constant dense<0.000000e+00> : vector<16x8x16xf32>
    %98 = tpu.matmul %65, %85, %cst_24 {dimension_numbers = #tpu.dot_dimension_numbers<[2], [2], [1], [1], [0, 0, 0, 1, 1, 1], [0], [0]>} : vector<16x8x16xbf16>, vector<16x16x16xbf16>, vector<16x8x16xf32> -> vector<16x8x16xf32>
    %cst_25 = arith.constant dense<0xFF800000> : vector<16x8xf32>
    %99 = vector.multi_reduction <maximumf>, %98, %cst_25 [2] : vector<16x8x16xf32> to vector<16x8xf32>
    %100 = vector.shape_cast %99 : vector<16x8xf32> to vector<16x8x1xf32>
    %101 = vector.broadcast %100 : vector<16x8x1xf32> to vector<16x8x16xf32>
    %102 = arith.subf %98, %101 : vector<16x8x16xf32>
    %103 = math.exp %102 : vector<16x8x16xf32>
    %cst_26 = arith.constant dense<0.000000e+00> : vector<16x8xf32>
    %104 = vector.multi_reduction <add>, %103, %cst_26 [2] : vector<16x8x16xf32> to vector<16x8xf32>
    %105 = vector.shape_cast %104 : vector<16x8xf32> to vector<16x8x1xf32>
    %106 = tpu.reciprocal %105 {approx = true} : vector<16x8x1xf32> -> vector<16x8x1xf32>
    %107 = vector.broadcast %106 : vector<16x8x1xf32> to vector<16x8x16xf32>
    %108 = arith.mulf %103, %107 : vector<16x8x16xf32>
    %109 = vector.shape_cast %108 : vector<16x8x16xf32> to vector<2x8x8x16xf32>
    %110 = vector.extract_strided_slice %109 {offsets = [0, 0, 0, 0], sizes = [2, 4, 8, 16], strides = [1, 1, 1, 1]} : vector<2x8x8x16xf32> to vector<2x4x8x16xf32>
    %111 = vector.extract_strided_slice %109 {offsets = [0, 4, 0, 0], sizes = [2, 4, 8, 16], strides = [1, 1, 1, 1]} : vector<2x8x8x16xf32> to vector<2x4x8x16xf32>
    %112 = vector.broadcast %4 : f32 to vector<2x4x8x16xf32>
    %113 = arith.mulf %112, %111 : vector<2x4x8x16xf32>
    %114 = arith.subf %110, %113 : vector<2x4x8x16xf32>
    %115 = vector.shape_cast %114 : vector<2x4x8x16xf32> to vector<8x8x16xf32>
    %116 = arith.truncf %115 : vector<8x8x16xf32> to vector<8x8x16xbf16>
    %cst_27 = arith.constant dense<0.000000e+00> : vector<8x8x32xf32>
    %117 = tpu.matmul %116, %97, %cst_27 {dimension_numbers = #tpu.dot_dimension_numbers<[2], [1], [1], [2], [0, 0, 0, 1, 1, 2], [0], [0]>} : vector<8x8x16xbf16>, vector<8x16x32xbf16>, vector<8x8x32xf32> -> vector<8x8x32xf32>
    %118 = arith.mulf %117, %117 : vector<8x8x32xf32>
    %cst_28 = arith.constant dense<0.000000e+00> : vector<8x8xf32>
    %119 = vector.multi_reduction <add>, %118, %cst_28 [2] : vector<8x8x32xf32> to vector<8x8xf32>
    %120 = vector.shape_cast %119 : vector<8x8xf32> to vector<8x8x1xf32>
    %cst_29 = arith.constant 3.200000e+01 : f32
    %121 = vector.broadcast %cst_29 : f32 to vector<8x8x1xf32>
    %122 = arith.divf %120, %121 : vector<8x8x1xf32>
    %cst_30 = arith.constant 9.99999974E-6 : f32
    %123 = vector.broadcast %cst_30 : f32 to vector<8x8x1xf32>
    %124 = arith.addf %122, %123 : vector<8x8x1xf32>
    %125 = math.rsqrt %124 : vector<8x8x1xf32>
    %126 = vector.broadcast %125 : vector<8x8x1xf32> to vector<8x8x32xf32>
    %127 = arith.mulf %117, %126 : vector<8x8x32xf32>
    %c0_31 = arith.constant 0 : index
    %c0_32 = arith.constant 0 : index
    %c0_33 = arith.constant 0 : index
    %128 = vector.load %arg7[%c0_31, %c0_32, %c0_33] : memref<1x1x32xf32, #tpu.memory_space<vmem>>, vector<1x1x32xf32>
    %129 = vector.shape_cast %128 : vector<1x1x32xf32> to vector<1x32xf32>
    %130 = vector.shape_cast %129 : vector<1x32xf32> to vector<1x1x32xf32>
    %131 = vector.broadcast %130 : vector<1x1x32xf32> to vector<8x8x32xf32>
    %132 = arith.mulf %127, %131 : vector<8x8x32xf32>
    %133 = vector.shape_cast %132 : vector<8x8x32xf32> to vector<2x4x8x32xf32>
    %134 = vector.extract_strided_slice %133 {offsets = [0, 0, 0, 0], sizes = [2, 1, 8, 32], strides = [1, 1, 1, 1]} : vector<2x4x8x32xf32> to vector<2x1x8x32xf32>
    %135 = vector.shape_cast %134 : vector<2x1x8x32xf32> to vector<2x8x32xf32>
    %136 = vector.extract_strided_slice %133 {offsets = [0, 1, 0, 0], sizes = [2, 1, 8, 32], strides = [1, 1, 1, 1]} : vector<2x4x8x32xf32> to vector<2x1x8x32xf32>
    %137 = vector.shape_cast %136 : vector<2x1x8x32xf32> to vector<2x8x32xf32>
    %138 = vector.extract_strided_slice %133 {offsets = [0, 2, 0, 0], sizes = [2, 1, 8, 32], strides = [1, 1, 1, 1]} : vector<2x4x8x32xf32> to vector<2x1x8x32xf32>
    %139 = vector.shape_cast %138 : vector<2x1x8x32xf32> to vector<2x8x32xf32>
    %140 = vector.extract_strided_slice %133 {offsets = [0, 3, 0, 0], sizes = [2, 1, 8, 32], strides = [1, 1, 1, 1]} : vector<2x4x8x32xf32> to vector<2x1x8x32xf32>
    %141 = vector.shape_cast %140 : vector<2x1x8x32xf32> to vector<2x8x32xf32>
    %142 = tpu.concatenate %135, %137, %139, %141 in 2 : vector<2x8x32xf32>, vector<2x8x32xf32>, vector<2x8x32xf32>, vector<2x8x32xf32> -> vector<2x8x128xf32>
    %143 = vector.shape_cast %142 : vector<2x8x128xf32> to vector<16x128xf32>
    %144 = arith.truncf %143 : vector<16x128xf32> to vector<16x128xbf16>
    %c0_34 = arith.constant 0 : index
    %c0_35 = arith.constant 0 : index
    %c0_36 = arith.constant 0 : index
    %145 = vector.load %arg6[%c0_34, %c0_35, %c0_36] : memref<1x128x128xbf16, #tpu.memory_space<vmem>>, vector<1x128x128xbf16>
    %146 = vector.shape_cast %145 : vector<1x128x128xbf16> to vector<128x128xbf16>
    %cst_37 = arith.constant dense<0.000000e+00> : vector<16x128xf32>
    %147 = tpu.matmul %144, %146, %cst_37 {dimension_numbers = #tpu.dot_dimension_numbers<[1], [0], [0], [1], [0, 0, 1, 1], [], []>} : vector<16x128xbf16>, vector<128x128xbf16>, vector<16x128xf32> -> vector<16x128xf32>
    %148 = arith.addf %8, %147 : vector<16x128xf32>
    %c0_38 = arith.constant 0 : index
    %c2 = arith.constant 2 : index
    %c0_39 = arith.constant 0 : index
    %149 = vector.load %arg4[%c0_38, %c2, %c0_39] : memref<1x6x128xf32, #tpu.memory_space<vmem>>, vector<1x1x128xf32>
    %150 = vector.shape_cast %149 : vector<1x1x128xf32> to vector<1x128xf32>
    %c0_40 = arith.constant 0 : index
    %c3 = arith.constant 3 : index
    %c0_41 = arith.constant 0 : index
    %151 = vector.load %arg4[%c0_40, %c3, %c0_41] : memref<1x6x128xf32, #tpu.memory_space<vmem>>, vector<1x1x128xf32>
    %152 = vector.shape_cast %151 : vector<1x1x128xf32> to vector<1x128xf32>
    %cst_42 = arith.constant dense<0.000000e+00> : vector<16xf32>
    %153 = vector.multi_reduction <add>, %148, %cst_42 [1] : vector<16x128xf32> to vector<16xf32>
    %154 = vector.shape_cast %153 : vector<16xf32> to vector<16x1xf32>
    %cst_43 = arith.constant 1.280000e+02 : f32
    %155 = vector.broadcast %cst_43 : f32 to vector<16x1xf32>
    %156 = arith.divf %154, %155 : vector<16x1xf32>
    %157 = vector.broadcast %156 : vector<16x1xf32> to vector<16x128xf32>
    %158 = arith.subf %148, %157 : vector<16x128xf32>
    %159 = arith.mulf %158, %158 : vector<16x128xf32>
    %cst_44 = arith.constant dense<0.000000e+00> : vector<16xf32>
    %160 = vector.multi_reduction <add>, %159, %cst_44 [1] : vector<16x128xf32> to vector<16xf32>
    %161 = vector.shape_cast %160 : vector<16xf32> to vector<16x1xf32>
    %cst_45 = arith.constant 1.280000e+02 : f32
    %162 = vector.broadcast %cst_45 : f32 to vector<16x1xf32>
    %163 = arith.divf %161, %162 : vector<16x1xf32>
    %164 = vector.broadcast %156 : vector<16x1xf32> to vector<16x128xf32>
    %165 = arith.subf %148, %164 : vector<16x128xf32>
    %cst_46 = arith.constant 9.99999974E-6 : f32
    %166 = vector.broadcast %cst_46 : f32 to vector<16x1xf32>
    %167 = arith.addf %163, %166 : vector<16x1xf32>
    %168 = math.rsqrt %167 : vector<16x1xf32>
    %169 = vector.broadcast %168 : vector<16x1xf32> to vector<16x128xf32>
    %170 = arith.mulf %165, %169 : vector<16x128xf32>
    %171 = vector.broadcast %150 : vector<1x128xf32> to vector<16x128xf32>
    %172 = arith.mulf %170, %171 : vector<16x128xf32>
    %173 = vector.broadcast %152 : vector<1x128xf32> to vector<16x128xf32>
    %174 = arith.addf %172, %173 : vector<16x128xf32>
    %175 = arith.truncf %174 : vector<16x128xf32> to vector<16x128xbf16>
    %c0_47 = arith.constant 0 : index
    %c0_48 = arith.constant 0 : index
    %c0_49 = arith.constant 0 : index
    %176 = vector.load %arg8[%c0_47, %c0_48, %c0_49] : memref<1x128x384xbf16, #tpu.memory_space<vmem>>, vector<1x128x384xbf16>
    %177 = vector.shape_cast %176 : vector<1x128x384xbf16> to vector<128x384xbf16>
    %cst_50 = arith.constant dense<0.000000e+00> : vector<16x384xf32>
    %178 = tpu.matmul %175, %177, %cst_50 {dimension_numbers = #tpu.dot_dimension_numbers<[1], [0], [0], [1], [0, 0, 1, 1], [], []>} : vector<16x128xbf16>, vector<128x384xbf16>, vector<16x384xf32> -> vector<16x384xf32>
    %179 = vector.extract_strided_slice %178 {offsets = [0, 0], sizes = [16, 128], strides = [1, 1]} : vector<16x384xf32> to vector<16x128xf32>
    %180 = vector.extract_strided_slice %178 {offsets = [0, 128], sizes = [16, 128], strides = [1, 1]} : vector<16x384xf32> to vector<16x128xf32>
    %181 = vector.extract_strided_slice %178 {offsets = [0, 256], sizes = [16, 128], strides = [1, 1]} : vector<16x384xf32> to vector<16x128xf32>
    %182 = vector.shape_cast %179 : vector<16x128xf32> to vector<2x8x128xf32>
    %183 = vector.extract_strided_slice %182 {offsets = [0, 0, 0], sizes = [2, 8, 16], strides = [1, 1, 1]} : vector<2x8x128xf32> to vector<2x8x16xf32>
    %184 = vector.extract_strided_slice %182 {offsets = [0, 0, 16], sizes = [2, 8, 16], strides = [1, 1, 1]} : vector<2x8x128xf32> to vector<2x8x16xf32>
    %185 = vector.extract_strided_slice %182 {offsets = [0, 0, 32], sizes = [2, 8, 16], strides = [1, 1, 1]} : vector<2x8x128xf32> to vector<2x8x16xf32>
    %186 = vector.extract_strided_slice %182 {offsets = [0, 0, 48], sizes = [2, 8, 16], strides = [1, 1, 1]} : vector<2x8x128xf32> to vector<2x8x16xf32>
    %187 = vector.extract_strided_slice %182 {offsets = [0, 0, 64], sizes = [2, 8, 16], strides = [1, 1, 1]} : vector<2x8x128xf32> to vector<2x8x16xf32>
    %188 = vector.extract_strided_slice %182 {offsets = [0, 0, 80], sizes = [2, 8, 16], strides = [1, 1, 1]} : vector<2x8x128xf32> to vector<2x8x16xf32>
    %189 = vector.extract_strided_slice %182 {offsets = [0, 0, 96], sizes = [2, 8, 16], strides = [1, 1, 1]} : vector<2x8x128xf32> to vector<2x8x16xf32>
    %190 = vector.extract_strided_slice %182 {offsets = [0, 0, 112], sizes = [2, 8, 16], strides = [1, 1, 1]} : vector<2x8x128xf32> to vector<2x8x16xf32>
    %191 = vector.shape_cast %183 : vector<2x8x16xf32> to vector<2x1x8x16xf32>
    %192 = vector.shape_cast %184 : vector<2x8x16xf32> to vector<2x1x8x16xf32>
    %193 = vector.shape_cast %185 : vector<2x8x16xf32> to vector<2x1x8x16xf32>
    %194 = vector.shape_cast %186 : vector<2x8x16xf32> to vector<2x1x8x16xf32>
    %195 = vector.shape_cast %187 : vector<2x8x16xf32> to vector<2x1x8x16xf32>
    %196 = vector.shape_cast %188 : vector<2x8x16xf32> to vector<2x1x8x16xf32>
    %197 = vector.shape_cast %189 : vector<2x8x16xf32> to vector<2x1x8x16xf32>
    %198 = vector.shape_cast %190 : vector<2x8x16xf32> to vector<2x1x8x16xf32>
    %199 = tpu.concatenate %191, %192, %193, %194, %195, %196, %197, %198 in 1 : vector<2x1x8x16xf32>, vector<2x1x8x16xf32>, vector<2x1x8x16xf32>, vector<2x1x8x16xf32>, vector<2x1x8x16xf32>, vector<2x1x8x16xf32>, vector<2x1x8x16xf32>, vector<2x1x8x16xf32> -> vector<2x8x8x16xf32>
    %200 = vector.shape_cast %199 : vector<2x8x8x16xf32> to vector<16x8x16xf32>
    %201 = arith.truncf %200 : vector<16x8x16xf32> to vector<16x8x16xbf16>
    %202 = vector.shape_cast %180 : vector<16x128xf32> to vector<2x8x128xf32>
    %203 = vector.extract_strided_slice %202 {offsets = [0, 0, 0], sizes = [2, 8, 16], strides = [1, 1, 1]} : vector<2x8x128xf32> to vector<2x8x16xf32>
    %204 = vector.extract_strided_slice %202 {offsets = [0, 0, 16], sizes = [2, 8, 16], strides = [1, 1, 1]} : vector<2x8x128xf32> to vector<2x8x16xf32>
    %205 = vector.extract_strided_slice %202 {offsets = [0, 0, 32], sizes = [2, 8, 16], strides = [1, 1, 1]} : vector<2x8x128xf32> to vector<2x8x16xf32>
    %206 = vector.extract_strided_slice %202 {offsets = [0, 0, 48], sizes = [2, 8, 16], strides = [1, 1, 1]} : vector<2x8x128xf32> to vector<2x8x16xf32>
    %207 = vector.extract_strided_slice %202 {offsets = [0, 0, 64], sizes = [2, 8, 16], strides = [1, 1, 1]} : vector<2x8x128xf32> to vector<2x8x16xf32>
    %208 = vector.extract_strided_slice %202 {offsets = [0, 0, 80], sizes = [2, 8, 16], strides = [1, 1, 1]} : vector<2x8x128xf32> to vector<2x8x16xf32>
    %209 = vector.extract_strided_slice %202 {offsets = [0, 0, 96], sizes = [2, 8, 16], strides = [1, 1, 1]} : vector<2x8x128xf32> to vector<2x8x16xf32>
    %210 = vector.extract_strided_slice %202 {offsets = [0, 0, 112], sizes = [2, 8, 16], strides = [1, 1, 1]} : vector<2x8x128xf32> to vector<2x8x16xf32>
    %211 = vector.shape_cast %203 : vector<2x8x16xf32> to vector<2x1x8x16xf32>
    %212 = vector.shape_cast %204 : vector<2x8x16xf32> to vector<2x1x8x16xf32>
    %213 = vector.shape_cast %205 : vector<2x8x16xf32> to vector<2x1x8x16xf32>
    %214 = vector.shape_cast %206 : vector<2x8x16xf32> to vector<2x1x8x16xf32>
    %215 = vector.shape_cast %207 : vector<2x8x16xf32> to vector<2x1x8x16xf32>
    %216 = vector.shape_cast %208 : vector<2x8x16xf32> to vector<2x1x8x16xf32>
    %217 = vector.shape_cast %209 : vector<2x8x16xf32> to vector<2x1x8x16xf32>
    %218 = vector.shape_cast %210 : vector<2x8x16xf32> to vector<2x1x8x16xf32>
    %219 = tpu.concatenate %211, %212, %213, %214, %215, %216, %217, %218 in 1 : vector<2x1x8x16xf32>, vector<2x1x8x16xf32>, vector<2x1x8x16xf32>, vector<2x1x8x16xf32>, vector<2x1x8x16xf32>, vector<2x1x8x16xf32>, vector<2x1x8x16xf32>, vector<2x1x8x16xf32> -> vector<2x8x8x16xf32>
    %220 = vector.shape_cast %219 : vector<2x8x8x16xf32> to vector<16x8x16xf32>
    %221 = arith.truncf %220 : vector<16x8x16xf32> to vector<16x8x16xbf16>
    %222 = vector.shape_cast %181 : vector<16x128xf32> to vector<2x8x128xf32>
    %223 = vector.extract_strided_slice %222 {offsets = [0, 0, 0], sizes = [2, 8, 32], strides = [1, 1, 1]} : vector<2x8x128xf32> to vector<2x8x32xf32>
    %224 = vector.extract_strided_slice %222 {offsets = [0, 0, 32], sizes = [2, 8, 32], strides = [1, 1, 1]} : vector<2x8x128xf32> to vector<2x8x32xf32>
    %225 = vector.extract_strided_slice %222 {offsets = [0, 0, 64], sizes = [2, 8, 32], strides = [1, 1, 1]} : vector<2x8x128xf32> to vector<2x8x32xf32>
    %226 = vector.extract_strided_slice %222 {offsets = [0, 0, 96], sizes = [2, 8, 32], strides = [1, 1, 1]} : vector<2x8x128xf32> to vector<2x8x32xf32>
    %227 = vector.shape_cast %223 : vector<2x8x32xf32> to vector<2x1x8x32xf32>
    %228 = vector.shape_cast %224 : vector<2x8x32xf32> to vector<2x1x8x32xf32>
    %229 = vector.shape_cast %225 : vector<2x8x32xf32> to vector<2x1x8x32xf32>
    %230 = vector.shape_cast %226 : vector<2x8x32xf32> to vector<2x1x8x32xf32>
    %231 = tpu.concatenate %227, %228, %229, %230 in 1 : vector<2x1x8x32xf32>, vector<2x1x8x32xf32>, vector<2x1x8x32xf32>, vector<2x1x8x32xf32> -> vector<2x4x8x32xf32>
    %232 = vector.shape_cast %231 : vector<2x4x8x32xf32> to vector<8x8x32xf32>
    %233 = arith.truncf %232 : vector<8x8x32xf32> to vector<8x8x32xbf16>
    %cst_51 = arith.constant dense<0.000000e+00> : vector<16x8x8xf32>
    %234 = tpu.matmul %201, %221, %cst_51 {dimension_numbers = #tpu.dot_dimension_numbers<[2], [2], [1], [1], [0, 0, 0, 1, 1, 1], [0], [0]>} : vector<16x8x16xbf16>, vector<16x8x16xbf16>, vector<16x8x8xf32> -> vector<16x8x8xf32>
    %cst_52 = arith.constant dense<0xFF800000> : vector<16x8xf32>
    %235 = vector.multi_reduction <maximumf>, %234, %cst_52 [2] : vector<16x8x8xf32> to vector<16x8xf32>
    %236 = vector.shape_cast %235 : vector<16x8xf32> to vector<16x8x1xf32>
    %237 = vector.broadcast %236 : vector<16x8x1xf32> to vector<16x8x8xf32>
    %238 = arith.subf %234, %237 : vector<16x8x8xf32>
    %239 = math.exp %238 : vector<16x8x8xf32>
    %cst_53 = arith.constant dense<0.000000e+00> : vector<16x8xf32>
    %240 = vector.multi_reduction <add>, %239, %cst_53 [2] : vector<16x8x8xf32> to vector<16x8xf32>
    %241 = vector.shape_cast %240 : vector<16x8xf32> to vector<16x8x1xf32>
    %242 = tpu.reciprocal %241 {approx = true} : vector<16x8x1xf32> -> vector<16x8x1xf32>
    %243 = vector.broadcast %242 : vector<16x8x1xf32> to vector<16x8x8xf32>
    %244 = arith.mulf %239, %243 : vector<16x8x8xf32>
    %245 = vector.shape_cast %244 : vector<16x8x8xf32> to vector<2x8x8x8xf32>
    %246 = vector.extract_strided_slice %245 {offsets = [0, 0, 0, 0], sizes = [2, 4, 8, 8], strides = [1, 1, 1, 1]} : vector<2x8x8x8xf32> to vector<2x4x8x8xf32>
    %247 = vector.extract_strided_slice %245 {offsets = [0, 4, 0, 0], sizes = [2, 4, 8, 8], strides = [1, 1, 1, 1]} : vector<2x8x8x8xf32> to vector<2x4x8x8xf32>
    %248 = vector.broadcast %6 : f32 to vector<2x4x8x8xf32>
    %249 = arith.mulf %248, %247 : vector<2x4x8x8xf32>
    %250 = arith.subf %246, %249 : vector<2x4x8x8xf32>
    %251 = vector.shape_cast %250 : vector<2x4x8x8xf32> to vector<8x8x8xf32>
    %252 = arith.truncf %251 : vector<8x8x8xf32> to vector<8x8x8xbf16>
    %cst_54 = arith.constant dense<0.000000e+00> : vector<8x8x32xf32>
    %253 = tpu.matmul %252, %233, %cst_54 {dimension_numbers = #tpu.dot_dimension_numbers<[2], [1], [1], [2], [0, 0, 0, 1, 1, 2], [0], [0]>} : vector<8x8x8xbf16>, vector<8x8x32xbf16>, vector<8x8x32xf32> -> vector<8x8x32xf32>
    %254 = arith.mulf %253, %253 : vector<8x8x32xf32>
    %cst_55 = arith.constant dense<0.000000e+00> : vector<8x8xf32>
    %255 = vector.multi_reduction <add>, %254, %cst_55 [2] : vector<8x8x32xf32> to vector<8x8xf32>
    %256 = vector.shape_cast %255 : vector<8x8xf32> to vector<8x8x1xf32>
    %cst_56 = arith.constant 3.200000e+01 : f32
    %257 = vector.broadcast %cst_56 : f32 to vector<8x8x1xf32>
    %258 = arith.divf %256, %257 : vector<8x8x1xf32>
    %cst_57 = arith.constant 9.99999974E-6 : f32
    %259 = vector.broadcast %cst_57 : f32 to vector<8x8x1xf32>
    %260 = arith.addf %258, %259 : vector<8x8x1xf32>
    %261 = math.rsqrt %260 : vector<8x8x1xf32>
    %262 = vector.broadcast %261 : vector<8x8x1xf32> to vector<8x8x32xf32>
    %263 = arith.mulf %253, %262 : vector<8x8x32xf32>
    %c0_58 = arith.constant 0 : index
    %c0_59 = arith.constant 0 : index
    %c0_60 = arith.constant 0 : index
    %264 = vector.load %arg10[%c0_58, %c0_59, %c0_60] : memref<1x1x32xf32, #tpu.memory_space<vmem>>, vector<1x1x32xf32>
    %265 = vector.shape_cast %264 : vector<1x1x32xf32> to vector<1x32xf32>
    %266 = vector.shape_cast %265 : vector<1x32xf32> to vector<1x1x32xf32>
    %267 = vector.broadcast %266 : vector<1x1x32xf32> to vector<8x8x32xf32>
    %268 = arith.mulf %263, %267 : vector<8x8x32xf32>
    %269 = vector.shape_cast %268 : vector<8x8x32xf32> to vector<2x4x8x32xf32>
    %270 = vector.extract_strided_slice %269 {offsets = [0, 0, 0, 0], sizes = [2, 1, 8, 32], strides = [1, 1, 1, 1]} : vector<2x4x8x32xf32> to vector<2x1x8x32xf32>
    %271 = vector.shape_cast %270 : vector<2x1x8x32xf32> to vector<2x8x32xf32>
    %272 = vector.extract_strided_slice %269 {offsets = [0, 1, 0, 0], sizes = [2, 1, 8, 32], strides = [1, 1, 1, 1]} : vector<2x4x8x32xf32> to vector<2x1x8x32xf32>
    %273 = vector.shape_cast %272 : vector<2x1x8x32xf32> to vector<2x8x32xf32>
    %274 = vector.extract_strided_slice %269 {offsets = [0, 2, 0, 0], sizes = [2, 1, 8, 32], strides = [1, 1, 1, 1]} : vector<2x4x8x32xf32> to vector<2x1x8x32xf32>
    %275 = vector.shape_cast %274 : vector<2x1x8x32xf32> to vector<2x8x32xf32>
    %276 = vector.extract_strided_slice %269 {offsets = [0, 3, 0, 0], sizes = [2, 1, 8, 32], strides = [1, 1, 1, 1]} : vector<2x4x8x32xf32> to vector<2x1x8x32xf32>
    %277 = vector.shape_cast %276 : vector<2x1x8x32xf32> to vector<2x8x32xf32>
    %278 = tpu.concatenate %271, %273, %275, %277 in 2 : vector<2x8x32xf32>, vector<2x8x32xf32>, vector<2x8x32xf32>, vector<2x8x32xf32> -> vector<2x8x128xf32>
    %279 = vector.shape_cast %278 : vector<2x8x128xf32> to vector<16x128xf32>
    %280 = arith.truncf %279 : vector<16x128xf32> to vector<16x128xbf16>
    %c0_61 = arith.constant 0 : index
    %c0_62 = arith.constant 0 : index
    %c0_63 = arith.constant 0 : index
    %281 = vector.load %arg9[%c0_61, %c0_62, %c0_63] : memref<1x128x128xbf16, #tpu.memory_space<vmem>>, vector<1x128x128xbf16>
    %282 = vector.shape_cast %281 : vector<1x128x128xbf16> to vector<128x128xbf16>
    %cst_64 = arith.constant dense<0.000000e+00> : vector<16x128xf32>
    %283 = tpu.matmul %280, %282, %cst_64 {dimension_numbers = #tpu.dot_dimension_numbers<[1], [0], [0], [1], [0, 0, 1, 1], [], []>} : vector<16x128xbf16>, vector<128x128xbf16>, vector<16x128xf32> -> vector<16x128xf32>
    %284 = arith.addf %148, %283 : vector<16x128xf32>
    %c0_65 = arith.constant 0 : index
    %c4 = arith.constant 4 : index
    %c0_66 = arith.constant 0 : index
    %285 = vector.load %arg4[%c0_65, %c4, %c0_66] : memref<1x6x128xf32, #tpu.memory_space<vmem>>, vector<1x1x128xf32>
    %286 = vector.shape_cast %285 : vector<1x1x128xf32> to vector<1x128xf32>
    %c0_67 = arith.constant 0 : index
    %c5 = arith.constant 5 : index
    %c0_68 = arith.constant 0 : index
    %287 = vector.load %arg4[%c0_67, %c5, %c0_68] : memref<1x6x128xf32, #tpu.memory_space<vmem>>, vector<1x1x128xf32>
    %288 = vector.shape_cast %287 : vector<1x1x128xf32> to vector<1x128xf32>
    %cst_69 = arith.constant dense<0.000000e+00> : vector<16xf32>
    %289 = vector.multi_reduction <add>, %284, %cst_69 [1] : vector<16x128xf32> to vector<16xf32>
    %290 = vector.shape_cast %289 : vector<16xf32> to vector<16x1xf32>
    %cst_70 = arith.constant 1.280000e+02 : f32
    %291 = vector.broadcast %cst_70 : f32 to vector<16x1xf32>
    %292 = arith.divf %290, %291 : vector<16x1xf32>
    %293 = vector.broadcast %292 : vector<16x1xf32> to vector<16x128xf32>
    %294 = arith.subf %284, %293 : vector<16x128xf32>
    %295 = arith.mulf %294, %294 : vector<16x128xf32>
    %cst_71 = arith.constant dense<0.000000e+00> : vector<16xf32>
    %296 = vector.multi_reduction <add>, %295, %cst_71 [1] : vector<16x128xf32> to vector<16xf32>
    %297 = vector.shape_cast %296 : vector<16xf32> to vector<16x1xf32>
    %cst_72 = arith.constant 1.280000e+02 : f32
    %298 = vector.broadcast %cst_72 : f32 to vector<16x1xf32>
    %299 = arith.divf %297, %298 : vector<16x1xf32>
    %300 = vector.broadcast %292 : vector<16x1xf32> to vector<16x128xf32>
    %301 = arith.subf %284, %300 : vector<16x128xf32>
    %cst_73 = arith.constant 9.99999974E-6 : f32
    %302 = vector.broadcast %cst_73 : f32 to vector<16x1xf32>
    %303 = arith.addf %299, %302 : vector<16x1xf32>
    %304 = math.rsqrt %303 : vector<16x1xf32>
    %305 = vector.broadcast %304 : vector<16x1xf32> to vector<16x128xf32>
    %306 = arith.mulf %301, %305 : vector<16x128xf32>
    %307 = vector.broadcast %286 : vector<1x128xf32> to vector<16x128xf32>
    %308 = arith.mulf %306, %307 : vector<16x128xf32>
    %309 = vector.broadcast %288 : vector<1x128xf32> to vector<16x128xf32>
    %310 = arith.addf %308, %309 : vector<16x128xf32>
    %311 = arith.truncf %310 : vector<16x128xf32> to vector<16x128xbf16>
    %c0_74 = arith.constant 0 : index
    %c0_75 = arith.constant 0 : index
    %c0_76 = arith.constant 0 : index
    %312 = vector.load %arg11[%c0_74, %c0_75, %c0_76] : memref<1x128x512xbf16, #tpu.memory_space<vmem>>, vector<1x128x512xbf16>
    %313 = vector.shape_cast %312 : vector<1x128x512xbf16> to vector<128x512xbf16>
    %cst_77 = arith.constant dense<0.000000e+00> : vector<16x512xf32>
    %314 = tpu.matmul %311, %313, %cst_77 {dimension_numbers = #tpu.dot_dimension_numbers<[1], [0], [0], [1], [0, 0, 1, 1], [], []>} : vector<16x128xbf16>, vector<128x512xbf16>, vector<16x512xf32> -> vector<16x512xf32>
    %c0_78 = arith.constant 0 : index
    %c0_79 = arith.constant 0 : index
    %c0_80 = arith.constant 0 : index
    %315 = vector.load %arg12[%c0_78, %c0_79, %c0_80] : memref<1x1x512xf32, #tpu.memory_space<vmem>>, vector<1x1x512xf32>
    %316 = vector.shape_cast %315 : vector<1x1x512xf32> to vector<1x512xf32>
    %317 = vector.broadcast %316 : vector<1x512xf32> to vector<16x512xf32>
    %318 = arith.addf %314, %317 : vector<16x512xf32>
    %cst_81 = arith.constant 5.000000e-01 : f32
    %319 = vector.broadcast %cst_81 : f32 to vector<16x512xf32>
    %320 = arith.mulf %319, %318 : vector<16x512xf32>
    %cst_82 = arith.constant 0.707106769 : f32
    %321 = vector.broadcast %cst_82 : f32 to vector<16x512xf32>
    %322 = arith.mulf %318, %321 : vector<16x512xf32>
    %323 = math.erf %322 : vector<16x512xf32>
    %cst_83 = arith.constant 1.000000e+00 : f32
    %324 = vector.broadcast %cst_83 : f32 to vector<16x512xf32>
    %325 = arith.addf %324, %323 : vector<16x512xf32>
    %326 = arith.mulf %320, %325 : vector<16x512xf32>
    %327 = arith.truncf %326 : vector<16x512xf32> to vector<16x512xbf16>
    %c0_84 = arith.constant 0 : index
    %c0_85 = arith.constant 0 : index
    %c0_86 = arith.constant 0 : index
    %328 = vector.load %arg13[%c0_84, %c0_85, %c0_86] : memref<1x512x128xbf16, #tpu.memory_space<vmem>>, vector<1x512x128xbf16>
    %329 = vector.shape_cast %328 : vector<1x512x128xbf16> to vector<512x128xbf16>
    %cst_87 = arith.constant dense<0.000000e+00> : vector<16x128xf32>
    %330 = tpu.matmul %327, %329, %cst_87 {dimension_numbers = #tpu.dot_dimension_numbers<[1], [0], [0], [1], [0, 0, 1, 1], [], []>} : vector<16x512xbf16>, vector<512x128xbf16>, vector<16x128xf32> -> vector<16x128xf32>
    %c0_88 = arith.constant 0 : index
    %c0_89 = arith.constant 0 : index
    %c0_90 = arith.constant 0 : index
    %331 = vector.load %arg14[%c0_88, %c0_89, %c0_90] : memref<1x1x128xf32, #tpu.memory_space<vmem>>, vector<1x1x128xf32>
    %332 = vector.shape_cast %331 : vector<1x1x128xf32> to vector<1x128xf32>
    %333 = vector.broadcast %332 : vector<1x128xf32> to vector<16x128xf32>
    %334 = arith.addf %330, %333 : vector<16x128xf32>
    %335 = arith.addf %284, %334 : vector<16x128xf32>
    %336 = vector.shape_cast %335 : vector<16x128xf32> to vector<2x8x128xf32>
    %c0_91 = arith.constant 0 : index
    %c0_92 = arith.constant 0 : index
    %c0_93 = arith.constant 0 : index
    %337 = vector.load %arg15[%c0_91, %c0_92, %c0_93] : memref<2x8x128xf32, #tpu.memory_space<vmem>>, vector<2x8x128xf32>
    tpu.vector_store %arg15[%c0_91, %c0_92, %c0_93], %336 {strides = array<i32>} : memref<2x8x128xf32, #tpu.memory_space<vmem>>, vector<2x8x128xf32>,
    return
  }
  func.func @transform_0(%arg0: i32) -> (i32, i32) {
    %c0_i32 = arith.constant 0 : i32
    %c0_i32_0 = arith.constant 0 : i32
    %c0_i32_1 = arith.constant 0 : i32
    return %c0_i32, %c0_i32_0 : i32, i32
  }
  func.func @transform_1(%arg0: i32) -> (i32, i32, i32) {
    %c0_i32 = arith.constant 0 : i32
    %c0_i32_0 = arith.constant 0 : i32
    %c0_i32_1 = arith.constant 0 : i32
    %c0_i32_2 = arith.constant 0 : i32
    return %c0_i32, %c0_i32_0, %c0_i32_1 : i32, i32, i32
  }
  func.func @transform_2(%arg0: i32) -> (i32, i32, i32) {
    %c0_i32 = arith.constant 0 : i32
    %c0_i32_0 = arith.constant 0 : i32
    %c0_i32_1 = arith.constant 0 : i32
    %c0_i32_2 = arith.constant 0 : i32
    return %c0_i32, %c0_i32_0, %c0_i32_1 : i32, i32, i32
  }
  func.func @transform_3(%arg0: i32) -> (i32, i32, i32) {
    %c0_i32 = arith.constant 0 : i32
    %c0_i32_0 = arith.constant 0 : i32
    %c0_i32_1 = arith.constant 0 : i32
    return %arg0, %c0_i32, %c0_i32_0 : i32, i32, i32
  }
  func.func @transform_4(%arg0: i32) -> (i32, i32, i32) {
    %c0_i32 = arith.constant 0 : i32
    %c0_i32_0 = arith.constant 0 : i32
    %c0_i32_1 = arith.constant 0 : i32
    return %arg0, %c0_i32, %c0_i32_0 : i32, i32, i32
  }
  func.func @transform_5(%arg0: i32) -> (i32, i32, i32) {
    %c0_i32 = arith.constant 0 : i32
    %c0_i32_0 = arith.constant 0 : i32
    %c0_i32_1 = arith.constant 0 : i32
    return %arg0, %c0_i32, %c0_i32_0 : i32, i32, i32
  }
  func.func @transform_6(%arg0: i32) -> (i32, i32, i32) {
    %c0_i32 = arith.constant 0 : i32
    %c0_i32_0 = arith.constant 0 : i32
    %c0_i32_1 = arith.constant 0 : i32
    return %arg0, %c0_i32, %c0_i32_0 : i32, i32, i32
  }
  func.func @transform_7(%arg0: i32) -> (i32, i32, i32) {
    %c0_i32 = arith.constant 0 : i32
    %c0_i32_0 = arith.constant 0 : i32
    %c0_i32_1 = arith.constant 0 : i32
    return %arg0, %c0_i32, %c0_i32_0 : i32, i32, i32
  }
  func.func @transform_8(%arg0: i32) -> (i32, i32, i32) {
    %c0_i32 = arith.constant 0 : i32
    %c0_i32_0 = arith.constant 0 : i32
    %c0_i32_1 = arith.constant 0 : i32
    return %arg0, %c0_i32, %c0_i32_0 : i32, i32, i32
  }
  func.func @transform_9(%arg0: i32) -> (i32, i32, i32) {
    %c0_i32 = arith.constant 0 : i32
    %c0_i32_0 = arith.constant 0 : i32
    %c0_i32_1 = arith.constant 0 : i32
    return %arg0, %c0_i32, %c0_i32_0 : i32, i32, i32
  }
  func.func @transform_10(%arg0: i32) -> (i32, i32, i32) {
    %c0_i32 = arith.constant 0 : i32
    %c0_i32_0 = arith.constant 0 : i32
    %c0_i32_1 = arith.constant 0 : i32
    return %arg0, %c0_i32, %c0_i32_0 : i32, i32, i32
  }
  func.func @transform_11(%arg0: i32) -> (i32, i32, i32) {
    %c0_i32 = arith.constant 0 : i32
    %c0_i32_0 = arith.constant 0 : i32
    %c0_i32_1 = arith.constant 0 : i32
    return %arg0, %c0_i32, %c0_i32_0 : i32, i32, i32
  }
  func.func @transform_12(%arg0: i32) -> (i32, i32, i32) {
    %c0_i32 = arith.constant 0 : i32
    %c0_i32_0 = arith.constant 0 : i32
    %c0_i32_1 = arith.constant 0 : i32
    return %arg0, %c0_i32, %c0_i32_0 : i32, i32, i32
  }
  func.func @transform_13(%arg0: i32) -> (i32, i32, i32) {
    %c0_i32 = arith.constant 0 : i32
    %c0_i32_0 = arith.constant 0 : i32
    %c0_i32_1 = arith.constant 0 : i32
    return %arg0, %c0_i32, %c0_i32_0 : i32, i32, i32
  }
  func.func @transform_14(%arg0: i32) -> (i32, i32, i32) {
    %c0_i32 = arith.constant 0 : i32
    %c0_i32_0 = arith.constant 0 : i32
    %c0_i32_1 = arith.constant 0 : i32
    %c0_i32_2 = arith.constant 0 : i32
    return %c0_i32, %c0_i32_0, %c0_i32_1 : i32, i32, i32
  }
}

</mosaic_0001>

<llo_original>
// kernel: stock_decoder.1
$region0: #{stock_decoder.1}
  #allocation0 [shape = 'u32[]', space=smem, size = 0x4, offset = 0x4, fixed_abs, tag = 'smem constant byte address 0x4 - core index']
  #allocation1 [shape = 'u32[144,128]{1,0:T(1,128)}', space=vmem, size = 0x12000, scoped, tag = 'internal scratch']
  %s0 = inlined_call_operand.vmem [shape: f32[2,2], index: 0, kind: input, shape index: {}]
  %s1 = inlined_call_operand.vmem [shape: f32[2,8,128], index: 1, kind: input, shape index: {}]
  %s2 = inlined_call_operand.vmem [shape: bf16[2,16,128], index: 2, kind: input, shape index: {}]
  %s3 = inlined_call_operand.vmem [shape: f32[2,6,128], index: 3, kind: input, shape index: {}]
  %s4 = inlined_call_operand.hbm [shape: bf16[2,128,384], index: 4, kind: input, shape index: {}]
  %s5 = inlined_call_operand.hbm [shape: bf16[2,128,128], index: 5, kind: input, shape index: {}]
  %s6 = inlined_call_operand.vmem [shape: f32[2,1,32], index: 6, kind: input, shape index: {}]
  %s7 = inlined_call_operand.hbm [shape: bf16[2,128,384], index: 7, kind: input, shape index: {}]
  %s8 = inlined_call_operand.hbm [shape: bf16[2,128,128], index: 8, kind: input, shape index: {}]
  %s9 = inlined_call_operand.vmem [shape: f32[2,1,32], index: 9, kind: input, shape index: {}]
  %s10 = inlined_call_operand.hbm [shape: bf16[2,128,512], index: 10, kind: input, shape index: {}]
  %s11 = inlined_call_operand.vmem [shape: f32[2,1,512], index: 11, kind: input, shape index: {}]
  %s12 = inlined_call_operand.hbm [shape: bf16[2,512,128], index: 12, kind: input, shape index: {}]
  %s13 = inlined_call_operand.vmem [shape: f32[2,1,128], index: 13, kind: input, shape index: {}]
  %s14 = inlined_call_operand.hbm [shape: f32[2,8,128], index: 14, kind: output, shape index: {}]
  %s15 = sld [smem:[#allocation0]]
  $region121: #{stock_decoder.1} parent=0
    _
  %s17 = ssub.s32 1, %s15
  %s18 = scalar_select 0, %s17, %s15
  $region1: #{stock_decoder.1} parent=0
    #allocation2 [shape = 'u8[1024]{0}', space=smem, size = 0x400, scoped, tag = 'input window, operand 0, single buffered']
    #allocation3 [shape = 's32[2]{0}', space=sflag, size = 0x8, scoped, tag = 'scoped memory for stock_decoder.1']
    #allocation4 [shape = 's32[2]{0}', space=sflag, size = 0x8, scoped, tag = 'scoped memory for stock_decoder.1']
    #allocation5 [shape = 's32[2]{0}', space=sflag, size = 0x8, scoped, tag = 'scoped memory for stock_decoder.1']
    #allocation6 [shape = 'u8[196608]{0}', space=vmem, size = 0x30000, scoped, tag = 'input window, operand 4']
    #allocation7 [shape = 'u8[65536]{0}', space=vmem, size = 0x10000, scoped, tag = 'input window, operand 5']
    #allocation8 [shape = 's32[2]{0}', space=sflag, size = 0x8, scoped, tag = 'scoped memory for stock_decoder.1']
    #allocation9 [shape = 'u8[196608]{0}', space=vmem, size = 0x30000, scoped, tag = 'input window, operand 7']
    #allocation10 [shape = 'u8[65536]{0}', space=vmem, size = 0x10000, scoped, tag = 'input window, operand 8']
    #allocation11 [shape = 's32[2]{0}', space=sflag, size = 0x8, scoped, tag = 'scoped memory for stock_decoder.1']
    #allocation12 [shape = 'u8[262144]{0}', space=vmem, size = 0x40000, scoped, tag = 'input window, operand 10']
    #allocation13 [shape = 'u8[262144]{0}', space=vmem, size = 0x40000, scoped, tag = 'input window, operand 12']
    #allocation14 [shape = 's32[2]{0}', space=sflag, size = 0x8, scoped, tag = 'scoped memory for stock_decoder.1']
    #allocation15 [shape = 'u8[8192]{0}', space=vmem, size = 0x2000, scoped, tag = 'output window, operand 0, single buffered']
    %19 = vsyncpa [#allocation5], 0
    %20 = vsyncpa [#allocation3], 0
    %s21 = scalar_lea.sflag [#allocation3], 1
    %22 = vsyncpa %s21, 0
    %23 = vsyncpa [#allocation8], 0
    %s24 = scalar_lea.sflag [#allocation8], 1
    %25 = vsyncpa %s24, 0
    %26 = vsyncpa [#allocation11], 0
    %s27 = scalar_lea.sflag [#allocation11], 1
    %28 = vsyncpa %s27, 0
    %29 = vsyncpa [#allocation14], 0
    %s30 = scalar_lea.sflag [#allocation14], 1
    %31 = vsyncpa %s30, 0
    %32 = vsyncpa [#allocation4], 0
    loop: start=0, step=1, limit=4
    $region2: #{stock_decoder.1} parent=1 // loop_pre_header
      _
    $region3: #{stock_decoder.1} parent=1 // loop_header
      %s34 = sphi 0, %s38
      %p35 = scmp.ge.s32.totalorder %s34, 4
      %s42 = sphi 0, %s42
      %s44 = sphi 0, %s42
      %s45 = sphi 0, %s44
      %s59 = sphi 0, %s45
      %s63 = sphi 0, %s63
      %s65 = sphi 0, %s63
      %s66 = sphi 0, %s65
      %s80 = sphi 0, %s66
      %s84 = sphi 0, %s84
      %s86 = sphi 0, %s84
      %s87 = sphi 0, %s86
      %s101 = sphi 0, %s87
      %s107 = sphi 0, %s109
      %s110 = sphi 0, %s107
      %s111 = sphi 0, %s110
      %s127 = sphi 0, %s111
      %s133 = sphi 0, %s135
      %s136 = sphi 0, %s133
      %s137 = sphi 0, %s136
      %s153 = sphi 0, %s137
      %s159 = sphi 0, %s161
      %s162 = sphi 0, %s159
      %s163 = sphi 0, %s162
      %s179 = sphi 0, %s163
      %s185 = sphi 0, %s187
      %s188 = sphi 0, %s185
      %s189 = sphi 0, %s188
      %s205 = sphi 0, %s189
      %s211 = sphi 0, %s213
      %s214 = sphi 0, %s211
      %s215 = sphi 0, %s214
      %s231 = sphi 0, %s215
      %s237 = sphi 0, %s239
      %s240 = sphi 0, %s237
      %s241 = sphi 0, %s240
      %s257 = sphi 0, %s241
      %s263 = sphi 0, %s265
      %s266 = sphi 0, %s263
      %s267 = sphi 0, %s266
      %s283 = sphi 0, %s267
      %s289 = sphi 0, %s291
      %s292 = sphi 0, %s289
      %s293 = sphi 0, %s292
      %s309 = sphi 0, %s293
      %s315 = sphi 0, %s317
      %s318 = sphi 0, %s315
      %s319 = sphi 0, %s318
      %s335 = sphi 0, %s319
      %s341 = sphi 0, %s343
      %s344 = sphi 0, %s341
      %s345 = sphi 0, %s344
      %s361 = sphi 0, %s345
      %s367 = sphi 0, %s369
      %s370 = sphi 0, %s367
      %s371 = sphi 0, %s370
      %s387 = sphi 0, %s371
      %s391 = sphi 0, %s391
      %s393 = sphi 0, %s391
      %s394 = sphi 0, %s393
      %s408 = sphi 0, %s394
    $region4: #{stock_decoder.1} parent=1 // loop_header_branch
      %37 = sbr.rel (%p35) target = $region8
    $region5: #{stock_decoder.1} parent=1 // loop_body
      %s39 = ssub.s32 %s34, 1
      %s40 = ssub.s32 %s34, 2
      %s41 = sadd.s32 %s34, 1
      %s43 = sadd.s32 %s42, 1
      %p46 = scmp.eq.s32.totalorder %s34, 1
      %p47 = scmp.ne.s32.totalorder %s42, %s44
      %p48 = scmp.eq.s32.totalorder %s34, 0
      %p49 = por %p47, %p48
      %p50 = scmp.ne.s32.totalorder %s42, %s44
      %p51 = scmp.eq.s32.totalorder %s39, 1
      %p52 = por %p50, %p51
      %p53 = scmp.ne.s32.totalorder %s44, %s45
      %p54 = scmp.eq.s32.totalorder %s39, 0
      %p55 = por %p53, %p54
      %p56 = scmp.ne.s32.totalorder %s44, %s45
      %p57 = scmp.eq.s32.totalorder %s40, 1
      %p58 = por %p56, %p57
      %p60 = scmp.ne.s32.totalorder %s45, %s59
      %p61 = scmp.eq.s32.totalorder %s40, 0
      %p62 = por %p60, %p61
      %s64 = sadd.s32 %s63, 1
      %p67 = scmp.eq.s32.totalorder %s34, 1
      %p68 = scmp.ne.s32.totalorder %s63, %s65
      %p69 = scmp.eq.s32.totalorder %s34, 0
      %p70 = por %p68, %p69
      %p71 = scmp.ne.s32.totalorder %s63, %s65
      %p72 = scmp.eq.s32.totalorder %s39, 1
      %p73 = por %p71, %p72
      %p74 = scmp.ne.s32.totalorder %s65, %s66
      %p75 = scmp.eq.s32.totalorder %s39, 0
      %p76 = por %p74, %p75
      %p77 = scmp.ne.s32.totalorder %s65, %s66
      %p78 = scmp.eq.s32.totalorder %s40, 1
      %p79 = por %p77, %p78
      %p81 = scmp.ne.s32.totalorder %s66, %s80
      %p82 = scmp.eq.s32.totalorder %s40, 0
      %p83 = por %p81, %p82
      %s85 = sadd.s32 %s84, 1
      %p88 = scmp.eq.s32.totalorder %s34, 1
      %p89 = scmp.ne.s32.totalorder %s84, %s86
      %p90 = scmp.eq.s32.totalorder %s34, 0
      %p91 = por %p89, %p90
      %p92 = scmp.ne.s32.totalorder %s84, %s86
      %p93 = scmp.eq.s32.totalorder %s39, 1
      %p94 = por %p92, %p93
      %p95 = scmp.ne.s32.totalorder %s86, %s87
      %p96 = scmp.eq.s32.totalorder %s39, 0
      %p97 = por %p95, %p96
      %p98 = scmp.ne.s32.totalorder %s86, %s87
      %p99 = scmp.eq.s32.totalorder %s40, 1
      %p100 = por %p98, %p99
      %p102 = scmp.ne.s32.totalorder %s87, %s101
      %p103 = scmp.eq.s32.totalorder %s40, 0
      %p104 = por %p102, %p103
      %s105 = ssub.s32 %s34, %s41
      %p106 = scmp.eq.s32.totalorder %s105, 0
      %s108 = sadd.s32 %s107, 1
      %s109 = scalar_select %p106, %s107, %s108
      %p112 = pneg %p106
      %p113 = scmp.eq.s32.totalorder %s34, 1
      %p114 = por %p112, %p113
      %p115 = scmp.ne.s32.totalorder %s107, %s110
      %p116 = scmp.eq.s32.totalorder %s34, 0
      %p117 = por %p115, %p116
      %p118 = scmp.ne.s32.totalorder %s107, %s110
      %p119 = scmp.eq.s32.totalorder %s39, 1
      %p120 = por %p118, %p119
      %p121 = scmp.ne.s32.totalorder %s110, %s111
      %p122 = scmp.eq.s32.totalorder %s39, 0
      %p123 = por %p121, %p122
      %p124 = scmp.ne.s32.totalorder %s110, %s111
      %p125 = scmp.eq.s32.totalorder %s40, 1
      %p126 = por %p124, %p125
      %p128 = scmp.ne.s32.totalorder %s111, %s127
      %p129 = scmp.eq.s32.totalorder %s40, 0
      %p130 = por %p128, %p129
      %s131 = ssub.s32 %s34, %s41
      %p132 = scmp.eq.s32.totalorder %s131, 0
      %s134 = sadd.s32 %s133, 1
      %s135 = scalar_select %p132, %s133, %s134
      %p138 = pneg %p132
      %p139 = scmp.eq.s32.totalorder %s34, 1
      %p140 = por %p138, %p139
      %p141 = scmp.ne.s32.totalorder %s133, %s136
      %p142 = scmp.eq.s32.totalorder %s34, 0
      %p143 = por %p141, %p142
      %p144 = scmp.ne.s32.totalorder %s133, %s136
      %p145 = scmp.eq.s32.totalorder %s39, 1
      %p146 = por %p144, %p145
      %p147 = scmp.ne.s32.totalorder %s136, %s137
      %p148 = scmp.eq.s32.totalorder %s39, 0
      %p149 = por %p147, %p148
      %p150 = scmp.ne.s32.totalorder %s136, %s137
      %p151 = scmp.eq.s32.totalorder %s40, 1
      %p152 = por %p150, %p151
      %p154 = scmp.ne.s32.totalorder %s137, %s153
      %p155 = scmp.eq.s32.totalorder %s40, 0
      %p156 = por %p154, %p155
      %s157 = ssub.s32 %s34, %s41
      %p158 = scmp.eq.s32.totalorder %s157, 0
      %s160 = sadd.s32 %s159, 1
      %s161 = scalar_select %p158, %s159, %s160
      %p164 = pneg %p158
      %p165 = scmp.eq.s32.totalorder %s34, 1
      %p166 = por %p164, %p165
      %p167 = scmp.ne.s32.totalorder %s159, %s162
      %p168 = scmp.eq.s32.totalorder %s34, 0
      %p169 = por %p167, %p168
      %p170 = scmp.ne.s32.totalorder %s159, %s162
      %p171 = scmp.eq.s32.totalorder %s39, 1
      %p172 = por %p170, %p171
      %p173 = scmp.ne.s32.totalorder %s162, %s163
      %p174 = scmp.eq.s32.totalorder %s39, 0
      %p175 = por %p173, %p174
      %p176 = scmp.ne.s32.totalorder %s162, %s163
      %p177 = scmp.eq.s32.totalorder %s40, 1
      %p178 = por %p176, %p177
      %p180 = scmp.ne.s32.totalorder %s163, %s179
      %p181 = scmp.eq.s32.totalorder %s40, 0
      %p182 = por %p180, %p181
      %s183 = ssub.s32 %s34, %s41
      %p184 = scmp.eq.s32.totalorder %s183, 0
      %s186 = sadd.s32 %s185, 1
      %s187 = scalar_select %p184, %s185, %s186
      %p190 = pneg %p184
      %p191 = scmp.eq.s32.totalorder %s34, 1
      %p192 = por %p190, %p191
      %p193 = scmp.ne.s32.totalorder %s185, %s188
      %p194 = scmp.eq.s32.totalorder %s34, 0
      %p195 = por %p193, %p194
      %p196 = scmp.ne.s32.totalorder %s185, %s188
      %p197 = scmp.eq.s32.totalorder %s39, 1
      %p198 = por %p196, %p197
      %p199 = scmp.ne.s32.totalorder %s188, %s189
      %p200 = scmp.eq.s32.totalorder %s39, 0
      %p201 = por %p199, %p200
      %p202 = scmp.ne.s32.totalorder %s188, %s189
      %p203 = scmp.eq.s32.totalorder %s40, 1
      %p204 = por %p202, %p203
      %p206 = scmp.ne.s32.totalorder %s189, %s205
      %p207 = scmp.eq.s32.totalorder %s40, 0
      %p208 = por %p206, %p207
      %s209 = ssub.s32 %s34, %s41
      %p210 = scmp.eq.s32.totalorder %s209, 0
      %s212 = sadd.s32 %s211, 1
      %s213 = scalar_select %p210, %s211, %s212
      %p216 = pneg %p210
      %p217 = scmp.eq.s32.totalorder %s34, 1
      %p218 = por %p216, %p217
      %p219 = scmp.ne.s32.totalorder %s211, %s214
      %p220 = scmp.eq.s32.totalorder %s34, 0
      %p221 = por %p219, %p220
      %p222 = scmp.ne.s32.totalorder %s211, %s214
      %p223 = scmp.eq.s32.totalorder %s39, 1
      %p224 = por %p222, %p223
      %p225 = scmp.ne.s32.totalorder %s214, %s215
      %p226 = scmp.eq.s32.totalorder %s39, 0
      %p227 = por %p225, %p226
      %p228 = scmp.ne.s32.totalorder %s214, %s215
      %p229 = scmp.eq.s32.totalorder %s40, 1
      %p230 = por %p228, %p229
      %p232 = scmp.ne.s32.totalorder %s215, %s231
      %p233 = scmp.eq.s32.totalorder %s40, 0
      %p234 = por %p232, %p233
      %s235 = ssub.s32 %s34, %s41
      %p236 = scmp.eq.s32.totalorder %s235, 0
      %s238 = sadd.s32 %s237, 1
      %s239 = scalar_select %p236, %s237, %s238
      %p242 = pneg %p236
      %p243 = scmp.eq.s32.totalorder %s34, 1
      %p244 = por %p242, %p243
      %p245 = scmp.ne.s32.totalorder %s237, %s240
      %p246 = scmp.eq.s32.totalorder %s34, 0
      %p247 = por %p245, %p246
      %p248 = scmp.ne.s32.totalorder %s237, %s240
      %p249 = scmp.eq.s32.totalorder %s39, 1
      %p250 = por %p248, %p249
      %p251 = scmp.ne.s32.totalorder %s240, %s241
      %p252 = scmp.eq.s32.totalorder %s39, 0
      %p253 = por %p251, %p252
      %p254 = scmp.ne.s32.totalorder %s240, %s241
      %p255 = scmp.eq.s32.totalorder %s40, 1
      %p256 = por %p254, %p255
      %p258 = scmp.ne.s32.totalorder %s241, %s257
      %p259 = scmp.eq.s32.totalorder %s40, 0
      %p260 = por %p258, %p259
      %s261 = ssub.s32 %s34, %s41
      %p262 = scmp.eq.s32.totalorder %s261, 0
      %s264 = sadd.s32 %s263, 1
      %s265 = scalar_select %p262, %s263, %s264
      %p268 = pneg %p262
      %p269 = scmp.eq.s32.totalorder %s34, 1
      %p270 = por %p268, %p269
      %p271 = scmp.ne.s32.totalorder %s263, %s266
      %p272 = scmp.eq.s32.totalorder %s34, 0
      %p273 = por %p271, %p272
      %p274 = scmp.ne.s32.totalorder %s263, %s266
      %p275 = scmp.eq.s32.totalorder %s39, 1
      %p276 = por %p274, %p275
      %p277 = scmp.ne.s32.totalorder %s266, %s267
      %p278 = scmp.eq.s32.totalorder %s39, 0
      %p279 = por %p277, %p278
      %p280 = scmp.ne.s32.totalorder %s266, %s267
      %p281 = scmp.eq.s32.totalorder %s40, 1
      %p282 = por %p280, %p281
      %p284 = scmp.ne.s32.totalorder %s267, %s283
      %p285 = scmp.eq.s32.totalorder %s40, 0
      %p286 = por %p284, %p285
      %s287 = ssub.s32 %s34, %s41
      %p288 = scmp.eq.s32.totalorder %s287, 0
      %s290 = sadd.s32 %s289, 1
      %s291 = scalar_select %p288, %s289, %s290
      %p294 = pneg %p288
      %p295 = scmp.eq.s32.totalorder %s34, 1
      %p296 = por %p294, %p295
      %p297 = scmp.ne.s32.totalorder %s289, %s292
      %p298 = scmp.eq.s32.totalorder %s34, 0
      %p299 = por %p297, %p298
      %p300 = scmp.ne.s32.totalorder %s289, %s292
      %p301 = scmp.eq.s32.totalorder %s39, 1
      %p302 = por %p300, %p301
      %p303 = scmp.ne.s32.totalorder %s292, %s293
      %p304 = scmp.eq.s32.totalorder %s39, 0
      %p305 = por %p303, %p304
      %p306 = scmp.ne.s32.totalorder %s292, %s293
      %p307 = scmp.eq.s32.totalorder %s40, 1
      %p308 = por %p306, %p307
      %p310 = scmp.ne.s32.totalorder %s293, %s309
      %p311 = scmp.eq.s32.totalorder %s40, 0
      %p312 = por %p310, %p311
      %s313 = ssub.s32 %s34, %s41
      %p314 = scmp.eq.s32.totalorder %s313, 0
      %s316 = sadd.s32 %s315, 1
      %s317 = scalar_select %p314, %s315, %s316
      %p320 = pneg %p314
      %p321 = scmp.eq.s32.totalorder %s34, 1
      %p322 = por %p320, %p321
      %p323 = scmp.ne.s32.totalorder %s315, %s318
      %p324 = scmp.eq.s32.totalorder %s34, 0
      %p325 = por %p323, %p324
      %p326 = scmp.ne.s32.totalorder %s315, %s318
      %p327 = scmp.eq.s32.totalorder %s39, 1
      %p328 = por %p326, %p327
      %p329 = scmp.ne.s32.totalorder %s318, %s319
      %p330 = scmp.eq.s32.totalorder %s39, 0
      %p331 = por %p329, %p330
      %p332 = scmp.ne.s32.totalorder %s318, %s319
      %p333 = scmp.eq.s32.totalorder %s40, 1
      %p334 = por %p332, %p333
      %p336 = scmp.ne.s32.totalorder %s319, %s335
      %p337 = scmp.eq.s32.totalorder %s40, 0
      %p338 = por %p336, %p337
      %s339 = ssub.s32 %s34, %s41
      %p340 = scmp.eq.s32.totalorder %s339, 0
      %s342 = sadd.s32 %s341, 1
      %s343 = scalar_select %p340, %s341, %s342
      %p346 = pneg %p340
      %p347 = scmp.eq.s32.totalorder %s34, 1
      %p348 = por %p346, %p347
      %p349 = scmp.ne.s32.totalorder %s341, %s344
      %p350 = scmp.eq.s32.totalorder %s34, 0
      %p351 = por %p349, %p350
      %p352 = scmp.ne.s32.totalorder %s341, %s344
      %p353 = scmp.eq.s32.totalorder %s39, 1
      %p354 = por %p352, %p353
      %p355 = scmp.ne.s32.totalorder %s344, %s345
      %p356 = scmp.eq.s32.totalorder %s39, 0
      %p357 = por %p355, %p356
      %p358 = scmp.ne.s32.totalorder %s344, %s345
      %p359 = scmp.eq.s32.totalorder %s40, 1
      %p360 = por %p358, %p359
      %p362 = scmp.ne.s32.totalorder %s345, %s361
      %p363 = scmp.eq.s32.totalorder %s40, 0
      %p364 = por %p362, %p363
      %s365 = ssub.s32 %s34, %s41
      %p366 = scmp.eq.s32.totalorder %s365, 0
      %s368 = sadd.s32 %s367, 1
      %s369 = scalar_select %p366, %s367, %s368
      %p372 = pneg %p366
      %p373 = scmp.eq.s32.totalorder %s34, 1
      %p374 = por %p372, %p373
      %p375 = scmp.ne.s32.totalorder %s367, %s370
      %p376 = scmp.eq.s32.totalorder %s34, 0
      %p377 = por %p375, %p376
      %p378 = scmp.ne.s32.totalorder %s367, %s370
      %p379 = scmp.eq.s32.totalorder %s39, 1
      %p380 = por %p378, %p379
      %p381 = scmp.ne.s32.totalorder %s370, %s371
      %p382 = scmp.eq.s32.totalorder %s39, 0
      %p383 = por %p381, %p382
      %p384 = scmp.ne.s32.totalorder %s370, %s371
      %p385 = scmp.eq.s32.totalorder %s40, 1
      %p386 = por %p384, %p385
      %p388 = scmp.ne.s32.totalorder %s371, %s387
      %p389 = scmp.eq.s32.totalorder %s40, 0
      %p390 = por %p388, %p389
      %s392 = sadd.s32 %s391, 1
      %p395 = scmp.eq.s32.totalorder %s34, 1
      %p396 = scmp.ne.s32.totalorder %s391, %s393
      %p397 = scmp.eq.s32.totalorder %s34, 0
      %p398 = por %p396, %p397
      %p399 = scmp.ne.s32.totalorder %s391, %s393
      %p400 = scmp.eq.s32.totalorder %s39, 1
      %p401 = por %p399, %p400
      %p402 = scmp.ne.s32.totalorder %s393, %s394
      %p403 = scmp.eq.s32.totalorder %s39, 0
      %p404 = por %p402, %p403
      %p405 = scmp.ne.s32.totalorder %s393, %s394
      %p406 = scmp.eq.s32.totalorder %s40, 1
      %p407 = por %p405, %p406
      %p409 = scmp.ne.s32.totalorder %s394, %s408
      %p410 = scmp.eq.s32.totalorder %s40, 0
      %p411 = por %p409, %p410
      %p412 = scmp.le.s32.totalorder 1, %s34
      %p413 = scmp.lt.s32.totalorder %s34, 3
      %p414 = pnand %p412, %p413
      %p415 = pneg %p414
      // Predicated region
      $region9: #{stock_decoder.1} parent=5 // pred_check
        _
      $region10: #{stock_decoder.1} parent=5 // pred_check_branch
        %417 = sbr.rel (%p414) target = $region12
      $region11: #{stock_decoder.1} parent=5 // pred_region
        %s418 = ssub.s32 %s34, 1
        // Predicated region
        $region13: #{stock_decoder.1} parent=11 // pred_check
          %p419 = pneg %p55
        $region14: #{stock_decoder.1} parent=11 // pred_check_branch
          %421 = sbr.rel (%p419) target = $region16
        $region15: #{stock_decoder.1} parent=11 // pred_region
          %s423 = ssub.s32 32, 32
          %424 = vsyncadd [#allocation5], %s423
          %s426 = sshll.u32 %s0, 4
          %s427 = int_to_ptr.vmem [resolvable:$true] %s426
          %429 = dma.vmem_to_smem %s427, 32, [#allocation2], [#allocation5]
        $region16: #{stock_decoder.1} parent=11 // pred_fallthru
          _
        // Predicated region
        $region17: #{stock_decoder.1} parent=11 // pred_check
          %p430 = pneg %p76
        $region18: #{stock_decoder.1} parent=11 // pred_check_branch
          %432 = sbr.rel (%p430) target = $region20
        $region19: #{stock_decoder.1} parent=11 // pred_region
          _
        $region20: #{stock_decoder.1} parent=11 // pred_fallthru
          _
        // Predicated region
        $region21: #{stock_decoder.1} parent=11 // pred_check
          %p433 = pneg %p97
        $region22: #{stock_decoder.1} parent=11 // pred_check_branch
          %435 = sbr.rel (%p433) target = $region24
        $region23: #{stock_decoder.1} parent=11 // pred_region
          _
        $region24: #{stock_decoder.1} parent=11 // pred_fallthru
          _
      $region12: #{stock_decoder.1} parent=5 // pred_fallthru
        _
      %p436 = scmp.lt.s32.totalorder %s34, 2
      // Predicated region
      $region25: #{stock_decoder.1} parent=5 // pred_check
        %p437 = pneg %p436
      $region26: #{stock_decoder.1} parent=5 // pred_check_branch
        %439 = sbr.rel (%p437) target = $region28
      $region27: #{stock_decoder.1} parent=5 // pred_region
        // Predicated region
        $region29: #{stock_decoder.1} parent=27 // pred_check
          %p440 = pneg %p117
        $region30: #{stock_decoder.1} parent=27 // pred_check_branch
          %442 = sbr.rel (%p440) target = $region32
        $region31: #{stock_decoder.1} parent=27 // pred_region
          %p443 = scmp.lt.s32.totalorder %s34, 1
          %s444 = scalar_select %p443, %s34, 1
          %s445 = smul.addr %s444, 8
          %s446 = scalar_lea.vmem %s3, %s445
        $region32: #{stock_decoder.1} parent=27 // pred_fallthru
          _
        // Predicated region
        $region33: #{stock_decoder.1} parent=27 // pred_check
          %p447 = pneg %p143
        $region34: #{stock_decoder.1} parent=27 // pred_check_branch
          %449 = sbr.rel (%p447) target = $region36
        $region35: #{stock_decoder.1} parent=27 // pred_region
          %s450 = sand.u32 %s133, 1
          %s451 = scalar_lea.sflag [#allocation3], %s450
          %s452 = sand.u32 %s133, 1
          %s453 = smul.addr %s452, 192
          %s454 = scalar_lea.vmem [#allocation6], %s453
          %s456 = ssub.s32 3072, 3072
          %457 = vsyncadd %s451, %s456
          %s458 = smul.addr %s34, 48
          %s459 = smul.addr %s458, 64
          %s460 = scalar_lea.hbm %s4, %s459
          %s461 = sshll.u32 %s454, 4
          %s462 = int_to_ptr.vmem [resolvable:$true] %s461
          %467 = dma.hbm_to_vmem [thread:$0]  %s460, 3072, %s462, %s451, 192, 192, 12
        $region36: #{stock_decoder.1} parent=27 // pred_fallthru
          _
        // Predicated region
        $region37: #{stock_decoder.1} parent=27 // pred_check
          %p468 = pneg %p169
        $region38: #{stock_decoder.1} parent=27 // pred_check_branch
          %470 = sbr.rel (%p468) target = $region40
        $region39: #{stock_decoder.1} parent=27 // pred_region
          %s471 = sand.u32 %s34, 1
          %s472 = scalar_lea.sflag [#allocation8], %s471
          %s473 = sand.u32 %s159, 1
          %s474 = smul.addr %s473, 64
          %s475 = scalar_lea.vmem [#allocation7], %s474
          %s477 = ssub.s32 1024, 1024
          %478 = vsyncadd %s472, %s477
          %s479 = smul.addr %s34, 16
          %s480 = smul.addr %s479, 64
          %s481 = scalar_lea.hbm %s5, %s480
          %s482 = sshll.u32 %s475, 4
          %s483 = int_to_ptr.vmem [resolvable:$true] %s482
          %488 = dma.hbm_to_vmem [thread:$0]  %s481, 1024, %s483, %s472, 64, 64, 4
        $region40: #{stock_decoder.1} parent=27 // pred_fallthru
          _
        // Predicated region
        $region41: #{stock_decoder.1} parent=27 // pred_check
          %p489 = pneg %p195
        $region42: #{stock_decoder.1} parent=27 // pred_check_branch
          %491 = sbr.rel (%p489) target = $region44
        $region43: #{stock_decoder.1} parent=27 // pred_region
          %p492 = scmp.lt.s32.totalorder %s34, 1
          %s493 = scalar_select %p492, %s34, 1
          %s494 = scalar_lea.vmem %s6, %s493
        $region44: #{stock_decoder.1} parent=27 // pred_fallthru
          _
        // Predicated region
        $region45: #{stock_decoder.1} parent=27 // pred_check
          %p495 = pneg %p221
        $region46: #{stock_decoder.1} parent=27 // pred_check_branch
          %497 = sbr.rel (%p495) target = $region48
        $region47: #{stock_decoder.1} parent=27 // pred_region
          %s498 = sand.u32 %s34, 1
          %s499 = scalar_lea.sflag [#allocation8], %s498
          %s500 = sand.u32 %s211, 1
          %s501 = smul.addr %s500, 192
          %s502 = scalar_lea.vmem [#allocation9], %s501
          %s504 = ssub.s32 3072, 3072
          %505 = vsyncadd %s499, %s504
          %s506 = smul.addr %s34, 48
          %s507 = smul.addr %s506, 64
          %s508 = scalar_lea.hbm %s7, %s507
          %s509 = sshll.u32 %s502, 4
          %s510 = int_to_ptr.vmem [resolvable:$true] %s509
          %515 = dma.hbm_to_vmem [thread:$0]  %s508, 3072, %s510, %s499, 192, 192, 12
        $region48: #{stock_decoder.1} parent=27 // pred_fallthru
          _
        // Predicated region
        $region49: #{stock_decoder.1} parent=27 // pred_check
          %p516 = pneg %p247
        $region50: #{stock_decoder.1} parent=27 // pred_check_branch
          %518 = sbr.rel (%p516) target = $region52
        $region51: #{stock_decoder.1} parent=27 // pred_region
          %s519 = sand.u32 %s34, 1
          %s520 = scalar_lea.sflag [#allocation11], %s519
          %s521 = sand.u32 %s237, 1
          %s522 = smul.addr %s521, 64
          %s523 = scalar_lea.vmem [#allocation10], %s522
          %s525 = ssub.s32 1024, 1024
          %526 = vsyncadd %s520, %s525
          %s527 = smul.addr %s34, 16
          %s528 = smul.addr %s527, 64
          %s529 = scalar_lea.hbm %s8, %s528
          %s530 = sshll.u32 %s523, 4
          %s531 = int_to_ptr.vmem [resolvable:$true] %s530
          %536 = dma.hbm_to_vmem [thread:$0]  %s529, 1024, %s531, %s520, 64, 64, 4
        $region52: #{stock_decoder.1} parent=27 // pred_fallthru
          _
        // Predicated region
        $region53: #{stock_decoder.1} parent=27 // pred_check
          %p537 = pneg %p273
        $region54: #{stock_decoder.1} parent=27 // pred_check_branch
          %539 = sbr.rel (%p537) target = $region56
        $region55: #{stock_decoder.1} parent=27 // pred_region
          %p540 = scmp.lt.s32.totalorder %s34, 1
          %s541 = scalar_select %p540, %s34, 1
          %s542 = scalar_lea.vmem %s9, %s541
        $region56: #{stock_decoder.1} parent=27 // pred_fallthru
          _
        // Predicated region
        $region57: #{stock_decoder.1} parent=27 // pred_check
          %p543 = pneg %p299
        $region58: #{stock_decoder.1} parent=27 // pred_check_branch
          %545 = sbr.rel (%p543) target = $region60
        $region59: #{stock_decoder.1} parent=27 // pred_region
          %s546 = sand.u32 %s34, 1
          %s547 = scalar_lea.sflag [#allocation11], %s546
          %s548 = sand.u32 %s289, 1
          %s549 = smul.addr %s548, 256
          %s550 = scalar_lea.vmem [#allocation12], %s549
          %s552 = ssub.s32 4096, 4096
          %553 = vsyncadd %s547, %s552
          %s554 = smul.addr %s34, 64
          %s555 = smul.addr %s554, 64
          %s556 = scalar_lea.hbm %s10, %s555
          %s557 = sshll.u32 %s550, 4
          %s558 = int_to_ptr.vmem [resolvable:$true] %s557
          %563 = dma.hbm_to_vmem [thread:$0]  %s556, 4096, %s558, %s547, 256, 256, 16
        $region60: #{stock_decoder.1} parent=27 // pred_fallthru
          _
        // Predicated region
        $region61: #{stock_decoder.1} parent=27 // pred_check
          %p564 = pneg %p325
        $region62: #{stock_decoder.1} parent=27 // pred_check_branch
          %566 = sbr.rel (%p564) target = $region64
        $region63: #{stock_decoder.1} parent=27 // pred_region
          %p567 = scmp.lt.s32.totalorder %s34, 1
          %s568 = scalar_select %p567, %s34, 1
          %s569 = smul.addr %s568, 4
          %s570 = scalar_lea.vmem %s11, %s569
        $region64: #{stock_decoder.1} parent=27 // pred_fallthru
          _
        // Predicated region
        $region65: #{stock_decoder.1} parent=27 // pred_check
          %p571 = pneg %p351
        $region66: #{stock_decoder.1} parent=27 // pred_check_branch
          %573 = sbr.rel (%p571) target = $region68
        $region67: #{stock_decoder.1} parent=27 // pred_region
          %s574 = sand.u32 %s341, 1
          %s575 = scalar_lea.sflag [#allocation14], %s574
          %s576 = sand.u32 %s341, 1
          %s577 = smul.addr %s576, 256
          %s578 = scalar_lea.vmem [#allocation13], %s577
          %s580 = ssub.s32 4096, 4096
          %581 = vsyncadd %s575, %s580
          %s582 = smul.addr %s34, 64
          %s583 = smul.addr %s582, 64
          %s584 = scalar_lea.hbm %s12, %s583
          %s585 = sshll.u32 %s578, 4
          %s586 = int_to_ptr.vmem [resolvable:$true] %s585
          %591 = dma.hbm_to_vmem [thread:$0]  %s584, 4096, %s586, %s575, 64, 64, 4
        $region68: #{stock_decoder.1} parent=27 // pred_fallthru
          _
        // Predicated region
        $region69: #{stock_decoder.1} parent=27 // pred_check
          %p592 = pneg %p377
        $region70: #{stock_decoder.1} parent=27 // pred_check_branch
          %594 = sbr.rel (%p592) target = $region72
        $region71: #{stock_decoder.1} parent=27 // pred_region
          %p595 = scmp.lt.s32.totalorder %s34, 1
          %s596 = scalar_select %p595, %s34, 1
          %s597 = scalar_lea.vmem %s13, %s596
        $region72: #{stock_decoder.1} parent=27 // pred_fallthru
          _
      $region28: #{stock_decoder.1} parent=5 // pred_fallthru
        _
      %p598 = scmp.le.s32.totalorder 1, %s34
      %p599 = scmp.lt.s32.totalorder %s34, 3
      %p600 = pnand %p598, %p599
      %p601 = pneg %p600
      // Predicated region
      $region73: #{stock_decoder.1} parent=5 // pred_check
        _
      $region74: #{stock_decoder.1} parent=5 // pred_check_branch
        %603 = sbr.rel (%p600) target = $region76
      $region75: #{stock_decoder.1} parent=5 // pred_region
        %s604 = ssub.s32 %s34, 1
        // Predicated region
        $region77: #{stock_decoder.1} parent=75 // pred_check
          %p605 = pneg %p55
        $region78: #{stock_decoder.1} parent=75 // pred_check_branch
          %607 = sbr.rel (%p605) target = $region80
        $region79: #{stock_decoder.1} parent=75 // pred_region
          %608 = dma.done [#allocation5], 32
        $region80: #{stock_decoder.1} parent=75 // pred_fallthru
          _
        %s609 = sand.u32 %s136, 1
        %s610 = scalar_lea.sflag [#allocation3], %s609
        %s611 = sand.u32 %s136, 1
        %s612 = smul.addr %s611, 192
        %s613 = scalar_lea.vmem [#allocation6], %s612
        // Predicated region
        $region81: #{stock_decoder.1} parent=75 // pred_check
          %p614 = pneg %p149
        $region82: #{stock_decoder.1} parent=75 // pred_check_branch
          %616 = sbr.rel (%p614) target = $region84
        $region83: #{stock_decoder.1} parent=75 // pred_region
          %617 = dma.done %s610, 3072
        $region84: #{stock_decoder.1} parent=75 // pred_fallthru
          _
        %s618 = sand.u32 %s39, 1
        %s619 = scalar_lea.sflag [#allocation8], %s618
        %s620 = sand.u32 %s162, 1
        %s621 = smul.addr %s620, 64
        %s622 = scalar_lea.vmem [#allocation7], %s621
        // Predicated region
        $region85: #{stock_decoder.1} parent=75 // pred_check
          %p623 = pneg %p175
        $region86: #{stock_decoder.1} parent=75 // pred_check_branch
          %625 = sbr.rel (%p623) target = $region88
        $region87: #{stock_decoder.1} parent=75 // pred_region
          %626 = dma.done %s619, 1024
        $region88: #{stock_decoder.1} parent=75 // pred_fallthru
          _
        %s627 = sand.u32 %s39, 1
        %s628 = scalar_lea.sflag [#allocation8], %s627
        %s629 = sand.u32 %s214, 1
        %s630 = smul.addr %s629, 192
        %s631 = scalar_lea.vmem [#allocation9], %s630
        // Predicated region
        $region89: #{stock_decoder.1} parent=75 // pred_check
          %p632 = pneg %p227
        $region90: #{stock_decoder.1} parent=75 // pred_check_branch
          %634 = sbr.rel (%p632) target = $region92
        $region91: #{stock_decoder.1} parent=75 // pred_region
          %635 = dma.done %s628, 3072
        $region92: #{stock_decoder.1} parent=75 // pred_fallthru
          _
        %s636 = sand.u32 %s39, 1
        %s637 = scalar_lea.sflag [#allocation11], %s636
        %s638 = sand.u32 %s240, 1
        %s639 = smul.addr %s638, 64
        %s640 = scalar_lea.vmem [#allocation10], %s639
        // Predicated region
        $region93: #{stock_decoder.1} parent=75 // pred_check
          %p641 = pneg %p253
        $region94: #{stock_decoder.1} parent=75 // pred_check_branch
          %643 = sbr.rel (%p641) target = $region96
        $region95: #{stock_decoder.1} parent=75 // pred_region
          %644 = dma.done %s637, 1024
        $region96: #{stock_decoder.1} parent=75 // pred_fallthru
          _
        %s645 = sand.u32 %s39, 1
        %s646 = scalar_lea.sflag [#allocation11], %s645
        %s647 = sand.u32 %s292, 1
        %s648 = smul.addr %s647, 256
        %s649 = scalar_lea.vmem [#allocation12], %s648
        // Predicated region
        $region97: #{stock_decoder.1} parent=75 // pred_check
          %p650 = pneg %p305
        $region98: #{stock_decoder.1} parent=75 // pred_check_branch
          %652 = sbr.rel (%p650) target = $region100
        $region99: #{stock_decoder.1} parent=75 // pred_region
          %653 = dma.done %s646, 4096
        $region100: #{stock_decoder.1} parent=75 // pred_fallthru
          _
        %s654 = sand.u32 %s344, 1
        %s655 = scalar_lea.sflag [#allocation14], %s654
        %s656 = sand.u32 %s344, 1
        %s657 = smul.addr %s656, 256
        %s658 = scalar_lea.vmem [#allocation13], %s657
        // Predicated region
        $region101: #{stock_decoder.1} parent=75 // pred_check
          %p659 = pneg %p357
        $region102: #{stock_decoder.1} parent=75 // pred_check_branch
          %661 = sbr.rel (%p659) target = $region104
        $region103: #{stock_decoder.1} parent=75 // pred_region
          %662 = dma.done %s655, 4096
        $region104: #{stock_decoder.1} parent=75 // pred_fallthru
          _
        %663 = sfence
        %p664 = pneg %p55
        %p665 = pneg %p52
        %p666 = pneg %p76
        %p667 = pneg %p73
        %p668 = pneg %p97
        %p669 = pneg %p94
        %p670 = scmp.lt.s32.totalorder %s39, 1
        %s671 = scalar_select %p670, %s39, 1
        %s672 = smul.addr %s671, 8
        %s673 = scalar_lea.vmem %s3, %s672
        %p674 = pneg %p123
        %p675 = pneg %p120
        %s676 = sand.u32 %s136, 1
        %s677 = scalar_lea.sflag [#allocation3], %s676
        %s678 = sand.u32 %s136, 1
        %s679 = smul.addr %s678, 192
        %s680 = scalar_lea.vmem [#allocation6], %s679
        %p681 = pneg %p149
        %p682 = pneg %p146
        %s683 = sand.u32 %s39, 1
        %s684 = scalar_lea.sflag [#allocation8], %s683
        %s685 = sand.u32 %s162, 1
        %s686 = smul.addr %s685, 64
        %s687 = scalar_lea.vmem [#allocation7], %s686
        %p688 = pneg %p175
        %p689 = pneg %p172
        %p690 = scmp.lt.s32.totalorder %s39, 1
        %s691 = scalar_select %p690, %s39, 1
        %s692 = scalar_lea.vmem %s6, %s691
        %p693 = pneg %p201
        %p694 = pneg %p198
        %s695 = sand.u32 %s39, 1
        %s696 = scalar_lea.sflag [#allocation8], %s695
        %s697 = sand.u32 %s214, 1
        %s698 = smul.addr %s697, 192
        %s699 = scalar_lea.vmem [#allocation9], %s698
        %p700 = pneg %p227
        %p701 = pneg %p224
        %s702 = sand.u32 %s39, 1
        %s703 = scalar_lea.sflag [#allocation11], %s702
        %s704 = sand.u32 %s240, 1
        %s705 = smul.addr %s704, 64
        %s706 = scalar_lea.vmem [#allocation10], %s705
        %p707 = pneg %p253
        %p708 = pneg %p250
        %p709 = scmp.lt.s32.totalorder %s39, 1
        %s710 = scalar_select %p709, %s39, 1
        %s711 = scalar_lea.vmem %s9, %s710
        %p712 = pneg %p279
        %p713 = pneg %p276
        %s714 = sand.u32 %s39, 1
        %s715 = scalar_lea.sflag [#allocation11], %s714
        %s716 = sand.u32 %s292, 1
        %s717 = smul.addr %s716, 256
        %s718 = scalar_lea.vmem [#allocation12], %s717
        %p719 = pneg %p305
        %p720 = pneg %p302
        %p721 = scmp.lt.s32.totalorder %s39, 1
        %s722 = scalar_select %p721, %s39, 1
        %s723 = smul.addr %s722, 4
        %s724 = scalar_lea.vmem %s11, %s723
        %p725 = pneg %p331
        %p726 = pneg %p328
        %s727 = sand.u32 %s344, 1
        %s728 = scalar_lea.sflag [#allocation14], %s727
        %s729 = sand.u32 %s344, 1
        %s730 = smul.addr %s729, 256
        %s731 = scalar_lea.vmem [#allocation13], %s730
        %p732 = pneg %p357
        %p733 = pneg %p354
        %p734 = scmp.lt.s32.totalorder %s39, 1
        %s735 = scalar_select %p734, %s39, 1
        %s736 = scalar_lea.vmem %s13, %s735
        %p737 = pneg %p383
        %p738 = pneg %p380
        %p739 = pneg %p404
        %p740 = pneg %p401
        %p741 = scmp.lt.s32.totalorder %s39, 1
        %s742 = scalar_select %p741, %s39, 1
        %s743 = smul.addr %s742, 8
        %s744 = scalar_lea.vmem %s3, %s743
        %p745 = scmp.lt.s32.totalorder %s39, 1
        %s746 = scalar_select %p745, %s39, 1
        %s747 = scalar_lea.vmem %s6, %s746
        %p748 = scmp.lt.s32.totalorder %s39, 1
        %s749 = scalar_select %p748, %s39, 1
        %s750 = scalar_lea.vmem %s9, %s749
        %p751 = scmp.lt.s32.totalorder %s39, 1
        %s752 = scalar_select %p751, %s39, 1
        %s753 = smul.addr %s752, 4
        %s754 = scalar_lea.vmem %s11, %s753
        %p755 = scmp.lt.s32.totalorder %s39, 1
        %s756 = scalar_select %p755, %s39, 1
        %s757 = scalar_lea.vmem %s13, %s756
        %p759 = scmp.eq.s32.totalorder %s39, 0
        // Predicated region
        $region105: #{stock_decoder.1} parent=75 // pred_check
          %p760 = pneg %p759
        $region106: #{stock_decoder.1} parent=75 // pred_check_branch
          %762 = sbr.rel (%p760) target = $region108
        $region107: #{stock_decoder.1} parent=75 // pred_region
          %v763 = vld [vmem:[%s1] sm:$0xff]
          %v764 = vld [vmem:[%s1 + $0x8] sm:$0xff]
          %765 = vst [vmem:[#allocation15] sm:$0xff] %v763
          %766 = vst [vmem:[#allocation15 + $0x8] sm:$0xff] %v764
        $region108: #{stock_decoder.1} parent=75 // pred_fallthru
          _
        %s767 = smul.u32 %s39, 128
        %s768 = sld [smem:[#allocation2 + %s767]]
        %s769 = sadd.s32 %s767, 1
        %s770 = sld [smem:[#allocation2 + %s769]]
        %v771 = vld [vmem:[#allocation15] sm:$0xff]
        %v772 = vld [vmem:[#allocation15 + $0x8] sm:$0xff]
        %v773 = vld [vmem:[%s2] sm:$0xf]
        %v774 = vld [vmem:[%s2 + $0x4] sm:$0xf]
        %v775 = vld [vmem:[%s2 + $0x8] sm:$0xf]
        %v776 = vld [vmem:[%s2 + $0xc] sm:$0xf]
        %v777 = vld [vmem:[%s744] sm:$0x1]
        %v778 = vld [vmem:[%s744 + $0x1] sm:$0x1]
        %779 = vadd.xlane.f32.xlu0 %v771
        %v780 = vpop.xlane.xlu0 %779
        %781 = vadd.xlane.f32.xlu0 %v772
        %v782 = vpop.xlane.xlu0 %781
        %v783 = vrcp.pop 128.0
        %v784 = vmul.f32 %v780, %v783
        %v785 = vmul.f32 %v782, %v783
        %v786 = vsub.f32 %v771, %v784
        %v787 = vsub.f32 %v772, %v785
        %v788 = vmul.f32 %v786, %v786
        %v789 = vmul.f32 %v787, %v787
        %790 = vadd.xlane.f32.xlu0 %v788
        %v791 = vpop.xlane.xlu0 %790
        %792 = vadd.xlane.f32.xlu0 %v789
        %v793 = vpop.xlane.xlu0 %792
        %v794 = vmul.f32 %v791, %v783
        %v795 = vmul.f32 %v793, %v783
        %v796 = vadd.f32 %v794, 1e-05
        %v797 = vadd.f32 %v795, 1e-05
        %v798 = vrsqrt.pop %v796
        %v799 = vrsqrt.pop %v797
        %v800 = vmul.f32 %v786, %v798
        %v801 = vmul.f32 %v787, %v799
        %v802 = vlaneseq
        %v803 = vshrl.u32 %v802, 7
        %v804 = vsub.s32 0, %v803
        %v805 = vrot.slane %v777, %v804
        %v806 = vmul.f32 %v800, %v805
        %v807 = vmul.f32 %v801, %v805
        %v808 = vlaneseq
        %v809 = vshrl.u32 %v808, 7
        %v810 = vsub.s32 0, %v809
        %v811 = vrot.slane %v778, %v810
        %v812 = vadd.f32 %v806, %v811
        %v813 = vadd.f32 %v807, %v811
        %v814 = vpack.c.bf16 %v813, %v812
        %v815 = vld [vmem:[%s613] sm:$0xf]
        %v816 = vld [vmem:[%s613 + $0xc] sm:$0xf]
        %v817 = vld [vmem:[%s613 + $0x18] sm:$0xf]
        %v818 = vld [vmem:[%s613 + $0x24] sm:$0xf]
        %v819 = vld [vmem:[%s613 + $0x30] sm:$0xf]
        %v820 = vld [vmem:[%s613 + $0x3c] sm:$0xf]
        %v821 = vld [vmem:[%s613 + $0x48] sm:$0xf]
        %v822 = vld [vmem:[%s613 + $0x54] sm:$0xf]
        %v823 = vld [vmem:[%s613 + $0x60] sm:$0xf]
        %v824 = vld [vmem:[%s613 + $0x6c] sm:$0xf]
        %v825 = vld [vmem:[%s613 + $0x78] sm:$0xf]
        %v826 = vld [vmem:[%s613 + $0x84] sm:$0xf]
        %v827 = vld [vmem:[%s613 + $0x90] sm:$0xf]
        %v828 = vld [vmem:[%s613 + $0x9c] sm:$0xf]
        %v829 = vld [vmem:[%s613 + $0xa8] sm:$0xf]
        %v830 = vld [vmem:[%s613 + $0xb4] sm:$0xf]
        %v847 = vunpack.c.l.b16 %v815
        %v848 = vunpack.c.l.b16 %v816
        %v849 = vunpack.c.l.b16 %v817
        %v850 = vunpack.c.l.b16 %v818
        %v851 = vunpack.c.l.b16 %v819
        %v852 = vunpack.c.l.b16 %v820
        %v853 = vunpack.c.l.b16 %v821
        %v854 = vunpack.c.l.b16 %v822
        %v855 = vunpack.c.l.b16 %v823
        %v856 = vunpack.c.l.b16 %v824
        %v857 = vunpack.c.l.b16 %v825
        %v858 = vunpack.c.l.b16 %v826
        %v859 = vunpack.c.l.b16 %v827
        %v860 = vunpack.c.l.b16 %v828
        %v861 = vunpack.c.l.b16 %v829
        %v862 = vunpack.c.l.b16 %v830
        %v863 = vpack.c.b16 %v848, %v847
        %v864 = vpack.c.b16 %v850, %v849
        %v865 = vpack.c.b16 %v852, %v851
        %v866 = vpack.c.b16 %v854, %v853
        %v867 = vpack.c.b16 %v856, %v855
        %v868 = vpack.c.b16 %v858, %v857
        %v869 = vpack.c.b16 %v860, %v859
        %v870 = vpack.c.b16 %v862, %v861
        %879 = vmatprep.subr.bf16.mxu0 0
        %880 = vmatpush1.bf16.msra.mxu0 %v863
        %881 = vmatprep.subr.bf16.mxu0 0
        %882 = vmatpush1.bf16.msra.mxu0 %v864
        %883 = vmatprep.subr.bf16.mxu0 0
        %884 = vmatpush1.bf16.msra.mxu0 %v865
        %885 = vmatprep.subr.bf16.mxu0 0
        %886 = vmatpush1.bf16.msra.mxu0 %v866
        %887 = vmatprep.subr.bf16.mxu0 0
        %888 = vmatpush1.bf16.msra.mxu0 %v867
        %889 = vmatprep.subr.bf16.mxu0 0
        %890 = vmatpush1.bf16.msra.mxu0 %v868
        %891 = vmatprep.subr.bf16.mxu0 0
        %892 = vmatpush1.bf16.msra.mxu0 %v869
        %893 = vmatprep.subr.bf16.mxu0 0
        %894 = vmatpush1.bf16.msra.mxu0 %v870
        %895 = vmatprep.subr.bf16.mxu0 0
        %896 = vmatpush1.bf16.msra.mxu0 0
        %897 = vmatprep.subr.bf16.mxu0 0
        %898 = vmatpush1.bf16.msra.mxu0 0
        %899 = vmatprep.subr.bf16.mxu0 0
        %900 = vmatpush1.bf16.msra.mxu0 0
        %901 = vmatprep.subr.bf16.mxu0 0
        %902 = vmatpush1.bf16.msra.mxu0 0
        %903 = vmatprep.subr.bf16.mxu0 0
        %904 = vmatpush1.bf16.msra.mxu0 0
        %905 = vmatprep.subr.bf16.mxu0 0
        %906 = vmatpush1.bf16.msra.mxu0 0
        %907 = vmatprep.subr.bf16.mxu0 0
        %908 = vmatpush1.bf16.msra.mxu0 0
        %909 = vmatprep.subr.bf16.mxu0 0
        %910 = vmatpush1.bf16.msra.mxu0 0
        %911 = vmatprep.mubr.bf16.mxu0 0
        %912 = vmatmul.mubr.bf16.gmra.mrb[0].mxu0 %v814
        %v913 = vpop.f32.mrb[0].mxu0
        %v914 = vadd.f32 0.0, %v913
        %v915 = vpop.f32.mrb[0].mxu0
        %v916 = vpop.f32.mrb[0].mxu0
        %v917 = vadd.f32 0.0, %v916
        %v918 = vpop.f32.mrb[0].mxu0
        %919 = vdwg.mxu0
        %v920 = vld [vmem:[%s613 + $0x4] sm:$0xff]
        %v921 = vld [vmem:[%s613 + $0x10] sm:$0xff]
        %v922 = vld [vmem:[%s613 + $0x1c] sm:$0xff]
        %v923 = vld [vmem:[%s613 + $0x28] sm:$0xff]
        %v924 = vld [vmem:[%s613 + $0x34] sm:$0xff]
        %v925 = vld [vmem:[%s613 + $0x40] sm:$0xff]
        %v926 = vld [vmem:[%s613 + $0x4c] sm:$0xff]
        %v927 = vld [vmem:[%s613 + $0x58] sm:$0xff]
        %v928 = vld [vmem:[%s613 + $0x64] sm:$0xff]
        %v929 = vld [vmem:[%s613 + $0x70] sm:$0xff]
        %v930 = vld [vmem:[%s613 + $0x7c] sm:$0xff]
        %v931 = vld [vmem:[%s613 + $0x88] sm:$0xff]
        %v932 = vld [vmem:[%s613 + $0x94] sm:$0xff]
        %v933 = vld [vmem:[%s613 + $0xa0] sm:$0xff]
        %v934 = vld [vmem:[%s613 + $0xac] sm:$0xff]
        %v935 = vld [vmem:[%s613 + $0xb8] sm:$0xff]
        %v940 = vunpack.c.l.b16 %v773
        %v941 = vunpack.c.l.b16 %v774
        %v942 = vunpack.c.l.b16 %v775
        %v943 = vunpack.c.l.b16 %v776
        %v944 = vpack.c.b16 %v941, %v940
        %v945 = vpack.c.b16 %v943, %v942
        %v964 = vunpack.c.l.b16 %v920
        %v965 = vunpack.c.h.b16 %v920
        %v966 = vunpack.c.l.b16 %v921
        %v967 = vunpack.c.h.b16 %v921
        %v968 = vunpack.c.l.b16 %v922
        %v969 = vunpack.c.h.b16 %v922
        %v970 = vunpack.c.l.b16 %v923
        %v971 = vunpack.c.h.b16 %v923
        %v972 = vunpack.c.l.b16 %v924
        %v973 = vunpack.c.h.b16 %v924
        %v974 = vunpack.c.l.b16 %v925
        %v975 = vunpack.c.h.b16 %v925
        %v976 = vunpack.c.l.b16 %v926
        %v977 = vunpack.c.h.b16 %v926
        %v978 = vunpack.c.l.b16 %v927
        %v979 = vunpack.c.h.b16 %v927
        %v980 = vunpack.c.l.b16 %v928
        %v981 = vunpack.c.h.b16 %v928
        %v982 = vunpack.c.l.b16 %v929
        %v983 = vunpack.c.h.b16 %v929
        %v984 = vunpack.c.l.b16 %v930
        %v985 = vunpack.c.h.b16 %v930
        %v986 = vunpack.c.l.b16 %v931
        %v987 = vunpack.c.h.b16 %v931
        %v988 = vunpack.c.l.b16 %v932
        %v989 = vunpack.c.h.b16 %v932
        %v990 = vunpack.c.l.b16 %v933
        %v991 = vunpack.c.h.b16 %v933
        %v992 = vunpack.c.l.b16 %v934
        %v993 = vunpack.c.h.b16 %v934
        %v994 = vunpack.c.l.b16 %v935
        %v995 = vunpack.c.h.b16 %v935
        %v996 = vpack.c.b16 %v966, %v964
        %v997 = vpack.c.b16 %v967, %v965
        %v998 = vpack.c.b16 %v970, %v968
        %v999 = vpack.c.b16 %v971, %v969
        %v1000 = vpack.c.b16 %v974, %v972
        %v1001 = vpack.c.b16 %v975, %v973
        %v1002 = vpack.c.b16 %v978, %v976
        %v1003 = vpack.c.b16 %v979, %v977
        %v1004 = vpack.c.b16 %v982, %v980
        %v1005 = vpack.c.b16 %v983, %v981
        %v1006 = vpack.c.b16 %v986, %v984
        %v1007 = vpack.c.b16 %v987, %v985
        %v1008 = vpack.c.b16 %v990, %v988
        %v1009 = vpack.c.b16 %v991, %v989
        %v1010 = vpack.c.b16 %v994, %v992
        %v1011 = vpack.c.b16 %v995, %v993
        %1028 = vmatprep.subr.bf16.mxu0 %v997
        %1029 = vmatpush1.bf16.msra.mxu0 %v996
        %1030 = vmatprep.subr.bf16.mxu0 %v999
        %1031 = vmatpush1.bf16.msra.mxu0 %v998
        %1032 = vmatprep.subr.bf16.mxu0 %v1001
        %1033 = vmatpush1.bf16.msra.mxu0 %v1000
        %1034 = vmatprep.subr.bf16.mxu0 %v1003
        %1035 = vmatpush1.bf16.msra.mxu0 %v1002
        %1036 = vmatprep.subr.bf16.mxu0 %v1005
        %1037 = vmatpush1.bf16.msra.mxu0 %v1004
        %1038 = vmatprep.subr.bf16.mxu0 %v1007
        %1039 = vmatpush1.bf16.msra.mxu0 %v1006
        %1040 = vmatprep.subr.bf16.mxu0 %v1009
        %1041 = vmatpush1.bf16.msra.mxu0 %v1008
        %1042 = vmatprep.subr.bf16.mxu0 %v1011
        %1043 = vmatpush1.bf16.msra.mxu0 %v1010
        %1044 = vmatprep.subr.bf16.mxu0 0
        %1045 = vmatpush1.bf16.msra.mxu0 0
        %1046 = vmatprep.subr.bf16.mxu0 0
        %1047 = vmatpush1.bf16.msra.mxu0 0
        %1048 = vmatprep.subr.bf16.mxu0 0
        %1049 = vmatpush1.bf16.msra.mxu0 0
        %1050 = vmatprep.subr.bf16.mxu0 0
        %1051 = vmatpush1.bf16.msra.mxu0 0
        %1052 = vmatprep.subr.bf16.mxu0 0
        %1053 = vmatpush1.bf16.msra.mxu0 0
        %1054 = vmatprep.subr.bf16.mxu0 0
        %1055 = vmatpush1.bf16.msra.mxu0 0
        %1056 = vmatprep.subr.bf16.mxu0 0
        %1057 = vmatpush1.bf16.msra.mxu0 0
        %1058 = vmatprep.subr.bf16.mxu0 0
        %1059 = vmatpush1.bf16.msra.mxu0 0
        %1060 = vmatprep.mubr.bf16.mxu0 0
        %1061 = vmatmul.mubr.bf16.gmra.mrb[0].mxu0 %v944
        %v1062 = vpop.f32.mrb[0].mxu0
        %v1063 = vadd.f32 0.0, %v1062
        %v1064 = vpop.f32.mrb[0].mxu0
        %v1065 = vadd.f32 0.0, %v1064
        %v1066 = vpop.f32.mrb[0].mxu0
        %v1067 = vadd.f32 0.0, %v1066
        %v1068 = vpop.f32.mrb[0].mxu0
        %v1069 = vadd.f32 0.0, %v1068
        %1070 = vmatprep.mubr.bf16.mxu0 0
        %1071 = vmatmul.mubr.bf16.gmra.mrb[0].mxu0 %v945
        %v1072 = vpop.f32.mrb[0].mxu0
        %v1073 = vadd.f32 0.0, %v1072
        %v1074 = vpop.f32.mrb[0].mxu0
        %v1075 = vadd.f32 0.0, %v1074
        %v1076 = vpop.f32.mrb[0].mxu0
        %v1077 = vadd.f32 0.0, %v1076
        %v1078 = vpop.f32.mrb[0].mxu0
        %v1079 = vadd.f32 0.0, %v1078
        %1080 = vdwg.mxu0
        %1083 = vrot.lane.b32.xlu0 %v914, 112
        %v1084 = vpop.permute.xlu0 %1083
        %1085 = vrot.lane.b32.xlu0 %v917, 112
        %v1086 = vpop.permute.xlu0 %1085
        %1089 = vrot.lane.b32.xlu0 %v914, 96
        %v1090 = vpop.permute.xlu0 %1089
        %1091 = vrot.lane.b32.xlu0 %v917, 96
        %v1092 = vpop.permute.xlu0 %1091
        %1095 = vrot.lane.b32.xlu0 %v914, 80
        %v1096 = vpop.permute.xlu0 %1095
        %1097 = vrot.lane.b32.xlu0 %v917, 80
        %v1098 = vpop.permute.xlu0 %1097
        %1101 = vrot.lane.b32.xlu0 %v914, 64
        %v1102 = vpop.permute.xlu0 %1101
        %1103 = vrot.lane.b32.xlu0 %v917, 64
        %v1104 = vpop.permute.xlu0 %1103
        %1107 = vrot.lane.b32.xlu0 %v914, 48
        %v1108 = vpop.permute.xlu0 %1107
        %1109 = vrot.lane.b32.xlu0 %v917, 48
        %v1110 = vpop.permute.xlu0 %1109
        %1113 = vrot.lane.b32.xlu0 %v914, 32
        %v1114 = vpop.permute.xlu0 %1113
        %1115 = vrot.lane.b32.xlu0 %v917, 32
        %v1116 = vpop.permute.xlu0 %1115
        %1119 = vrot.lane.b32.xlu0 %v914, 16
        %v1120 = vpop.permute.xlu0 %1119
        %1121 = vrot.lane.b32.xlu0 %v917, 16
        %v1122 = vpop.permute.xlu0 %1121
        %v1125 = vpack.c.bf16 %v914, %v914
        %v1126 = vpack.c.bf16 %v1084, %v1084
        %v1127 = vpack.c.bf16 %v1090, %v1090
        %v1128 = vpack.c.bf16 %v1096, %v1096
        %v1129 = vpack.c.bf16 %v1102, %v1102
        %v1130 = vpack.c.bf16 %v1108, %v1108
        %v1131 = vpack.c.bf16 %v1114, %v1114
        %v1132 = vpack.c.bf16 %v1120, %v1120
        %v1133 = vpack.c.bf16 %v917, %v917
        %v1134 = vpack.c.bf16 %v1086, %v1086
        %v1135 = vpack.c.bf16 %v1092, %v1092
        %v1136 = vpack.c.bf16 %v1098, %v1098
        %v1137 = vpack.c.bf16 %v1104, %v1104
        %v1138 = vpack.c.bf16 %v1110, %v1110
        %v1139 = vpack.c.bf16 %v1116, %v1116
        %v1140 = vpack.c.bf16 %v1122, %v1122
        %1145 = vrot.lane.b32.xlu0 %v1063, 112
        %v1146 = vpop.permute.xlu0 %1145
        %1147 = vrot.lane.b32.xlu0 %v1067, 112
        %v1148 = vpop.permute.xlu0 %1147
        %1149 = vrot.lane.b32.xlu0 %v1073, 112
        %v1150 = vpop.permute.xlu0 %1149
        %1151 = vrot.lane.b32.xlu0 %v1077, 112
        %v1152 = vpop.permute.xlu0 %1151
        %1157 = vrot.lane.b32.xlu0 %v1063, 96
        %v1158 = vpop.permute.xlu0 %1157
        %1159 = vrot.lane.b32.xlu0 %v1067, 96
        %v1160 = vpop.permute.xlu0 %1159
        %1161 = vrot.lane.b32.xlu0 %v1073, 96
        %v1162 = vpop.permute.xlu0 %1161
        %1163 = vrot.lane.b32.xlu0 %v1077, 96
        %v1164 = vpop.permute.xlu0 %1163
        %1169 = vrot.lane.b32.xlu0 %v1063, 80
        %v1170 = vpop.permute.xlu0 %1169
        %1171 = vrot.lane.b32.xlu0 %v1067, 80
        %v1172 = vpop.permute.xlu0 %1171
        %1173 = vrot.lane.b32.xlu0 %v1073, 80
        %v1174 = vpop.permute.xlu0 %1173
        %1175 = vrot.lane.b32.xlu0 %v1077, 80
        %v1176 = vpop.permute.xlu0 %1175
        %1181 = vrot.lane.b32.xlu0 %v1063, 64
        %v1182 = vpop.permute.xlu0 %1181
        %1183 = vrot.lane.b32.xlu0 %v1067, 64
        %v1184 = vpop.permute.xlu0 %1183
        %1185 = vrot.lane.b32.xlu0 %v1073, 64
        %v1186 = vpop.permute.xlu0 %1185
        %1187 = vrot.lane.b32.xlu0 %v1077, 64
        %v1188 = vpop.permute.xlu0 %1187
        %1193 = vrot.lane.b32.xlu0 %v1063, 48
        %v1194 = vpop.permute.xlu0 %1193
        %1195 = vrot.lane.b32.xlu0 %v1067, 48
        %v1196 = vpop.permute.xlu0 %1195
        %1197 = vrot.lane.b32.xlu0 %v1073, 48
        %v1198 = vpop.permute.xlu0 %1197
        %1199 = vrot.lane.b32.xlu0 %v1077, 48
        %v1200 = vpop.permute.xlu0 %1199
        %1205 = vrot.lane.b32.xlu0 %v1063, 32
        %v1206 = vpop.permute.xlu0 %1205
        %1207 = vrot.lane.b32.xlu0 %v1067, 32
        %v1208 = vpop.permute.xlu0 %1207
        %1209 = vrot.lane.b32.xlu0 %v1073, 32
        %v1210 = vpop.permute.xlu0 %1209
        %1211 = vrot.lane.b32.xlu0 %v1077, 32
        %v1212 = vpop.permute.xlu0 %1211
        %1217 = vrot.lane.b32.xlu0 %v1063, 16
        %v1218 = vpop.permute.xlu0 %1217
        %1219 = vrot.lane.b32.xlu0 %v1067, 16
        %v1220 = vpop.permute.xlu0 %1219
        %1221 = vrot.lane.b32.xlu0 %v1073, 16
        %v1222 = vpop.permute.xlu0 %1221
        %1223 = vrot.lane.b32.xlu0 %v1077, 16
        %v1224 = vpop.permute.xlu0 %1223
        %v1229 = vpack.c.bf16 %v1067, %v1063
        %v1230 = vpack.c.bf16 %v1148, %v1146
        %v1231 = vpack.c.bf16 %v1160, %v1158
        %v1232 = vpack.c.bf16 %v1172, %v1170
        %v1233 = vpack.c.bf16 %v1184, %v1182
        %v1234 = vpack.c.bf16 %v1196, %v1194
        %v1235 = vpack.c.bf16 %v1208, %v1206
        %v1236 = vpack.c.bf16 %v1220, %v1218
        %v1237 = vpack.c.bf16 %v1077, %v1073
        %v1238 = vpack.c.bf16 %v1152, %v1150
        %v1239 = vpack.c.bf16 %v1164, %v1162
        %v1240 = vpack.c.bf16 %v1176, %v1174
        %v1241 = vpack.c.bf16 %v1188, %v1186
        %v1242 = vpack.c.bf16 %v1200, %v1198
        %v1243 = vpack.c.bf16 %v1212, %v1210
        %v1244 = vpack.c.bf16 %v1224, %v1222
        %1249 = vrot.lane.b32.xlu0 %v1065, 96
        %v1250 = vpop.permute.xlu0 %1249
        %1251 = vrot.lane.b32.xlu0 %v1069, 96
        %v1252 = vpop.permute.xlu0 %1251
        %1253 = vrot.lane.b32.xlu0 %v1075, 96
        %v1254 = vpop.permute.xlu0 %1253
        %1255 = vrot.lane.b32.xlu0 %v1079, 96
        %v1256 = vpop.permute.xlu0 %1255
        %1261 = vrot.lane.b32.xlu0 %v1065, 64
        %v1262 = vpop.permute.xlu0 %1261
        %1263 = vrot.lane.b32.xlu0 %v1069, 64
        %v1264 = vpop.permute.xlu0 %1263
        %1265 = vrot.lane.b32.xlu0 %v1075, 64
        %v1266 = vpop.permute.xlu0 %1265
        %1267 = vrot.lane.b32.xlu0 %v1079, 64
        %v1268 = vpop.permute.xlu0 %1267
        %1273 = vrot.lane.b32.xlu0 %v1065, 32
        %v1274 = vpop.permute.xlu0 %1273
        %1275 = vrot.lane.b32.xlu0 %v1069, 32
        %v1276 = vpop.permute.xlu0 %1275
        %1277 = vrot.lane.b32.xlu0 %v1075, 32
        %v1278 = vpop.permute.xlu0 %1277
        %1279 = vrot.lane.b32.xlu0 %v1079, 32
        %v1280 = vpop.permute.xlu0 %1279
        %v1285 = vpack.c.bf16 %v1069, %v1065
        %v1286 = vpack.c.bf16 %v1252, %v1250
        %v1287 = vpack.c.bf16 %v1264, %v1262
        %v1288 = vpack.c.bf16 %v1276, %v1274
        %v1289 = vpack.c.bf16 %v1079, %v1075
        %v1290 = vpack.c.bf16 %v1256, %v1254
        %v1291 = vpack.c.bf16 %v1268, %v1266
        %v1292 = vpack.c.bf16 %v1280, %v1278
        %vm1293 = vcmask 130048
        %v1295 = vsel %vm1293, %v1125, 0
        %v1298 = vsel %vm1293, %v1229, 0
        %1300 = vmatprep.subr.bf16.mxu0 0
        %1301 = vmatpush1.bf16.xpose.msra.mxu0 %v1298
        %1302 = vmatprep.subr.bf16.mxu0 0
        %1303 = vmatpush1.bf16.xpose.msra.mxu0 0
        %1304 = vmatprep.subr.bf16.mxu0 0
        %1305 = vmatpush1.bf16.xpose.msra.mxu0 0
        %1306 = vmatprep.subr.bf16.mxu0 0
        %1307 = vmatpush1.bf16.xpose.msra.mxu0 0
        %1308 = vmatprep.subr.bf16.mxu0 0
        %1309 = vmatpush1.bf16.xpose.msra.mxu0 0
        %1310 = vmatprep.subr.bf16.mxu0 0
        %1311 = vmatpush1.bf16.xpose.msra.mxu0 0
        %1312 = vmatprep.subr.bf16.mxu0 0
        %1313 = vmatpush1.bf16.xpose.msra.mxu0 0
        %1314 = vmatprep.subr.bf16.mxu0 0
        %1315 = vmatpush1.bf16.xpose.msra.mxu0 0
        %1316 = vmatprep.subr.bf16.mxu0 0
        %1317 = vmatpush1.bf16.xpose.msra.mxu0 0
        %1318 = vmatprep.subr.bf16.mxu0 0
        %1319 = vmatpush1.bf16.xpose.msra.mxu0 0
        %1320 = vmatprep.subr.bf16.mxu0 0
        %1321 = vmatpush1.bf16.xpose.msra.mxu0 0
        %1322 = vmatprep.subr.bf16.mxu0 0
        %1323 = vmatpush1.bf16.xpose.msra.mxu0 0
        %1324 = vmatprep.subr.bf16.mxu0 0
        %1325 = vmatpush1.bf16.xpose.msra.mxu0 0
        %1326 = vmatprep.subr.bf16.mxu0 0
        %1327 = vmatpush1.bf16.xpose.msra.mxu0 0
        %1328 = vmatprep.subr.bf16.mxu0 0
        %1329 = vmatpush1.bf16.xpose.msra.mxu0 0
        %1330 = vmatprep.subr.bf16.mxu0 0
        %1331 = vmatpush1.bf16.xpose.msra.mxu0 0
        %1332 = vmatprep.mubr.bf16.mxu0 0
        %1333 = vmatmul.mubr.bf16.gmra.mrb[0].mxu0 %v1295
        %v1334 = vpop.f32.mrb[0].mxu0
        %v1335 = vadd.f32 0.0, %v1334
        %v1336 = vpop.f32.mrb[0].mxu0
        %v1337 = vpop.f32.mrb[0].mxu0
        %v1338 = vpop.f32.mrb[0].mxu0
        %1339 = vdwg.mxu0
        %v1341 = vsel %vm1293, %v1126, 0
        %v1344 = vsel %vm1293, %v1230, 0
        %1346 = vmatprep.subr.bf16.mxu0 0
        %1347 = vmatpush1.bf16.xpose.msra.mxu0 %v1344
        %1348 = vmatprep.subr.bf16.mxu0 0
        %1349 = vmatpush1.bf16.xpose.msra.mxu0 0
        %1350 = vmatprep.subr.bf16.mxu0 0
        %1351 = vmatpush1.bf16.xpose.msra.mxu0 0
        %1352 = vmatprep.subr.bf16.mxu0 0
        %1353 = vmatpush1.bf16.xpose.msra.mxu0 0
        %1354 = vmatprep.subr.bf16.mxu0 0
        %1355 = vmatpush1.bf16.xpose.msra.mxu0 0
        %1356 = vmatprep.subr.bf16.mxu0 0
        %1357 = vmatpush1.bf16.xpose.msra.mxu0 0
        %1358 = vmatprep.subr.bf16.mxu0 0
        %1359 = vmatpush1.bf16.xpose.msra.mxu0 0
        %1360 = vmatprep.subr.bf16.mxu0 0
        %1361 = vmatpush1.bf16.xpose.msra.mxu0 0
        %1362 = vmatprep.subr.bf16.mxu0 0
        %1363 = vmatpush1.bf16.xpose.msra.mxu0 0
        %1364 = vmatprep.subr.bf16.mxu0 0
        %1365 = vmatpush1.bf16.xpose.msra.mxu0 0
        %1366 = vmatprep.subr.bf16.mxu0 0
        %1367 = vmatpush1.bf16.xpose.msra.mxu0 0
        %1368 = vmatprep.subr.bf16.mxu0 0
        %1369 = vmatpush1.bf16.xpose.msra.mxu0 0
        %1370 = vmatprep.subr.bf16.mxu0 0
        %1371 = vmatpush1.bf16.xpose.msra.mxu0 0
        %1372 = vmatprep.subr.bf16.mxu0 0
        %1373 = vmatpush1.bf16.xpose.msra.mxu0 0
        %1374 = vmatprep.subr.bf16.mxu0 0
        %1375 = vmatpush1.bf16.xpose.msra.mxu0 0
        %1376 = vmatprep.subr.bf16.mxu0 0
        %1377 = vmatpush1.bf16.xpose.msra.mxu0 0
        %1378 = vmatprep.mubr.bf16.mxu0 0
        %1379 = vmatmul.mubr.bf16.gmra.mrb[0].mxu0 %v1341
        %v1380 = vpop.f32.mrb[0].mxu0
        %v1381 = vadd.f32 0.0, %v1380
        %v1382 = vpop.f32.mrb[0].mxu0
        %v1383 = vpop.f32.mrb[0].mxu0
        %v1384 = vpop.f32.mrb[0].mxu0
        %1385 = vdwg.mxu0
        %v1387 = vsel %vm1293, %v1127, 0
        %v1390 = vsel %vm1293, %v1231, 0
        %1392 = vmatprep.subr.bf16.mxu0 0
        %1393 = vmatpush1.bf16.xpose.msra.mxu0 %v1390
        %1394 = vmatprep.subr.bf16.mxu0 0
        %1395 = vmatpush1.bf16.xpose.msra.mxu0 0
        %1396 = vmatprep.subr.bf16.mxu0 0
        %1397 = vmatpush1.bf16.xpose.msra.mxu0 0
        %1398 = vmatprep.subr.bf16.mxu0 0
        %1399 = vmatpush1.bf16.xpose.msra.mxu0 0
        %1400 = vmatprep.subr.bf16.mxu0 0
        %1401 = vmatpush1.bf16.xpose.msra.mxu0 0
        %1402 = vmatprep.subr.bf16.mxu0 0
        %1403 = vmatpush1.bf16.xpose.msra.mxu0 0
        %1404 = vmatprep.subr.bf16.mxu0 0
        %1405 = vmatpush1.bf16.xpose.msra.mxu0 0
        %1406 = vmatprep.subr.bf16.mxu0 0
        %1407 = vmatpush1.bf16.xpose.msra.mxu0 0
        %1408 = vmatprep.subr.bf16.mxu0 0
        %1409 = vmatpush1.bf16.xpose.msra.mxu0 0
        %1410 = vmatprep.subr.bf16.mxu0 0
        %1411 = vmatpush1.bf16.xpose.msra.mxu0 0
        %1412 = vmatprep.subr.bf16.mxu0 0
        %1413 = vmatpush1.bf16.xpose.msra.mxu0 0
        %1414 = vmatprep.subr.bf16.mxu0 0
        %1415 = vmatpush1.bf16.xpose.msra.mxu0 0
        %1416 = vmatprep.subr.bf16.mxu0 0
        %1417 = vmatpush1.bf16.xpose.msra.mxu0 0
        %1418 = vmatprep.subr.bf16.mxu0 0
        %1419 = vmatpush1.bf16.xpose.msra.mxu0 0
        %1420 = vmatprep.subr.bf16.mxu0 0
        %1421 = vmatpush1.bf16.xpose.msra.mxu0 0
        %1422 = vmatprep.subr.bf16.mxu0 0
        %1423 = vmatpush1.bf16.xpose.msra.mxu0 0
        %1424 = vmatprep.mubr.bf16.mxu0 0
        %1425 = vmatmul.mubr.bf16.gmra.mrb[0].mxu0 %v1387
        %v1426 = vpop.f32.mrb[0].mxu0
        %v1427 = vadd.f32 0.0, %v1426
        %v1428 = vpop.f32.mrb[0].mxu0
        %v1429 = vpop.f32.mrb[0].mxu0
        %v1430 = vpop.f32.mrb[0].mxu0
        %1431 = vdwg.mxu0
        %v1433 = vsel %vm1293, %v1128, 0
        %v1436 = vsel %vm1293, %v1232, 0
        %1438 = vmatprep.subr.bf16.mxu0 0
        %1439 = vmatpush1.bf16.xpose.msra.mxu0 %v1436
        %1440 = vmatprep.subr.bf16.mxu0 0
        %1441 = vmatpush1.bf16.xpose.msra.mxu0 0
        %1442 = vmatprep.subr.bf16.mxu0 0
        %1443 = vmatpush1.bf16.xpose.msra.mxu0 0
        %1444 = vmatprep.subr.bf16.mxu0 0
        %1445 = vmatpush1.bf16.xpose.msra.mxu0 0
        %1446 = vmatprep.subr.bf16.mxu0 0
        %1447 = vmatpush1.bf16.xpose.msra.mxu0 0
        %1448 = vmatprep.subr.bf16.mxu0 0
        %1449 = vmatpush1.bf16.xpose.msra.mxu0 0
        %1450 = vmatprep.subr.bf16.mxu0 0
        %1451 = vmatpush1.bf16.xpose.msra.mxu0 0
        %1452 = vmatprep.subr.bf16.mxu0 0
        %1453 = vmatpush1.bf16.xpose.msra.mxu0 0
        %1454 = vmatprep.subr.bf16.mxu0 0
        %1455 = vmatpush1.bf16.xpose.msra.mxu0 0
        %1456 = vmatprep.subr.bf16.mxu0 0
        %1457 = vmatpush1.bf16.xpose.msra.mxu0 0
        %1458 = vmatprep.subr.bf16.mxu0 0
        %1459 = vmatpush1.bf16.xpose.msra.mxu0 0
        %1460 = vmatprep.subr.bf16.mxu0 0
        %1461 = vmatpush1.bf16.xpose.msra.mxu0 0
        %1462 = vmatprep.subr.bf16.mxu0 0
        %1463 = vmatpush1.bf16.xpose.msra.mxu0 0
        %1464 = vmatprep.subr.bf16.mxu0 0
        %1465 = vmatpush1.bf16.xpose.msra.mxu0 0
        %1466 = vmatprep.subr.bf16.mxu0 0
        %1467 = vmatpush1.bf16.xpose.msra.mxu0 0
        %1468 = vmatprep.subr.bf16.mxu0 0
        %1469 = vmatpush1.bf16.xpose.msra.mxu0 0
        %1470 = vmatprep.mubr.bf16.mxu0 0
        %1471 = vmatmul.mubr.bf16.gmra.mrb[0].mxu0 %v1433
        %v1472 = vpop.f32.mrb[0].mxu0
        %v1473 = vadd.f32 0.0, %v1472
        %v1474 = vpop.f32.mrb[0].mxu0
        %v1475 = vpop.f32.mrb[0].mxu0
        %v1476 = vpop.f32.mrb[0].mxu0
        %1477 = vdwg.mxu0
        %v1479 = vsel %vm1293, %v1129, 0
        %v1482 = vsel %vm1293, %v1233, 0
        %1484 = vmatprep.subr.bf16.mxu0 0
        %1485 = vmatpush1.bf16.xpose.msra.mxu0 %v1482
        %1486 = vmatprep.subr.bf16.mxu0 0
        %1487 = vmatpush1.bf16.xpose.msra.mxu0 0
        %1488 = vmatprep.subr.bf16.mxu0 0
        %1489 = vmatpush1.bf16.xpose.msra.mxu0 0
        %1490 = vmatprep.subr.bf16.mxu0 0
        %1491 = vmatpush1.bf16.xpose.msra.mxu0 0
        %1492 = vmatprep.subr.bf16.mxu0 0
        %1493 = vmatpush1.bf16.xpose.msra.mxu0 0
        %1494 = vmatprep.subr.bf16.mxu0 0
        %1495 = vmatpush1.bf16.xpose.msra.mxu0 0
        %1496 = vmatprep.subr.bf16.mxu0 0
        %1497 = vmatpush1.bf16.xpose.msra.mxu0 0
        %1498 = vmatprep.subr.bf16.mxu0 0
        %1499 = vmatpush1.bf16.xpose.msra.mxu0 0
        %1500 = vmatprep.subr.bf16.mxu0 0
        %1501 = vmatpush1.bf16.xpose.msra.mxu0 0
        %1502 = vmatprep.subr.bf16.mxu0 0
        %1503 = vmatpush1.bf16.xpose.msra.mxu0 0
        %1504 = vmatprep.subr.bf16.mxu0 0
        %1505 = vmatpush1.bf16.xpose.msra.mxu0 0
        %1506 = vmatprep.subr.bf16.mxu0 0
        %1507 = vmatpush1.bf16.xpose.msra.mxu0 0
        %1508 = vmatprep.subr.bf16.mxu0 0
        %1509 = vmatpush1.bf16.xpose.msra.mxu0 0
        %1510 = vmatprep.subr.bf16.mxu0 0
        %1511 = vmatpush1.bf16.xpose.msra.mxu0 0
        %1512 = vmatprep.subr.bf16.mxu0 0
        %1513 = vmatpush1.bf16.xpose.msra.mxu0 0
        %1514 = vmatprep.subr.bf16.mxu0 0
        %1515 = vmatpush1.bf16.xpose.msra.mxu0 0
        %1516 = vmatprep.mubr.bf16.mxu0 0
        %1517 = vmatmul.mubr.bf16.gmra.mrb[0].mxu0 %v1479
        %v1518 = vpop.f32.mrb[0].mxu0
        %v1519 = vadd.f32 0.0, %v1518
        %v1520 = vpop.f32.mrb[0].mxu0
        %v1521 = vpop.f32.mrb[0].mxu0
        %v1522 = vpop.f32.mrb[0].mxu0
        %1523 = vdwg.mxu0
        %v1525 = vsel %vm1293, %v1130, 0
        %v1528 = vsel %vm1293, %v1234, 0
        %1530 = vmatprep.subr.bf16.mxu0 0
        %1531 = vmatpush1.bf16.xpose.msra.mxu0 %v1528
        %1532 = vmatprep.subr.bf16.mxu0 0
        %1533 = vmatpush1.bf16.xpose.msra.mxu0 0
        %1534 = vmatprep.subr.bf16.mxu0 0
        %1535 = vmatpush1.bf16.xpose.msra.mxu0 0
        %1536 = vmatprep.subr.bf16.mxu0 0
        %1537 = vmatpush1.bf16.xpose.msra.mxu0 0
        %1538 = vmatprep.subr.bf16.mxu0 0
        %1539 = vmatpush1.bf16.xpose.msra.mxu0 0
        %1540 = vmatprep.subr.bf16.mxu0 0
        %1541 = vmatpush1.bf16.xpose.msra.mxu0 0
        %1542 = vmatprep.subr.bf16.mxu0 0
        %1543 = vmatpush1.bf16.xpose.msra.mxu0 0
        %1544 = vmatprep.subr.bf16.mxu0 0
        %1545 = vmatpush1.bf16.xpose.msra.mxu0 0
        %1546 = vmatprep.subr.bf16.mxu0 0
        %1547 = vmatpush1.bf16.xpose.msra.mxu0 0
        %1548 = vmatprep.subr.bf16.mxu0 0
        %1549 = vmatpush1.bf16.xpose.msra.mxu0 0
        %1550 = vmatprep.subr.bf16.mxu0 0
        %1551 = vmatpush1.bf16.xpose.msra.mxu0 0
        %1552 = vmatprep.subr.bf16.mxu0 0
        %1553 = vmatpush1.bf16.xpose.msra.mxu0 0
        %1554 = vmatprep.subr.bf16.mxu0 0
        %1555 = vmatpush1.bf16.xpose.msra.mxu0 0
        %1556 = vmatprep.subr.bf16.mxu0 0
        %1557 = vmatpush1.bf16.xpose.msra.mxu0 0
        %1558 = vmatprep.subr.bf16.mxu0 0
        %1559 = vmatpush1.bf16.xpose.msra.mxu0 0
        %1560 = vmatprep.subr.bf16.mxu0 0
        %1561 = vmatpush1.bf16.xpose.msra.mxu0 0
        %1562 = vmatprep.mubr.bf16.mxu0 0
        %1563 = vmatmul.mubr.bf16.gmra.mrb[0].mxu0 %v1525
        %v1564 = vpop.f32.mrb[0].mxu0
        %v1565 = vadd.f32 0.0, %v1564
        %v1566 = vpop.f32.mrb[0].mxu0
        %v1567 = vpop.f32.mrb[0].mxu0
        %v1568 = vpop.f32.mrb[0].mxu0
        %1569 = vdwg.mxu0
        %v1571 = vsel %vm1293, %v1131, 0
        %v1574 = vsel %vm1293, %v1235, 0
        %1576 = vmatprep.subr.bf16.mxu0 0
        %1577 = vmatpush1.bf16.xpose.msra.mxu0 %v1574
        %1578 = vmatprep.subr.bf16.mxu0 0
        %1579 = vmatpush1.bf16.xpose.msra.mxu0 0
        %1580 = vmatprep.subr.bf16.mxu0 0
        %1581 = vmatpush1.bf16.xpose.msra.mxu0 0
        %1582 = vmatprep.subr.bf16.mxu0 0
        %1583 = vmatpush1.bf16.xpose.msra.mxu0 0
        %1584 = vmatprep.subr.bf16.mxu0 0
        %1585 = vmatpush1.bf16.xpose.msra.mxu0 0
        %1586 = vmatprep.subr.bf16.mxu0 0
        %1587 = vmatpush1.bf16.xpose.msra.mxu0 0
        %1588 = vmatprep.subr.bf16.mxu0 0
        %1589 = vmatpush1.bf16.xpose.msra.mxu0 0
        %1590 = vmatprep.subr.bf16.mxu0 0
        %1591 = vmatpush1.bf16.xpose.msra.mxu0 0
        %1592 = vmatprep.subr.bf16.mxu0 0
        %1593 = vmatpush1.bf16.xpose.msra.mxu0 0
        %1594 = vmatprep.subr.bf16.mxu0 0
        %1595 = vmatpush1.bf16.xpose.msra.mxu0 0
        %1596 = vmatprep.subr.bf16.mxu0 0
        %1597 = vmatpush1.bf16.xpose.msra.mxu0 0
        %1598 = vmatprep.subr.bf16.mxu0 0
        %1599 = vmatpush1.bf16.xpose.msra.mxu0 0
        %1600 = vmatprep.subr.bf16.mxu0 0
        %1601 = vmatpush1.bf16.xpose.msra.mxu0 0
        %1602 = vmatprep.subr.bf16.mxu0 0
        %1603 = vmatpush1.bf16.xpose.msra.mxu0 0
        %1604 = vmatprep.subr.bf16.mxu0 0
        %1605 = vmatpush1.bf16.xpose.msra.mxu0 0
        %1606 = vmatprep.subr.bf16.mxu0 0
        %1607 = vmatpush1.bf16.xpose.msra.mxu0 0
        %1608 = vmatprep.mubr.bf16.mxu0 0
        %1609 = vmatmul.mubr.bf16.gmra.mrb[0].mxu0 %v1571
        %v1610 = vpop.f32.mrb[0].mxu0
        %v1611 = vadd.f32 0.0, %v1610
        %v1612 = vpop.f32.mrb[0].mxu0
        %v1613 = vpop.f32.mrb[0].mxu0
        %v1614 = vpop.f32.mrb[0].mxu0
        %1615 = vdwg.mxu0
        %v1617 = vsel %vm1293, %v1132, 0
        %v1620 = vsel %vm1293, %v1236, 0
        %1622 = vmatprep.subr.bf16.mxu0 0
        %1623 = vmatpush1.bf16.xpose.msra.mxu0 %v1620
        %1624 = vmatprep.subr.bf16.mxu0 0
        %1625 = vmatpush1.bf16.xpose.msra.mxu0 0
        %1626 = vmatprep.subr.bf16.mxu0 0
        %1627 = vmatpush1.bf16.xpose.msra.mxu0 0
        %1628 = vmatprep.subr.bf16.mxu0 0
        %1629 = vmatpush1.bf16.xpose.msra.mxu0 0
        %1630 = vmatprep.subr.bf16.mxu0 0
        %1631 = vmatpush1.bf16.xpose.msra.mxu0 0
        %1632 = vmatprep.subr.bf16.mxu0 0
        %1633 = vmatpush1.bf16.xpose.msra.mxu0 0
        %1634 = vmatprep.subr.bf16.mxu0 0
        %1635 = vmatpush1.bf16.xpose.msra.mxu0 0
        %1636 = vmatprep.subr.bf16.mxu0 0
        %1637 = vmatpush1.bf16.xpose.msra.mxu0 0
        %1638 = vmatprep.subr.bf16.mxu0 0
        %1639 = vmatpush1.bf16.xpose.msra.mxu0 0
        %1640 = vmatprep.subr.bf16.mxu0 0
        %1641 = vmatpush1.bf16.xpose.msra.mxu0 0
        %1642 = vmatprep.subr.bf16.mxu0 0
        %1643 = vmatpush1.bf16.xpose.msra.mxu0 0
        %1644 = vmatprep.subr.bf16.mxu0 0
        %1645 = vmatpush1.bf16.xpose.msra.mxu0 0
        %1646 = vmatprep.subr.bf16.mxu0 0
        %1647 = vmatpush1.bf16.xpose.msra.mxu0 0
        %1648 = vmatprep.subr.bf16.mxu0 0
        %1649 = vmatpush1.bf16.xpose.msra.mxu0 0
        %1650 = vmatprep.subr.bf16.mxu0 0
        %1651 = vmatpush1.bf16.xpose.msra.mxu0 0
        %1652 = vmatprep.subr.bf16.mxu0 0
        %1653 = vmatpush1.bf16.xpose.msra.mxu0 0
        %1654 = vmatprep.mubr.bf16.mxu0 0
        %1655 = vmatmul.mubr.bf16.gmra.mrb[0].mxu0 %v1617
        %v1656 = vpop.f32.mrb[0].mxu0
        %v1657 = vadd.f32 0.0, %v1656
        %v1658 = vpop.f32.mrb[0].mxu0
        %v1659 = vpop.f32.mrb[0].mxu0
        %v1660 = vpop.f32.mrb[0].mxu0
        %1661 = vdwg.mxu0
        %v1663 = vsel %vm1293, %v1133, 0
        %v1666 = vsel %vm1293, %v1237, 0
        %1668 = vmatprep.subr.bf16.mxu0 0
        %1669 = vmatpush1.bf16.xpose.msra.mxu0 %v1666
        %1670 = vmatprep.subr.bf16.mxu0 0
        %1671 = vmatpush1.bf16.xpose.msra.mxu0 0
        %1672 = vmatprep.subr.bf16.mxu0 0
        %1673 = vmatpush1.bf16.xpose.msra.mxu0 0
        %1674 = vmatprep.subr.bf16.mxu0 0
        %1675 = vmatpush1.bf16.xpose.msra.mxu0 0
        %1676 = vmatprep.subr.bf16.mxu0 0
        %1677 = vmatpush1.bf16.xpose.msra.mxu0 0
        %1678 = vmatprep.subr.bf16.mxu0 0
        %1679 = vmatpush1.bf16.xpose.msra.mxu0 0
        %1680 = vmatprep.subr.bf16.mxu0 0
        %1681 = vmatpush1.bf16.xpose.msra.mxu0 0
        %1682 = vmatprep.subr.bf16.mxu0 0
        %1683 = vmatpush1.bf16.xpose.msra.mxu0 0
        %1684 = vmatprep.subr.bf16.mxu0 0
        %1685 = vmatpush1.bf16.xpose.msra.mxu0 0
        %1686 = vmatprep.subr.bf16.mxu0 0
        %1687 = vmatpush1.bf16.xpose.msra.mxu0 0
        %1688 = vmatprep.subr.bf16.mxu0 0
        %1689 = vmatpush1.bf16.xpose.msra.mxu0 0
        %1690 = vmatprep.subr.bf16.mxu0 0
        %1691 = vmatpush1.bf16.xpose.msra.mxu0 0
        %1692 = vmatprep.subr.bf16.mxu0 0
        %1693 = vmatpush1.bf16.xpose.msra.mxu0 0
        %1694 = vmatprep.subr.bf16.mxu0 0
        %1695 = vmatpush1.bf16.xpose.msra.mxu0 0
        %1696 = vmatprep.subr.bf16.mxu0 0
        %1697 = vmatpush1.bf16.xpose.msra.mxu0 0
        %1698 = vmatprep.subr.bf16.mxu0 0
        %1699 = vmatpush1.bf16.xpose.msra.mxu0 0
        %1700 = vmatprep.mubr.bf16.mxu0 0
        %1701 = vmatmul.mubr.bf16.gmra.mrb[0].mxu0 %v1663
        %v1702 = vpop.f32.mrb[0].mxu0
        %v1703 = vadd.f32 0.0, %v1702
        %v1704 = vpop.f32.mrb[0].mxu0
        %v1705 = vpop.f32.mrb[0].mxu0
        %v1706 = vpop.f32.mrb[0].mxu0
        %1707 = vdwg.mxu0
        %v1709 = vsel %vm1293, %v1134, 0
        %v1712 = vsel %vm1293, %v1238, 0
        %1714 = vmatprep.subr.bf16.mxu0 0
        %1715 = vmatpush1.bf16.xpose.msra.mxu0 %v1712
        %1716 = vmatprep.subr.bf16.mxu0 0
        %1717 = vmatpush1.bf16.xpose.msra.mxu0 0
        %1718 = vmatprep.subr.bf16.mxu0 0
        %1719 = vmatpush1.bf16.xpose.msra.mxu0 0
        %1720 = vmatprep.subr.bf16.mxu0 0
        %1721 = vmatpush1.bf16.xpose.msra.mxu0 0
        %1722 = vmatprep.subr.bf16.mxu0 0
        %1723 = vmatpush1.bf16.xpose.msra.mxu0 0
        %1724 = vmatprep.subr.bf16.mxu0 0
        %1725 = vmatpush1.bf16.xpose.msra.mxu0 0
        %1726 = vmatprep.subr.bf16.mxu0 0
        %1727 = vmatpush1.bf16.xpose.msra.mxu0 0
        %1728 = vmatprep.subr.bf16.mxu0 0
        %1729 = vmatpush1.bf16.xpose.msra.mxu0 0
        %1730 = vmatprep.subr.bf16.mxu0 0
        %1731 = vmatpush1.bf16.xpose.msra.mxu0 0
        %1732 = vmatprep.subr.bf16.mxu0 0
        %1733 = vmatpush1.bf16.xpose.msra.mxu0 0
        %1734 = vmatprep.subr.bf16.mxu0 0
        %1735 = vmatpush1.bf16.xpose.msra.mxu0 0
        %1736 = vmatprep.subr.bf16.mxu0 0
        %1737 = vmatpush1.bf16.xpose.msra.mxu0 0
        %1738 = vmatprep.subr.bf16.mxu0 0
        %1739 = vmatpush1.bf16.xpose.msra.mxu0 0
        %1740 = vmatprep.subr.bf16.mxu0 0
        %1741 = vmatpush1.bf16.xpose.msra.mxu0 0
        %1742 = vmatprep.subr.bf16.mxu0 0
        %1743 = vmatpush1.bf16.xpose.msra.mxu0 0
        %1744 = vmatprep.subr.bf16.mxu0 0
        %1745 = vmatpush1.bf16.xpose.msra.mxu0 0
        %1746 = vmatprep.mubr.bf16.mxu0 0
        %1747 = vmatmul.mubr.bf16.gmra.mrb[0].mxu0 %v1709
        %v1748 = vpop.f32.mrb[0].mxu0
        %v1749 = vadd.f32 0.0, %v1748
        %v1750 = vpop.f32.mrb[0].mxu0
        %v1751 = vpop.f32.mrb[0].mxu0
        %v1752 = vpop.f32.mrb[0].mxu0
        %1753 = vdwg.mxu0
        %v1755 = vsel %vm1293, %v1135, 0
        %v1758 = vsel %vm1293, %v1239, 0
        %1760 = vmatprep.subr.bf16.mxu0 0
        %1761 = vmatpush1.bf16.xpose.msra.mxu0 %v1758
        %1762 = vmatprep.subr.bf16.mxu0 0
        %1763 = vmatpush1.bf16.xpose.msra.mxu0 0
        %1764 = vmatprep.subr.bf16.mxu0 0
        %1765 = vmatpush1.bf16.xpose.msra.mxu0 0
        %1766 = vmatprep.subr.bf16.mxu0 0
        %1767 = vmatpush1.bf16.xpose.msra.mxu0 0
        %1768 = vmatprep.subr.bf16.mxu0 0
        %1769 = vmatpush1.bf16.xpose.msra.mxu0 0
        %1770 = vmatprep.subr.bf16.mxu0 0
        %1771 = vmatpush1.bf16.xpose.msra.mxu0 0
        %1772 = vmatprep.subr.bf16.mxu0 0
        %1773 = vmatpush1.bf16.xpose.msra.mxu0 0
        %1774 = vmatprep.subr.bf16.mxu0 0
        %1775 = vmatpush1.bf16.xpose.msra.mxu0 0
        %1776 = vmatprep.subr.bf16.mxu0 0
        %1777 = vmatpush1.bf16.xpose.msra.mxu0 0
        %1778 = vmatprep.subr.bf16.mxu0 0
        %1779 = vmatpush1.bf16.xpose.msra.mxu0 0
        %1780 = vmatprep.subr.bf16.mxu0 0
        %1781 = vmatpush1.bf16.xpose.msra.mxu0 0
        %1782 = vmatprep.subr.bf16.mxu0 0
        %1783 = vmatpush1.bf16.xpose.msra.mxu0 0
        %1784 = vmatprep.subr.bf16.mxu0 0
        %1785 = vmatpush1.bf16.xpose.msra.mxu0 0
        %1786 = vmatprep.subr.bf16.mxu0 0
        %1787 = vmatpush1.bf16.xpose.msra.mxu0 0
        %1788 = vmatprep.subr.bf16.mxu0 0
        %1789 = vmatpush1.bf16.xpose.msra.mxu0 0
        %1790 = vmatprep.subr.bf16.mxu0 0
        %1791 = vmatpush1.bf16.xpose.msra.mxu0 0
        %1792 = vmatprep.mubr.bf16.mxu0 0
        %1793 = vmatmul.mubr.bf16.gmra.mrb[0].mxu0 %v1755
        %v1794 = vpop.f32.mrb[0].mxu0
        %v1795 = vadd.f32 0.0, %v1794
        %v1796 = vpop.f32.mrb[0].mxu0
        %v1797 = vpop.f32.mrb[0].mxu0
        %v1798 = vpop.f32.mrb[0].mxu0
        %1799 = vdwg.mxu0
        %v1801 = vsel %vm1293, %v1136, 0
        %v1804 = vsel %vm1293, %v1240, 0
        %1806 = vmatprep.subr.bf16.mxu0 0
        %1807 = vmatpush1.bf16.xpose.msra.mxu0 %v1804
        %1808 = vmatprep.subr.bf16.mxu0 0
        %1809 = vmatpush1.bf16.xpose.msra.mxu0 0
        %1810 = vmatprep.subr.bf16.mxu0 0
        %1811 = vmatpush1.bf16.xpose.msra.mxu0 0
        %1812 = vmatprep.subr.bf16.mxu0 0
        %1813 = vmatpush1.bf16.xpose.msra.mxu0 0
        %1814 = vmatprep.subr.bf16.mxu0 0
        %1815 = vmatpush1.bf16.xpose.msra.mxu0 0
        %1816 = vmatprep.subr.bf16.mxu0 0
        %1817 = vmatpush1.bf16.xpose.msra.mxu0 0
        %1818 = vmatprep.subr.bf16.mxu0 0
        %1819 = vmatpush1.bf16.xpose.msra.mxu0 0
        %1820 = vmatprep.subr.bf16.mxu0 0
        %1821 = vmatpush1.bf16.xpose.msra.mxu0 0
        %1822 = vmatprep.subr.bf16.mxu0 0
        %1823 = vmatpush1.bf16.xpose.msra.mxu0 0
        %1824 = vmatprep.subr.bf16.mxu0 0
        %1825 = vmatpush1.bf16.xpose.msra.mxu0 0
        %1826 = vmatprep.subr.bf16.mxu0 0
        %1827 = vmatpush1.bf16.xpose.msra.mxu0 0
        %1828 = vmatprep.subr.bf16.mxu0 0
        %1829 = vmatpush1.bf16.xpose.msra.mxu0 0
        %1830 = vmatprep.subr.bf16.mxu0 0
        %1831 = vmatpush1.bf16.xpose.msra.mxu0 0
        %1832 = vmatprep.subr.bf16.mxu0 0
        %1833 = vmatpush1.bf16.xpose.msra.mxu0 0
        %1834 = vmatprep.subr.bf16.mxu0 0
        %1835 = vmatpush1.bf16.xpose.msra.mxu0 0
        %1836 = vmatprep.subr.bf16.mxu0 0
        %1837 = vmatpush1.bf16.xpose.msra.mxu0 0
        %1838 = vmatprep.mubr.bf16.mxu0 0
        %1839 = vmatmul.mubr.bf16.gmra.mrb[0].mxu0 %v1801
        %v1840 = vpop.f32.mrb[0].mxu0
        %v1841 = vadd.f32 0.0, %v1840
        %v1842 = vpop.f32.mrb[0].mxu0
        %v1843 = vpop.f32.mrb[0].mxu0
        %v1844 = vpop.f32.mrb[0].mxu0
        %1845 = vdwg.mxu0
        %v1847 = vsel %vm1293, %v1137, 0
        %v1850 = vsel %vm1293, %v1241, 0
        %1852 = vmatprep.subr.bf16.mxu0 0
        %1853 = vmatpush1.bf16.xpose.msra.mxu0 %v1850
        %1854 = vmatprep.subr.bf16.mxu0 0
        %1855 = vmatpush1.bf16.xpose.msra.mxu0 0
        %1856 = vmatprep.subr.bf16.mxu0 0
        %1857 = vmatpush1.bf16.xpose.msra.mxu0 0
        %1858 = vmatprep.subr.bf16.mxu0 0
        %1859 = vmatpush1.bf16.xpose.msra.mxu0 0
        %1860 = vmatprep.subr.bf16.mxu0 0
        %1861 = vmatpush1.bf16.xpose.msra.mxu0 0
        %1862 = vmatprep.subr.bf16.mxu0 0
        %1863 = vmatpush1.bf16.xpose.msra.mxu0 0
        %1864 = vmatprep.subr.bf16.mxu0 0
        %1865 = vmatpush1.bf16.xpose.msra.mxu0 0
        %1866 = vmatprep.subr.bf16.mxu0 0
        %1867 = vmatpush1.bf16.xpose.msra.mxu0 0
        %1868 = vmatprep.subr.bf16.mxu0 0
        %1869 = vmatpush1.bf16.xpose.msra.mxu0 0
        %1870 = vmatprep.subr.bf16.mxu0 0
        %1871 = vmatpush1.bf16.xpose.msra.mxu0 0
        %1872 = vmatprep.subr.bf16.mxu0 0
        %1873 = vmatpush1.bf16.xpose.msra.mxu0 0
        %1874 = vmatprep.subr.bf16.mxu0 0
        %1875 = vmatpush1.bf16.xpose.msra.mxu0 0
        %1876 = vmatprep.subr.bf16.mxu0 0
        %1877 = vmatpush1.bf16.xpose.msra.mxu0 0
        %1878 = vmatprep.subr.bf16.mxu0 0
        %1879 = vmatpush1.bf16.xpose.msra.mxu0 0
        %1880 = vmatprep.subr.bf16.mxu0 0
        %1881 = vmatpush1.bf16.xpose.msra.mxu0 0
        %1882 = vmatprep.subr.bf16.mxu0 0
        %1883 = vmatpush1.bf16.xpose.msra.mxu0 0
        %1884 = vmatprep.mubr.bf16.mxu0 0
        %1885 = vmatmul.mubr.bf16.gmra.mrb[0].mxu0 %v1847
        %v1886 = vpop.f32.mrb[0].mxu0
        %v1887 = vadd.f32 0.0, %v1886
        %v1888 = vpop.f32.mrb[0].mxu0
        %v1889 = vpop.f32.mrb[0].mxu0
        %v1890 = vpop.f32.mrb[0].mxu0
        %1891 = vdwg.mxu0
        %v1893 = vsel %vm1293, %v1138, 0
        %v1896 = vsel %vm1293, %v1242, 0
        %1898 = vmatprep.subr.bf16.mxu0 0
        %1899 = vmatpush1.bf16.xpose.msra.mxu0 %v1896
        %1900 = vmatprep.subr.bf16.mxu0 0
        %1901 = vmatpush1.bf16.xpose.msra.mxu0 0
        %1902 = vmatprep.subr.bf16.mxu0 0
        %1903 = vmatpush1.bf16.xpose.msra.mxu0 0
        %1904 = vmatprep.subr.bf16.mxu0 0
        %1905 = vmatpush1.bf16.xpose.msra.mxu0 0
        %1906 = vmatprep.subr.bf16.mxu0 0
        %1907 = vmatpush1.bf16.xpose.msra.mxu0 0
        %1908 = vmatprep.subr.bf16.mxu0 0
        %1909 = vmatpush1.bf16.xpose.msra.mxu0 0
        %1910 = vmatprep.subr.bf16.mxu0 0
        %1911 = vmatpush1.bf16.xpose.msra.mxu0 0
        %1912 = vmatprep.subr.bf16.mxu0 0
        %1913 = vmatpush1.bf16.xpose.msra.mxu0 0
        %1914 = vmatprep.subr.bf16.mxu0 0
        %1915 = vmatpush1.bf16.xpose.msra.mxu0 0
        %1916 = vmatprep.subr.bf16.mxu0 0
        %1917 = vmatpush1.bf16.xpose.msra.mxu0 0
        %1918 = vmatprep.subr.bf16.mxu0 0
        %1919 = vmatpush1.bf16.xpose.msra.mxu0 0
        %1920 = vmatprep.subr.bf16.mxu0 0
        %1921 = vmatpush1.bf16.xpose.msra.mxu0 0
        %1922 = vmatprep.subr.bf16.mxu0 0
        %1923 = vmatpush1.bf16.xpose.msra.mxu0 0
        %1924 = vmatprep.subr.bf16.mxu0 0
        %1925 = vmatpush1.bf16.xpose.msra.mxu0 0
        %1926 = vmatprep.subr.bf16.mxu0 0
        %1927 = vmatpush1.bf16.xpose.msra.mxu0 0
        %1928 = vmatprep.subr.bf16.mxu0 0
        %1929 = vmatpush1.bf16.xpose.msra.mxu0 0
        %1930 = vmatprep.mubr.bf16.mxu0 0
        %1931 = vmatmul.mubr.bf16.gmra.mrb[0].mxu0 %v1893
        %v1932 = vpop.f32.mrb[0].mxu0
        %v1933 = vadd.f32 0.0, %v1932
        %v1934 = vpop.f32.mrb[0].mxu0
        %v1935 = vpop.f32.mrb[0].mxu0
        %v1936 = vpop.f32.mrb[0].mxu0
        %1937 = vdwg.mxu0
        %v1939 = vsel %vm1293, %v1139, 0
        %v1942 = vsel %vm1293, %v1243, 0
        %1944 = vmatprep.subr.bf16.mxu0 0
        %1945 = vmatpush1.bf16.xpose.msra.mxu0 %v1942
        %1946 = vmatprep.subr.bf16.mxu0 0
        %1947 = vmatpush1.bf16.xpose.msra.mxu0 0
        %1948 = vmatprep.subr.bf16.mxu0 0
        %1949 = vmatpush1.bf16.xpose.msra.mxu0 0
        %1950 = vmatprep.subr.bf16.mxu0 0
        %1951 = vmatpush1.bf16.xpose.msra.mxu0 0
        %1952 = vmatprep.subr.bf16.mxu0 0
        %1953 = vmatpush1.bf16.xpose.msra.mxu0 0
        %1954 = vmatprep.subr.bf16.mxu0 0
        %1955 = vmatpush1.bf16.xpose.msra.mxu0 0
        %1956 = vmatprep.subr.bf16.mxu0 0
        %1957 = vmatpush1.bf16.xpose.msra.mxu0 0
        %1958 = vmatprep.subr.bf16.mxu0 0
        %1959 = vmatpush1.bf16.xpose.msra.mxu0 0
        %1960 = vmatprep.subr.bf16.mxu0 0
        %1961 = vmatpush1.bf16.xpose.msra.mxu0 0
        %1962 = vmatprep.subr.bf16.mxu0 0
        %1963 = vmatpush1.bf16.xpose.msra.mxu0 0
        %1964 = vmatprep.subr.bf16.mxu0 0
        %1965 = vmatpush1.bf16.xpose.msra.mxu0 0
        %1966 = vmatprep.subr.bf16.mxu0 0
        %1967 = vmatpush1.bf16.xpose.msra.mxu0 0
        %1968 = vmatprep.subr.bf16.mxu0 0
        %1969 = vmatpush1.bf16.xpose.msra.mxu0 0
        %1970 = vmatprep.subr.bf16.mxu0 0
        %1971 = vmatpush1.bf16.xpose.msra.mxu0 0
        %1972 = vmatprep.subr.bf16.mxu0 0
        %1973 = vmatpush1.bf16.xpose.msra.mxu0 0
        %1974 = vmatprep.subr.bf16.mxu0 0
        %1975 = vmatpush1.bf16.xpose.msra.mxu0 0
        %1976 = vmatprep.mubr.bf16.mxu0 0
        %1977 = vmatmul.mubr.bf16.gmra.mrb[0].mxu0 %v1939
        %v1978 = vpop.f32.mrb[0].mxu0
        %v1979 = vadd.f32 0.0, %v1978
        %v1980 = vpop.f32.mrb[0].mxu0
        %v1981 = vpop.f32.mrb[0].mxu0
        %v1982 = vpop.f32.mrb[0].mxu0
        %1983 = vdwg.mxu0
        %v1985 = vsel %vm1293, %v1140, 0
        %v1988 = vsel %vm1293, %v1244, 0
        %1990 = vmatprep.subr.bf16.mxu0 0
        %1991 = vmatpush1.bf16.xpose.msra.mxu0 %v1988
        %1992 = vmatprep.subr.bf16.mxu0 0
        %1993 = vmatpush1.bf16.xpose.msra.mxu0 0
        %1994 = vmatprep.subr.bf16.mxu0 0
        %1995 = vmatpush1.bf16.xpose.msra.mxu0 0
        %1996 = vmatprep.subr.bf16.mxu0 0
        %1997 = vmatpush1.bf16.xpose.msra.mxu0 0
        %1998 = vmatprep.subr.bf16.mxu0 0
        %1999 = vmatpush1.bf16.xpose.msra.mxu0 0
        %2000 = vmatprep.subr.bf16.mxu0 0
        %2001 = vmatpush1.bf16.xpose.msra.mxu0 0
        %2002 = vmatprep.subr.bf16.mxu0 0
        %2003 = vmatpush1.bf16.xpose.msra.mxu0 0
        %2004 = vmatprep.subr.bf16.mxu0 0
        %2005 = vmatpush1.bf16.xpose.msra.mxu0 0
        %2006 = vmatprep.subr.bf16.mxu0 0
        %2007 = vmatpush1.bf16.xpose.msra.mxu0 0
        %2008 = vmatprep.subr.bf16.mxu0 0
        %2009 = vmatpush1.bf16.xpose.msra.mxu0 0
        %2010 = vmatprep.subr.bf16.mxu0 0
        %2011 = vmatpush1.bf16.xpose.msra.mxu0 0
        %2012 = vmatprep.subr.bf16.mxu0 0
        %2013 = vmatpush1.bf16.xpose.msra.mxu0 0
        %2014 = vmatprep.subr.bf16.mxu0 0
        %2015 = vmatpush1.bf16.xpose.msra.mxu0 0
        %2016 = vmatprep.subr.bf16.mxu0 0
        %2017 = vmatpush1.bf16.xpose.msra.mxu0 0
        %2018 = vmatprep.subr.bf16.mxu0 0
        %2019 = vmatpush1.bf16.xpose.msra.mxu0 0
        %2020 = vmatprep.subr.bf16.mxu0 0
        %2021 = vmatpush1.bf16.xpose.msra.mxu0 0
        %2022 = vmatprep.mubr.bf16.mxu0 0
        %2023 = vmatmul.mubr.bf16.gmra.mrb[0].mxu0 %v1985
        %v2024 = vpop.f32.mrb[0].mxu0
        %v2025 = vadd.f32 0.0, %v2024
        %v2026 = vpop.f32.mrb[0].mxu0
        %v2027 = vpop.f32.mrb[0].mxu0
        %v2028 = vpop.f32.mrb[0].mxu0
        %2029 = vdwg.mxu0
        %v2030 = vsel %vm1293, %v1335, -inf
        %2031 = vmax.xlane.f32.xlu0 %v2030
        %v2032 = vpop.xlane.xlu0 %2031
        %v2033 = vsel %vm1293, %v1381, -inf
        %2034 = vmax.xlane.f32.xlu0 %v2033
        %v2035 = vpop.xlane.xlu0 %2034
        %v2036 = vsel %vm1293, %v1427, -inf
        %2037 = vmax.xlane.f32.xlu0 %v2036
        %v2038 = vpop.xlane.xlu0 %2037
        %v2039 = vsel %vm1293, %v1473, -inf
        %2040 = vmax.xlane.f32.xlu0 %v2039
        %v2041 = vpop.xlane.xlu0 %2040
        %v2042 = vsel %vm1293, %v1519, -inf
        %2043 = vmax.xlane.f32.xlu0 %v2042
        %v2044 = vpop.xlane.xlu0 %2043
        %v2045 = vsel %vm1293, %v1565, -inf
        %2046 = vmax.xlane.f32.xlu0 %v2045
        %v2047 = vpop.xlane.xlu0 %2046
        %v2048 = vsel %vm1293, %v1611, -inf
        %2049 = vmax.xlane.f32.xlu0 %v2048
        %v2050 = vpop.xlane.xlu0 %2049
        %v2051 = vsel %vm1293, %v1657, -inf
        %2052 = vmax.xlane.f32.xlu0 %v2051
        %v2053 = vpop.xlane.xlu0 %2052
        %v2054 = vsel %vm1293, %v1703, -inf
        %2055 = vmax.xlane.f32.xlu0 %v2054
        %v2056 = vpop.xlane.xlu0 %2055
        %v2057 = vsel %vm1293, %v1749, -inf
        %2058 = vmax.xlane.f32.xlu0 %v2057
        %v2059 = vpop.xlane.xlu0 %2058
        %v2060 = vsel %vm1293, %v1795, -inf
        %2061 = vmax.xlane.f32.xlu0 %v2060
        %v2062 = vpop.xlane.xlu0 %2061
        %v2063 = vsel %vm1293, %v1841, -inf
        %2064 = vmax.xlane.f32.xlu0 %v2063
        %v2065 = vpop.xlane.xlu0 %2064
        %v2066 = vsel %vm1293, %v1887, -inf
        %2067 = vmax.xlane.f32.xlu0 %v2066
        %v2068 = vpop.xlane.xlu0 %2067
        %v2069 = vsel %vm1293, %v1933, -inf
        %2070 = vmax.xlane.f32.xlu0 %v2069
        %v2071 = vpop.xlane.xlu0 %2070
        %v2072 = vsel %vm1293, %v1979, -inf
        %2073 = vmax.xlane.f32.xlu0 %v2072
        %v2074 = vpop.xlane.xlu0 %2073
        %v2075 = vsel %vm1293, %v2025, -inf
        %2076 = vmax.xlane.f32.xlu0 %v2075
        %v2077 = vpop.xlane.xlu0 %2076
        %v2078 = vsub.f32 %v1335, %v2032
        %v2079 = vsub.f32 %v1381, %v2035
        %v2080 = vsub.f32 %v1427, %v2038
        %v2081 = vsub.f32 %v1473, %v2041
        %v2082 = vsub.f32 %v1519, %v2044
        %v2083 = vsub.f32 %v1565, %v2047
        %v2084 = vsub.f32 %v1611, %v2050
        %v2085 = vsub.f32 %v1657, %v2053
        %v2086 = vsub.f32 %v1703, %v2056
        %v2087 = vsub.f32 %v1749, %v2059
        %v2088 = vsub.f32 %v1795, %v2062
        %v2089 = vsub.f32 %v1841, %v2065
        %v2090 = vsub.f32 %v1887, %v2068
        %v2091 = vsub.f32 %v1933, %v2071
        %v2092 = vsub.f32 %v1979, %v2074
        %v2093 = vsub.f32 %v2025, %v2077
        %v2094 = vmul.f32 %v2078, 1.442695
        %v2095 = vpow.pop %v2094
        %v2096 = vmul.f32 %v2079, 1.442695
        %v2097 = vpow.pop %v2096
        %v2098 = vmul.f32 %v2080, 1.442695
        %v2099 = vpow.pop %v2098
        %v2100 = vmul.f32 %v2081, 1.442695
        %v2101 = vpow.pop %v2100
        %v2102 = vmul.f32 %v2082, 1.442695
        %v2103 = vpow.pop %v2102
        %v2104 = vmul.f32 %v2083, 1.442695
        %v2105 = vpow.pop %v2104
        %v2106 = vmul.f32 %v2084, 1.442695
        %v2107 = vpow.pop %v2106
        %v2108 = vmul.f32 %v2085, 1.442695
        %v2109 = vpow.pop %v2108
        %v2110 = vmul.f32 %v2086, 1.442695
        %v2111 = vpow.pop %v2110
        %v2112 = vmul.f32 %v2087, 1.442695
        %v2113 = vpow.pop %v2112
        %v2114 = vmul.f32 %v2088, 1.442695
        %v2115 = vpow.pop %v2114
        %v2116 = vmul.f32 %v2089, 1.442695
        %v2117 = vpow.pop %v2116
        %v2118 = vmul.f32 %v2090, 1.442695
        %v2119 = vpow.pop %v2118
        %v2120 = vmul.f32 %v2091, 1.442695
        %v2121 = vpow.pop %v2120
        %v2122 = vmul.f32 %v2092, 1.442695
        %v2123 = vpow.pop %v2122
        %v2124 = vmul.f32 %v2093, 1.442695
        %v2125 = vpow.pop %v2124
        %v2126 = vsel %vm1293, %v2095, 0.0
        %2127 = vadd.xlane.f32.xlu0 %v2126
        %v2128 = vpop.xlane.xlu0 %2127
        %v2129 = vsel %vm1293, %v2097, 0.0
        %2130 = vadd.xlane.f32.xlu0 %v2129
        %v2131 = vpop.xlane.xlu0 %2130
        %v2132 = vsel %vm1293, %v2099, 0.0
        %2133 = vadd.xlane.f32.xlu0 %v2132
        %v2134 = vpop.xlane.xlu0 %2133
        %v2135 = vsel %vm1293, %v2101, 0.0
        %2136 = vadd.xlane.f32.xlu0 %v2135
        %v2137 = vpop.xlane.xlu0 %2136
        %v2138 = vsel %vm1293, %v2103, 0.0
        %2139 = vadd.xlane.f32.xlu0 %v2138
        %v2140 = vpop.xlane.xlu0 %2139
        %v2141 = vsel %vm1293, %v2105, 0.0
        %2142 = vadd.xlane.f32.xlu0 %v2141
        %v2143 = vpop.xlane.xlu0 %2142
        %v2144 = vsel %vm1293, %v2107, 0.0
        %2145 = vadd.xlane.f32.xlu0 %v2144
        %v2146 = vpop.xlane.xlu0 %2145
        %v2147 = vsel %vm1293, %v2109, 0.0
        %2148 = vadd.xlane.f32.xlu0 %v2147
        %v2149 = vpop.xlane.xlu0 %2148
        %v2150 = vsel %vm1293, %v2111, 0.0
        %2151 = vadd.xlane.f32.xlu0 %v2150
        %v2152 = vpop.xlane.xlu0 %2151
        %v2153 = vsel %vm1293, %v2113, 0.0
        %2154 = vadd.xlane.f32.xlu0 %v2153
        %v2155 = vpop.xlane.xlu0 %2154
        %v2156 = vsel %vm1293, %v2115, 0.0
        %2157 = vadd.xlane.f32.xlu0 %v2156
        %v2158 = vpop.xlane.xlu0 %2157
        %v2159 = vsel %vm1293, %v2117, 0.0
        %2160 = vadd.xlane.f32.xlu0 %v2159
        %v2161 = vpop.xlane.xlu0 %2160
        %v2162 = vsel %vm1293, %v2119, 0.0
        %2163 = vadd.xlane.f32.xlu0 %v2162
        %v2164 = vpop.xlane.xlu0 %2163
        %v2165 = vsel %vm1293, %v2121, 0.0
        %2166 = vadd.xlane.f32.xlu0 %v2165
        %v2167 = vpop.xlane.xlu0 %2166
        %v2168 = vsel %vm1293, %v2123, 0.0
        %2169 = vadd.xlane.f32.xlu0 %v2168
        %v2170 = vpop.xlane.xlu0 %2169
        %v2171 = vsel %vm1293, %v2125, 0.0
        %2172 = vadd.xlane.f32.xlu0 %v2171
        %v2173 = vpop.xlane.xlu0 %2172
        %v2174 = vrcp.pop %v2128
        %v2175 = vrcp.pop %v2131
        %v2176 = vrcp.pop %v2134
        %v2177 = vrcp.pop %v2137
        %v2178 = vrcp.pop %v2140
        %v2179 = vrcp.pop %v2143
        %v2180 = vrcp.pop %v2146
        %v2181 = vrcp.pop %v2149
        %v2182 = vrcp.pop %v2152
        %v2183 = vrcp.pop %v2155
        %v2184 = vrcp.pop %v2158
        %v2185 = vrcp.pop %v2161
        %v2186 = vrcp.pop %v2164
        %v2187 = vrcp.pop %v2167
        %v2188 = vrcp.pop %v2170
        %v2189 = vrcp.pop %v2173
        %v2190 = vmul.f32 %v2095, %v2174
        %v2191 = vmul.f32 %v2097, %v2175
        %v2192 = vmul.f32 %v2099, %v2176
        %v2193 = vmul.f32 %v2101, %v2177
        %v2194 = vmul.f32 %v2103, %v2178
        %v2195 = vmul.f32 %v2105, %v2179
        %v2196 = vmul.f32 %v2107, %v2180
        %v2197 = vmul.f32 %v2109, %v2181
        %v2198 = vmul.f32 %v2111, %v2182
        %v2199 = vmul.f32 %v2113, %v2183
        %v2200 = vmul.f32 %v2115, %v2184
        %v2201 = vmul.f32 %v2117, %v2185
        %v2202 = vmul.f32 %v2119, %v2186
        %v2203 = vmul.f32 %v2121, %v2187
        %v2204 = vmul.f32 %v2123, %v2188
        %v2205 = vmul.f32 %v2125, %v2189
        %v2206 = vstv %s768
        %v2207 = vmul.f32 %v2206, %v2194
        %v2208 = vmul.f32 %v2206, %v2195
        %v2209 = vmul.f32 %v2206, %v2196
        %v2210 = vmul.f32 %v2206, %v2197
        %v2211 = vmul.f32 %v2206, %v2202
        %v2212 = vmul.f32 %v2206, %v2203
        %v2213 = vmul.f32 %v2206, %v2204
        %v2214 = vmul.f32 %v2206, %v2205
        %v2215 = vsub.f32 %v2190, %v2207
        %v2216 = vsub.f32 %v2191, %v2208
        %v2217 = vsub.f32 %v2192, %v2209
        %v2218 = vsub.f32 %v2193, %v2210
        %v2219 = vsub.f32 %v2198, %v2211
        %v2220 = vsub.f32 %v2199, %v2212
        %v2221 = vsub.f32 %v2200, %v2213
        %v2222 = vsub.f32 %v2201, %v2214
        %v2223 = vpack.c.bf16 %v2215, %v2215
        %v2224 = vpack.c.bf16 %v2216, %v2216
        %v2225 = vpack.c.bf16 %v2217, %v2217
        %v2226 = vpack.c.bf16 %v2218, %v2218
        %v2227 = vpack.c.bf16 %v2219, %v2219
        %v2228 = vpack.c.bf16 %v2220, %v2220
        %v2229 = vpack.c.bf16 %v2221, %v2221
        %v2230 = vpack.c.bf16 %v2222, %v2222
        %v2232 = vsel %vm1293, %v2223, 0
        %2234 = vmatprep.subr.bf16.mxu0 0
        %2235 = vmatpush1.bf16.msra.mxu0 %v1285
        %2236 = vmatprep.subr.bf16.mxu0 0
        %2237 = vmatpush1.bf16.msra.mxu0 0
        %2238 = vmatprep.subr.bf16.mxu0 0
        %2239 = vmatpush1.bf16.msra.mxu0 0
        %2240 = vmatprep.subr.bf16.mxu0 0
        %2241 = vmatpush1.bf16.msra.mxu0 0
        %2242 = vmatprep.subr.bf16.mxu0 0
        %2243 = vmatpush1.bf16.msra.mxu0 0
        %2244 = vmatprep.subr.bf16.mxu0 0
        %2245 = vmatpush1.bf16.msra.mxu0 0
        %2246 = vmatprep.subr.bf16.mxu0 0
        %2247 = vmatpush1.bf16.msra.mxu0 0
        %2248 = vmatprep.subr.bf16.mxu0 0
        %2249 = vmatpush1.bf16.msra.mxu0 0
        %2250 = vmatprep.subr.bf16.mxu0 0
        %2251 = vmatpush1.bf16.msra.mxu0 0
        %2252 = vmatprep.subr.bf16.mxu0 0
        %2253 = vmatpush1.bf16.msra.mxu0 0
        %2254 = vmatprep.subr.bf16.mxu0 0
        %2255 = vmatpush1.bf16.msra.mxu0 0
        %2256 = vmatprep.subr.bf16.mxu0 0
        %2257 = vmatpush1.bf16.msra.mxu0 0
        %2258 = vmatprep.subr.bf16.mxu0 0
        %2259 = vmatpush1.bf16.msra.mxu0 0
        %2260 = vmatprep.subr.bf16.mxu0 0
        %2261 = vmatpush1.bf16.msra.mxu0 0
        %2262 = vmatprep.subr.bf16.mxu0 0
        %2263 = vmatpush1.bf16.msra.mxu0 0
        %2264 = vmatprep.subr.bf16.mxu0 0
        %2265 = vmatpush1.bf16.msra.mxu0 0
        %2266 = vmatprep.mubr.bf16.mxu0 0
        %2267 = vmatmul.mubr.bf16.gmra.mrb[0].mxu0 %v2232
        %v2268 = vpop.f32.mrb[0].mxu0
        %v2269 = vadd.f32 0.0, %v2268
        %v2270 = vpop.f32.mrb[0].mxu0
        %v2271 = vpop.f32.mrb[0].mxu0
        %v2272 = vpop.f32.mrb[0].mxu0
        %2273 = vdwg.mxu0
        %v2275 = vsel %vm1293, %v2224, 0
        %2277 = vmatprep.subr.bf16.mxu0 0
        %2278 = vmatpush1.bf16.msra.mxu0 %v1286
        %2279 = vmatprep.subr.bf16.mxu0 0
        %2280 = vmatpush1.bf16.msra.mxu0 0
        %2281 = vmatprep.subr.bf16.mxu0 0
        %2282 = vmatpush1.bf16.msra.mxu0 0
        %2283 = vmatprep.subr.bf16.mxu0 0
        %2284 = vmatpush1.bf16.msra.mxu0 0
        %2285 = vmatprep.subr.bf16.mxu0 0
        %2286 = vmatpush1.bf16.msra.mxu0 0
        %2287 = vmatprep.subr.bf16.mxu0 0
        %2288 = vmatpush1.bf16.msra.mxu0 0
        %2289 = vmatprep.subr.bf16.mxu0 0
        %2290 = vmatpush1.bf16.msra.mxu0 0
        %2291 = vmatprep.subr.bf16.mxu0 0
        %2292 = vmatpush1.bf16.msra.mxu0 0
        %2293 = vmatprep.subr.bf16.mxu0 0
        %2294 = vmatpush1.bf16.msra.mxu0 0
        %2295 = vmatprep.subr.bf16.mxu0 0
        %2296 = vmatpush1.bf16.msra.mxu0 0
        %2297 = vmatprep.subr.bf16.mxu0 0
        %2298 = vmatpush1.bf16.msra.mxu0 0
        %2299 = vmatprep.subr.bf16.mxu0 0
        %2300 = vmatpush1.bf16.msra.mxu0 0
        %2301 = vmatprep.subr.bf16.mxu0 0
        %2302 = vmatpush1.bf16.msra.mxu0 0
        %2303 = vmatprep.subr.bf16.mxu0 0
        %2304 = vmatpush1.bf16.msra.mxu0 0
        %2305 = vmatprep.subr.bf16.mxu0 0
        %2306 = vmatpush1.bf16.msra.mxu0 0
        %2307 = vmatprep.subr.bf16.mxu0 0
        %2308 = vmatpush1.bf16.msra.mxu0 0
        %2309 = vmatprep.mubr.bf16.mxu0 0
        %2310 = vmatmul.mubr.bf16.gmra.mrb[0].mxu0 %v2275
        %v2311 = vpop.f32.mrb[0].mxu0
        %v2312 = vadd.f32 0.0, %v2311
        %v2313 = vpop.f32.mrb[0].mxu0
        %v2314 = vpop.f32.mrb[0].mxu0
        %v2315 = vpop.f32.mrb[0].mxu0
        %2316 = vdwg.mxu0
        %v2318 = vsel %vm1293, %v2225, 0
        %2320 = vmatprep.subr.bf16.mxu0 0
        %2321 = vmatpush1.bf16.msra.mxu0 %v1287
        %2322 = vmatprep.subr.bf16.mxu0 0
        %2323 = vmatpush1.bf16.msra.mxu0 0
        %2324 = vmatprep.subr.bf16.mxu0 0
        %2325 = vmatpush1.bf16.msra.mxu0 0
        %2326 = vmatprep.subr.bf16.mxu0 0
        %2327 = vmatpush1.bf16.msra.mxu0 0
        %2328 = vmatprep.subr.bf16.mxu0 0
        %2329 = vmatpush1.bf16.msra.mxu0 0
        %2330 = vmatprep.subr.bf16.mxu0 0
        %2331 = vmatpush1.bf16.msra.mxu0 0
        %2332 = vmatprep.subr.bf16.mxu0 0
        %2333 = vmatpush1.bf16.msra.mxu0 0
        %2334 = vmatprep.subr.bf16.mxu0 0
        %2335 = vmatpush1.bf16.msra.mxu0 0
        %2336 = vmatprep.subr.bf16.mxu0 0
        %2337 = vmatpush1.bf16.msra.mxu0 0
        %2338 = vmatprep.subr.bf16.mxu0 0
        %2339 = vmatpush1.bf16.msra.mxu0 0
        %2340 = vmatprep.subr.bf16.mxu0 0
        %2341 = vmatpush1.bf16.msra.mxu0 0
        %2342 = vmatprep.subr.bf16.mxu0 0
        %2343 = vmatpush1.bf16.msra.mxu0 0
        %2344 = vmatprep.subr.bf16.mxu0 0
        %2345 = vmatpush1.bf16.msra.mxu0 0
        %2346 = vmatprep.subr.bf16.mxu0 0
        %2347 = vmatpush1.bf16.msra.mxu0 0
        %2348 = vmatprep.subr.bf16.mxu0 0
        %2349 = vmatpush1.bf16.msra.mxu0 0
        %2350 = vmatprep.subr.bf16.mxu0 0
        %2351 = vmatpush1.bf16.msra.mxu0 0
        %2352 = vmatprep.mubr.bf16.mxu0 0
        %2353 = vmatmul.mubr.bf16.gmra.mrb[0].mxu0 %v2318
        %v2354 = vpop.f32.mrb[0].mxu0
        %v2355 = vadd.f32 0.0, %v2354
        %v2356 = vpop.f32.mrb[0].mxu0
        %v2357 = vpop.f32.mrb[0].mxu0
        %v2358 = vpop.f32.mrb[0].mxu0
        %2359 = vdwg.mxu0
        %v2361 = vsel %vm1293, %v2226, 0
        %2363 = vmatprep.subr.bf16.mxu0 0
        %2364 = vmatpush1.bf16.msra.mxu0 %v1288
        %2365 = vmatprep.subr.bf16.mxu0 0
        %2366 = vmatpush1.bf16.msra.mxu0 0
        %2367 = vmatprep.subr.bf16.mxu0 0
        %2368 = vmatpush1.bf16.msra.mxu0 0
        %2369 = vmatprep.subr.bf16.mxu0 0
        %2370 = vmatpush1.bf16.msra.mxu0 0
        %2371 = vmatprep.subr.bf16.mxu0 0
        %2372 = vmatpush1.bf16.msra.mxu0 0
        %2373 = vmatprep.subr.bf16.mxu0 0
        %2374 = vmatpush1.bf16.msra.mxu0 0
        %2375 = vmatprep.subr.bf16.mxu0 0
        %2376 = vmatpush1.bf16.msra.mxu0 0
        %2377 = vmatprep.subr.bf16.mxu0 0
        %2378 = vmatpush1.bf16.msra.mxu0 0
        %2379 = vmatprep.subr.bf16.mxu0 0
        %2380 = vmatpush1.bf16.msra.mxu0 0
        %2381 = vmatprep.subr.bf16.mxu0 0
        %2382 = vmatpush1.bf16.msra.mxu0 0
        %2383 = vmatprep.subr.bf16.mxu0 0
        %2384 = vmatpush1.bf16.msra.mxu0 0
        %2385 = vmatprep.subr.bf16.mxu0 0
        %2386 = vmatpush1.bf16.msra.mxu0 0
        %2387 = vmatprep.subr.bf16.mxu0 0
        %2388 = vmatpush1.bf16.msra.mxu0 0
        %2389 = vmatprep.subr.bf16.mxu0 0
        %2390 = vmatpush1.bf16.msra.mxu0 0
        %2391 = vmatprep.subr.bf16.mxu0 0
        %2392 = vmatpush1.bf16.msra.mxu0 0
        %2393 = vmatprep.subr.bf16.mxu0 0
        %2394 = vmatpush1.bf16.msra.mxu0 0
        %2395 = vmatprep.mubr.bf16.mxu0 0
        %2396 = vmatmul.mubr.bf16.gmra.mrb[0].mxu0 %v2361
        %v2397 = vpop.f32.mrb[0].mxu0
        %v2398 = vadd.f32 0.0, %v2397
        %v2399 = vpop.f32.mrb[0].mxu0
        %v2400 = vpop.f32.mrb[0].mxu0
        %v2401 = vpop.f32.mrb[0].mxu0
        %2402 = vdwg.mxu0
        %v2404 = vsel %vm1293, %v2227, 0
        %2406 = vmatprep.subr.bf16.mxu0 0
        %2407 = vmatpush1.bf16.msra.mxu0 %v1289
        %2408 = vmatprep.subr.bf16.mxu0 0
        %2409 = vmatpush1.bf16.msra.mxu0 0
        %2410 = vmatprep.subr.bf16.mxu0 0
        %2411 = vmatpush1.bf16.msra.mxu0 0
        %2412 = vmatprep.subr.bf16.mxu0 0
        %2413 = vmatpush1.bf16.msra.mxu0 0
        %2414 = vmatprep.subr.bf16.mxu0 0
        %2415 = vmatpush1.bf16.msra.mxu0 0
        %2416 = vmatprep.subr.bf16.mxu0 0
        %2417 = vmatpush1.bf16.msra.mxu0 0
        %2418 = vmatprep.subr.bf16.mxu0 0
        %2419 = vmatpush1.bf16.msra.mxu0 0
        %2420 = vmatprep.subr.bf16.mxu0 0
        %2421 = vmatpush1.bf16.msra.mxu0 0
        %2422 = vmatprep.subr.bf16.mxu0 0
        %2423 = vmatpush1.bf16.msra.mxu0 0
        %2424 = vmatprep.subr.bf16.mxu0 0
        %2425 = vmatpush1.bf16.msra.mxu0 0
        %2426 = vmatprep.subr.bf16.mxu0 0
        %2427 = vmatpush1.bf16.msra.mxu0 0
        %2428 = vmatprep.subr.bf16.mxu0 0
        %2429 = vmatpush1.bf16.msra.mxu0 0
        %2430 = vmatprep.subr.bf16.mxu0 0
        %2431 = vmatpush1.bf16.msra.mxu0 0
        %2432 = vmatprep.subr.bf16.mxu0 0
        %2433 = vmatpush1.bf16.msra.mxu0 0
        %2434 = vmatprep.subr.bf16.mxu0 0
        %2435 = vmatpush1.bf16.msra.mxu0 0
        %2436 = vmatprep.subr.bf16.mxu0 0
        %2437 = vmatpush1.bf16.msra.mxu0 0
        %2438 = vmatprep.mubr.bf16.mxu0 0
        %2439 = vmatmul.mubr.bf16.gmra.mrb[0].mxu0 %v2404
        %v2440 = vpop.f32.mrb[0].mxu0
        %v2441 = vadd.f32 0.0, %v2440
        %v2442 = vpop.f32.mrb[0].mxu0
        %v2443 = vpop.f32.mrb[0].mxu0
        %v2444 = vpop.f32.mrb[0].mxu0
        %2445 = vdwg.mxu0
        %v2447 = vsel %vm1293, %v2228, 0
        %2449 = vmatprep.subr.bf16.mxu0 0
        %2450 = vmatpush1.bf16.msra.mxu0 %v1290
        %2451 = vmatprep.subr.bf16.mxu0 0
        %2452 = vmatpush1.bf16.msra.mxu0 0
        %2453 = vmatprep.subr.bf16.mxu0 0
        %2454 = vmatpush1.bf16.msra.mxu0 0
        %2455 = vmatprep.subr.bf16.mxu0 0
        %2456 = vmatpush1.bf16.msra.mxu0 0
        %2457 = vmatprep.subr.bf16.mxu0 0
        %2458 = vmatpush1.bf16.msra.mxu0 0
        %2459 = vmatprep.subr.bf16.mxu0 0
        %2460 = vmatpush1.bf16.msra.mxu0 0
        %2461 = vmatprep.subr.bf16.mxu0 0
        %2462 = vmatpush1.bf16.msra.mxu0 0
        %2463 = vmatprep.subr.bf16.mxu0 0
        %2464 = vmatpush1.bf16.msra.mxu0 0
        %2465 = vmatprep.subr.bf16.mxu0 0
        %2466 = vmatpush1.bf16.msra.mxu0 0
        %2467 = vmatprep.subr.bf16.mxu0 0
        %2468 = vmatpush1.bf16.msra.mxu0 0
        %2469 = vmatprep.subr.bf16.mxu0 0
        %2470 = vmatpush1.bf16.msra.mxu0 0
        %2471 = vmatprep.subr.bf16.mxu0 0
        %2472 = vmatpush1.bf16.msra.mxu0 0
        %2473 = vmatprep.subr.bf16.mxu0 0
        %2474 = vmatpush1.bf16.msra.mxu0 0
        %2475 = vmatprep.subr.bf16.mxu0 0
        %2476 = vmatpush1.bf16.msra.mxu0 0
        %2477 = vmatprep.subr.bf16.mxu0 0
        %2478 = vmatpush1.bf16.msra.mxu0 0
        %2479 = vmatprep.subr.bf16.mxu0 0
        %2480 = vmatpush1.bf16.msra.mxu0 0
        %2481 = vmatprep.mubr.bf16.mxu0 0
        %2482 = vmatmul.mubr.bf16.gmra.mrb[0].mxu0 %v2447
        %v2483 = vpop.f32.mrb[0].mxu0
        %v2484 = vadd.f32 0.0, %v2483
        %v2485 = vpop.f32.mrb[0].mxu0
        %v2486 = vpop.f32.mrb[0].mxu0
        %v2487 = vpop.f32.mrb[0].mxu0
        %2488 = vdwg.mxu0
        %v2490 = vsel %vm1293, %v2229, 0
        %2492 = vmatprep.subr.bf16.mxu0 0
        %2493 = vmatpush1.bf16.msra.mxu0 %v1291
        %2494 = vmatprep.subr.bf16.mxu0 0
        %2495 = vmatpush1.bf16.msra.mxu0 0
        %2496 = vmatprep.subr.bf16.mxu0 0
        %2497 = vmatpush1.bf16.msra.mxu0 0
        %2498 = vmatprep.subr.bf16.mxu0 0
        %2499 = vmatpush1.bf16.msra.mxu0 0
        %2500 = vmatprep.subr.bf16.mxu0 0
        %2501 = vmatpush1.bf16.msra.mxu0 0
        %2502 = vmatprep.subr.bf16.mxu0 0
        %2503 = vmatpush1.bf16.msra.mxu0 0
        %2504 = vmatprep.subr.bf16.mxu0 0
        %2505 = vmatpush1.bf16.msra.mxu0 0
        %2506 = vmatprep.subr.bf16.mxu0 0
        %2507 = vmatpush1.bf16.msra.mxu0 0
        %2508 = vmatprep.subr.bf16.mxu0 0
        %2509 = vmatpush1.bf16.msra.mxu0 0
        %2510 = vmatprep.subr.bf16.mxu0 0
        %2511 = vmatpush1.bf16.msra.mxu0 0
        %2512 = vmatprep.subr.bf16.mxu0 0
        %2513 = vmatpush1.bf16.msra.mxu0 0
        %2514 = vmatprep.subr.bf16.mxu0 0
        %2515 = vmatpush1.bf16.msra.mxu0 0
        %2516 = vmatprep.subr.bf16.mxu0 0
        %2517 = vmatpush1.bf16.msra.mxu0 0
        %2518 = vmatprep.subr.bf16.mxu0 0
        %2519 = vmatpush1.bf16.msra.mxu0 0
        %2520 = vmatprep.subr.bf16.mxu0 0
        %2521 = vmatpush1.bf16.msra.mxu0 0
        %2522 = vmatprep.subr.bf16.mxu0 0
        %2523 = vmatpush1.bf16.msra.mxu0 0
        %2524 = vmatprep.mubr.bf16.mxu0 0
        %2525 = vmatmul.mubr.bf16.gmra.mrb[0].mxu0 %v2490
        %v2526 = vpop.f32.mrb[0].mxu0
        %v2527 = vadd.f32 0.0, %v2526
        %v2528 = vpop.f32.mrb[0].mxu0
        %v2529 = vpop.f32.mrb[0].mxu0
        %v2530 = vpop.f32.mrb[0].mxu0
        %2531 = vdwg.mxu0
        %v2533 = vsel %vm1293, %v2230, 0
        %2535 = vmatprep.subr.bf16.mxu0 0
        %2536 = vmatpush1.bf16.msra.mxu0 %v1292
        %2537 = vmatprep.subr.bf16.mxu0 0
        %2538 = vmatpush1.bf16.msra.mxu0 0
        %2539 = vmatprep.subr.bf16.mxu0 0
        %2540 = vmatpush1.bf16.msra.mxu0 0
        %2541 = vmatprep.subr.bf16.mxu0 0
        %2542 = vmatpush1.bf16.msra.mxu0 0
        %2543 = vmatprep.subr.bf16.mxu0 0
        %2544 = vmatpush1.bf16.msra.mxu0 0
        %2545 = vmatprep.subr.bf16.mxu0 0
        %2546 = vmatpush1.bf16.msra.mxu0 0
        %2547 = vmatprep.subr.bf16.mxu0 0
        %2548 = vmatpush1.bf16.msra.mxu0 0
        %2549 = vmatprep.subr.bf16.mxu0 0
        %2550 = vmatpush1.bf16.msra.mxu0 0
        %2551 = vmatprep.subr.bf16.mxu0 0
        %2552 = vmatpush1.bf16.msra.mxu0 0
        %2553 = vmatprep.subr.bf16.mxu0 0
        %2554 = vmatpush1.bf16.msra.mxu0 0
        %2555 = vmatprep.subr.bf16.mxu0 0
        %2556 = vmatpush1.bf16.msra.mxu0 0
        %2557 = vmatprep.subr.bf16.mxu0 0
        %2558 = vmatpush1.bf16.msra.mxu0 0
        %2559 = vmatprep.subr.bf16.mxu0 0
        %2560 = vmatpush1.bf16.msra.mxu0 0
        %2561 = vmatprep.subr.bf16.mxu0 0
        %2562 = vmatpush1.bf16.msra.mxu0 0
        %2563 = vmatprep.subr.bf16.mxu0 0
        %2564 = vmatpush1.bf16.msra.mxu0 0
        %2565 = vmatprep.subr.bf16.mxu0 0
        %2566 = vmatpush1.bf16.msra.mxu0 0
        %2567 = vmatprep.mubr.bf16.mxu0 0
        %2568 = vmatmul.mubr.bf16.gmra.mrb[0].mxu0 %v2533
        %v2569 = vpop.f32.mrb[0].mxu0
        %v2570 = vadd.f32 0.0, %v2569
        %v2571 = vpop.f32.mrb[0].mxu0
        %v2572 = vpop.f32.mrb[0].mxu0
        %v2573 = vpop.f32.mrb[0].mxu0
        %2574 = vdwg.mxu0
        %v2575 = vmul.f32 %v2269, %v2269
        %v2576 = vmul.f32 %v2312, %v2312
        %v2577 = vmul.f32 %v2355, %v2355
        %v2578 = vmul.f32 %v2398, %v2398
        %v2579 = vmul.f32 %v2441, %v2441
        %v2580 = vmul.f32 %v2484, %v2484
        %v2581 = vmul.f32 %v2527, %v2527
        %v2582 = vmul.f32 %v2570, %v2570
        %vm2583 = vcmask 261120
        %v2584 = vsel %vm2583, %v2575, 0.0
        %2585 = vadd.xlane.f32.xlu0 %v2584
        %v2586 = vpop.xlane.xlu0 %2585
        %v2587 = vsel %vm2583, %v2576, 0.0
        %2588 = vadd.xlane.f32.xlu0 %v2587
        %v2589 = vpop.xlane.xlu0 %2588
        %v2590 = vsel %vm2583, %v2577, 0.0
        %2591 = vadd.xlane.f32.xlu0 %v2590
        %v2592 = vpop.xlane.xlu0 %2591
        %v2593 = vsel %vm2583, %v2578, 0.0
        %2594 = vadd.xlane.f32.xlu0 %v2593
        %v2595 = vpop.xlane.xlu0 %2594
        %v2596 = vsel %vm2583, %v2579, 0.0
        %2597 = vadd.xlane.f32.xlu0 %v2596
        %v2598 = vpop.xlane.xlu0 %2597
        %v2599 = vsel %vm2583, %v2580, 0.0
        %2600 = vadd.xlane.f32.xlu0 %v2599
        %v2601 = vpop.xlane.xlu0 %2600
        %v2602 = vsel %vm2583, %v2581, 0.0
        %2603 = vadd.xlane.f32.xlu0 %v2602
        %v2604 = vpop.xlane.xlu0 %2603
        %v2605 = vsel %vm2583, %v2582, 0.0
        %2606 = vadd.xlane.f32.xlu0 %v2605
        %v2607 = vpop.xlane.xlu0 %2606
        %v2608 = vrcp.pop 32.0
        %v2609 = vmul.f32 %v2586, %v2608
        %v2610 = vmul.f32 %v2589, %v2608
        %v2611 = vmul.f32 %v2592, %v2608
        %v2612 = vmul.f32 %v2595, %v2608
        %v2613 = vmul.f32 %v2598, %v2608
        %v2614 = vmul.f32 %v2601, %v2608
        %v2615 = vmul.f32 %v2604, %v2608
        %v2616 = vmul.f32 %v2607, %v2608
        %v2617 = vadd.f32 %v2609, 1e-05
        %v2618 = vadd.f32 %v2610, 1e-05
        %v2619 = vadd.f32 %v2611, 1e-05
        %v2620 = vadd.f32 %v2612, 1e-05
        %v2621 = vadd.f32 %v2613, 1e-05
        %v2622 = vadd.f32 %v2614, 1e-05
        %v2623 = vadd.f32 %v2615, 1e-05
        %v2624 = vadd.f32 %v2616, 1e-05
        %v2625 = vrsqrt.pop %v2617
        %v2626 = vrsqrt.pop %v2618
        %v2627 = vrsqrt.pop %v2619
        %v2628 = vrsqrt.pop %v2620
        %v2629 = vrsqrt.pop %v2621
        %v2630 = vrsqrt.pop %v2622
        %v2631 = vrsqrt.pop %v2623
        %v2632 = vrsqrt.pop %v2624
        %v2633 = vmul.f32 %v2269, %v2625
        %v2634 = vmul.f32 %v2312, %v2626
        %v2635 = vmul.f32 %v2355, %v2627
        %v2636 = vmul.f32 %v2398, %v2628
        %v2637 = vmul.f32 %v2441, %v2629
        %v2638 = vmul.f32 %v2484, %v2630
        %v2639 = vmul.f32 %v2527, %v2631
        %v2640 = vmul.f32 %v2570, %v2632
        %v2641 = vld [vmem:[%s747] sm:$0x1]
        %v2643 = vlaneseq
        %v2644 = vshrl.u32 %v2643, 7
        %v2645 = vsub.s32 0, %v2644
        %v2646 = vrot.slane %v2641, %v2645
        %v2648 = vmul.f32 %v2633, %v2646
        %v2649 = vmul.f32 %v2634, %v2646
        %v2650 = vmul.f32 %v2635, %v2646
        %v2651 = vmul.f32 %v2636, %v2646
        %v2652 = vmul.f32 %v2637, %v2646
        %v2653 = vmul.f32 %v2638, %v2646
        %v2654 = vmul.f32 %v2639, %v2646
        %v2655 = vmul.f32 %v2640, %v2646
        %2658 = vrot.lane.b32.xlu0 %v2649, 32
        %v2659 = vpop.permute.xlu0 %2658
        %2660 = vrot.lane.b32.xlu0 %v2653, 32
        %v2661 = vpop.permute.xlu0 %2660
        %2666 = vrot.lane.b32.xlu0 %v2650, 64
        %v2667 = vpop.permute.xlu0 %2666
        %2668 = vrot.lane.b32.xlu0 %v2654, 64
        %v2669 = vpop.permute.xlu0 %2668
        %2674 = vrot.lane.b32.xlu0 %v2651, 96
        %v2675 = vpop.permute.xlu0 %2674
        %2676 = vrot.lane.b32.xlu0 %v2655, 96
        %v2677 = vpop.permute.xlu0 %2676
        %v2680 = vsel %vm2583, %v2648, %v2659
        %v2681 = vsel %vm2583, %v2652, %v2661
        %vm2682 = vcmask 523264
        %v2683 = vsel %vm2682, %v2680, %v2667
        %v2684 = vsel %vm2682, %v2681, %v2669
        %vm2685 = vcmask 785408
        %v2686 = vsel %vm2685, %v2683, %v2675
        %v2687 = vsel %vm2685, %v2684, %v2677
        %v2688 = vpack.c.bf16 %v2687, %v2686
        %v2689 = vld [vmem:[%s622] sm:$0xf]
        %v2690 = vld [vmem:[%s622 + $0x4] sm:$0xf]
        %v2691 = vld [vmem:[%s622 + $0x8] sm:$0xf]
        %v2692 = vld [vmem:[%s622 + $0xc] sm:$0xf]
        %v2693 = vld [vmem:[%s622 + $0x10] sm:$0xf]
        %v2694 = vld [vmem:[%s622 + $0x14] sm:$0xf]
        %v2695 = vld [vmem:[%s622 + $0x18] sm:$0xf]
        %v2696 = vld [vmem:[%s622 + $0x1c] sm:$0xf]
        %v2697 = vld [vmem:[%s622 + $0x20] sm:$0xf]
        %v2698 = vld [vmem:[%s622 + $0x24] sm:$0xf]
        %v2699 = vld [vmem:[%s622 + $0x28] sm:$0xf]
        %v2700 = vld [vmem:[%s622 + $0x2c] sm:$0xf]
        %v2701 = vld [vmem:[%s622 + $0x30] sm:$0xf]
        %v2702 = vld [vmem:[%s622 + $0x34] sm:$0xf]
        %v2703 = vld [vmem:[%s622 + $0x38] sm:$0xf]
        %v2704 = vld [vmem:[%s622 + $0x3c] sm:$0xf]
        %v2721 = vunpack.c.l.b16 %v2689
        %v2722 = vunpack.c.l.b16 %v2690
        %v2723 = vunpack.c.l.b16 %v2691
        %v2724 = vunpack.c.l.b16 %v2692
        %v2725 = vunpack.c.l.b16 %v2693
        %v2726 = vunpack.c.l.b16 %v2694
        %v2727 = vunpack.c.l.b16 %v2695
        %v2728 = vunpack.c.l.b16 %v2696
        %v2729 = vunpack.c.l.b16 %v2697
        %v2730 = vunpack.c.l.b16 %v2698
        %v2731 = vunpack.c.l.b16 %v2699
        %v2732 = vunpack.c.l.b16 %v2700
        %v2733 = vunpack.c.l.b16 %v2701
        %v2734 = vunpack.c.l.b16 %v2702
        %v2735 = vunpack.c.l.b16 %v2703
        %v2736 = vunpack.c.l.b16 %v2704
        %v2737 = vpack.c.b16 %v2722, %v2721
        %v2738 = vpack.c.b16 %v2724, %v2723
        %v2739 = vpack.c.b16 %v2726, %v2725
        %v2740 = vpack.c.b16 %v2728, %v2727
        %v2741 = vpack.c.b16 %v2730, %v2729
        %v2742 = vpack.c.b16 %v2732, %v2731
        %v2743 = vpack.c.b16 %v2734, %v2733
        %v2744 = vpack.c.b16 %v2736, %v2735
        %2753 = vmatprep.subr.bf16.mxu0 0
        %2754 = vmatpush1.bf16.msra.mxu0 %v2737
        %2755 = vmatprep.subr.bf16.mxu0 0
        %2756 = vmatpush1.bf16.msra.mxu0 %v2738
        %2757 = vmatprep.subr.bf16.mxu0 0
        %2758 = vmatpush1.bf16.msra.mxu0 %v2739
        %2759 = vmatprep.subr.bf16.mxu0 0
        %2760 = vmatpush1.bf16.msra.mxu0 %v2740
        %2761 = vmatprep.subr.bf16.mxu0 0
        %2762 = vmatpush1.bf16.msra.mxu0 %v2741
        %2763 = vmatprep.subr.bf16.mxu0 0
        %2764 = vmatpush1.bf16.msra.mxu0 %v2742
        %2765 = vmatprep.subr.bf16.mxu0 0
        %2766 = vmatpush1.bf16.msra.mxu0 %v2743
        %2767 = vmatprep.subr.bf16.mxu0 0
        %2768 = vmatpush1.bf16.msra.mxu0 %v2744
        %2769 = vmatprep.subr.bf16.mxu0 0
        %2770 = vmatpush1.bf16.msra.mxu0 0
        %2771 = vmatprep.subr.bf16.mxu0 0
        %2772 = vmatpush1.bf16.msra.mxu0 0
        %2773 = vmatprep.subr.bf16.mxu0 0
        %2774 = vmatpush1.bf16.msra.mxu0 0
        %2775 = vmatprep.subr.bf16.mxu0 0
        %2776 = vmatpush1.bf16.msra.mxu0 0
        %2777 = vmatprep.subr.bf16.mxu0 0
        %2778 = vmatpush1.bf16.msra.mxu0 0
        %2779 = vmatprep.subr.bf16.mxu0 0
        %2780 = vmatpush1.bf16.msra.mxu0 0
        %2781 = vmatprep.subr.bf16.mxu0 0
        %2782 = vmatpush1.bf16.msra.mxu0 0
        %2783 = vmatprep.subr.bf16.mxu0 0
        %2784 = vmatpush1.bf16.msra.mxu0 0
        %2785 = vmatprep.mubr.bf16.mxu0 0
        %2786 = vmatmul.mubr.bf16.gmra.mrb[0].mxu0 %v2688
        %v2787 = vpop.f32.mrb[0].mxu0
        %v2788 = vadd.f32 0.0, %v2787
        %v2789 = vpop.f32.mrb[0].mxu0
        %v2790 = vpop.f32.mrb[0].mxu0
        %v2791 = vadd.f32 0.0, %v2790
        %v2792 = vpop.f32.mrb[0].mxu0
        %2793 = vdwg.mxu0
        %v2794 = vadd.f32 %v771, %v2788
        %v2795 = vadd.f32 %v772, %v2791
        %v2796 = vld [vmem:[%s744 + $0x2] sm:$0x1]
        %v2797 = vld [vmem:[%s744 + $0x3] sm:$0x1]
        %2798 = vadd.xlane.f32.xlu0 %v2794
        %v2799 = vpop.xlane.xlu0 %2798
        %2800 = vadd.xlane.f32.xlu0 %v2795
        %v2801 = vpop.xlane.xlu0 %2800
        %v2802 = vmul.f32 %v2799, %v783
        %v2803 = vmul.f32 %v2801, %v783
        %v2804 = vsub.f32 %v2794, %v2802
        %v2805 = vsub.f32 %v2795, %v2803
        %v2806 = vmul.f32 %v2804, %v2804
        %v2807 = vmul.f32 %v2805, %v2805
        %2808 = vadd.xlane.f32.xlu0 %v2806
        %v2809 = vpop.xlane.xlu0 %2808
        %2810 = vadd.xlane.f32.xlu0 %v2807
        %v2811 = vpop.xlane.xlu0 %2810
        %v2812 = vmul.f32 %v2809, %v783
        %v2813 = vmul.f32 %v2811, %v783
        %v2814 = vadd.f32 %v2812, 1e-05
        %v2815 = vadd.f32 %v2813, 1e-05
        %v2816 = vrsqrt.pop %v2814
        %v2817 = vrsqrt.pop %v2815
        %v2818 = vmul.f32 %v2804, %v2816
        %v2819 = vmul.f32 %v2805, %v2817
        %v2820 = vlaneseq
        %v2821 = vshrl.u32 %v2820, 7
        %v2822 = vsub.s32 0, %v2821
        %v2823 = vrot.slane %v2796, %v2822
        %v2824 = vmul.f32 %v2818, %v2823
        %v2825 = vmul.f32 %v2819, %v2823
        %v2826 = vlaneseq
        %v2827 = vshrl.u32 %v2826, 7
        %v2828 = vsub.s32 0, %v2827
        %v2829 = vrot.slane %v2797, %v2828
        %v2830 = vadd.f32 %v2824, %v2829
        %v2831 = vadd.f32 %v2825, %v2829
        %v2832 = vpack.c.bf16 %v2831, %v2830
        %v2833 = vld [vmem:[%s631] sm:$0xff]
        %v2834 = vld [vmem:[%s631 + $0x8] sm:$0xf]
        %v2835 = vld [vmem:[%s631 + $0xc] sm:$0xff]
        %v2836 = vld [vmem:[%s631 + $0x14] sm:$0xf]
        %v2837 = vld [vmem:[%s631 + $0x18] sm:$0xff]
        %v2838 = vld [vmem:[%s631 + $0x20] sm:$0xf]
        %v2839 = vld [vmem:[%s631 + $0x24] sm:$0xff]
        %v2840 = vld [vmem:[%s631 + $0x2c] sm:$0xf]
        %v2841 = vld [vmem:[%s631 + $0x30] sm:$0xff]
        %v2842 = vld [vmem:[%s631 + $0x38] sm:$0xf]
        %v2843 = vld [vmem:[%s631 + $0x3c] sm:$0xff]
        %v2844 = vld [vmem:[%s631 + $0x44] sm:$0xf]
        %v2845 = vld [vmem:[%s631 + $0x48] sm:$0xff]
        %v2846 = vld [vmem:[%s631 + $0x50] sm:$0xf]
        %v2847 = vld [vmem:[%s631 + $0x54] sm:$0xff]
        %v2848 = vld [vmem:[%s631 + $0x5c] sm:$0xf]
        %v2849 = vld [vmem:[%s631 + $0x60] sm:$0xff]
        %v2850 = vld [vmem:[%s631 + $0x68] sm:$0xf]
        %v2851 = vld [vmem:[%s631 + $0x6c] sm:$0xff]
        %v2852 = vld [vmem:[%s631 + $0x74] sm:$0xf]
        %v2853 = vld [vmem:[%s631 + $0x78] sm:$0xff]
        %v2854 = vld [vmem:[%s631 + $0x80] sm:$0xf]
        %v2855 = vld [vmem:[%s631 + $0x84] sm:$0xff]
        %v2856 = vld [vmem:[%s631 + $0x8c] sm:$0xf]
        %v2857 = vld [vmem:[%s631 + $0x90] sm:$0xff]
        %v2858 = vld [vmem:[%s631 + $0x98] sm:$0xf]
        %v2859 = vld [vmem:[%s631 + $0x9c] sm:$0xff]
        %v2860 = vld [vmem:[%s631 + $0xa4] sm:$0xf]
        %v2861 = vld [vmem:[%s631 + $0xa8] sm:$0xff]
        %v2862 = vld [vmem:[%s631 + $0xb0] sm:$0xf]
        %v2863 = vld [vmem:[%s631 + $0xb4] sm:$0xff]
        %v2864 = vld [vmem:[%s631 + $0xbc] sm:$0xf]
        %v2897 = vunpack.c.l.b16 %v2833
        %v2898 = vunpack.c.h.b16 %v2833
        %v2899 = vunpack.c.l.b16 %v2834
        %v2900 = vunpack.c.l.b16 %v2835
        %v2901 = vunpack.c.h.b16 %v2835
        %v2902 = vunpack.c.l.b16 %v2836
        %v2903 = vunpack.c.l.b16 %v2837
        %v2904 = vunpack.c.h.b16 %v2837
        %v2905 = vunpack.c.l.b16 %v2838
        %v2906 = vunpack.c.l.b16 %v2839
        %v2907 = vunpack.c.h.b16 %v2839
        %v2908 = vunpack.c.l.b16 %v2840
        %v2909 = vunpack.c.l.b16 %v2841
        %v2910 = vunpack.c.h.b16 %v2841
        %v2911 = vunpack.c.l.b16 %v2842
        %v2912 = vunpack.c.l.b16 %v2843
        %v2913 = vunpack.c.h.b16 %v2843
        %v2914 = vunpack.c.l.b16 %v2844
        %v2915 = vunpack.c.l.b16 %v2845
        %v2916 = vunpack.c.h.b16 %v2845
        %v2917 = vunpack.c.l.b16 %v2846
        %v2918 = vunpack.c.l.b16 %v2847
        %v2919 = vunpack.c.h.b16 %v2847
        %v2920 = vunpack.c.l.b16 %v2848
        %v2921 = vunpack.c.l.b16 %v2849
        %v2922 = vunpack.c.h.b16 %v2849
        %v2923 = vunpack.c.l.b16 %v2850
        %v2924 = vunpack.c.l.b16 %v2851
        %v2925 = vunpack.c.h.b16 %v2851
        %v2926 = vunpack.c.l.b16 %v2852
        %v2927 = vunpack.c.l.b16 %v2853
        %v2928 = vunpack.c.h.b16 %v2853
        %v2929 = vunpack.c.l.b16 %v2854
        %v2930 = vunpack.c.l.b16 %v2855
        %v2931 = vunpack.c.h.b16 %v2855
        %v2932 = vunpack.c.l.b16 %v2856
        %v2933 = vunpack.c.l.b16 %v2857
        %v2934 = vunpack.c.h.b16 %v2857
        %v2935 = vunpack.c.l.b16 %v2858
        %v2936 = vunpack.c.l.b16 %v2859
        %v2937 = vunpack.c.h.b16 %v2859
        %v2938 = vunpack.c.l.b16 %v2860
        %v2939 = vunpack.c.l.b16 %v2861
        %v2940 = vunpack.c.h.b16 %v2861
        %v2941 = vunpack.c.l.b16 %v2862
        %v2942 = vunpack.c.l.b16 %v2863
        %v2943 = vunpack.c.h.b16 %v2863
        %v2944 = vunpack.c.l.b16 %v2864
        %v2945 = vpack.c.b16 %v2900, %v2897
        %v2946 = vpack.c.b16 %v2901, %v2898
        %v2947 = vpack.c.b16 %v2902, %v2899
        %v2948 = vpack.c.b16 %v2906, %v2903
        %v2949 = vpack.c.b16 %v2907, %v2904
        %v2950 = vpack.c.b16 %v2908, %v2905
        %v2951 = vpack.c.b16 %v2912, %v2909
        %v2952 = vpack.c.b16 %v2913, %v2910
        %v2953 = vpack.c.b16 %v2914, %v2911
        %v2954 = vpack.c.b16 %v2918, %v2915
        %v2955 = vpack.c.b16 %v2919, %v2916
        %v2956 = vpack.c.b16 %v2920, %v2917
        %v2957 = vpack.c.b16 %v2924, %v2921
        %v2958 = vpack.c.b16 %v2925, %v2922
        %v2959 = vpack.c.b16 %v2926, %v2923
        %v2960 = vpack.c.b16 %v2930, %v2927
        %v2961 = vpack.c.b16 %v2931, %v2928
        %v2962 = vpack.c.b16 %v2932, %v2929
        %v2963 = vpack.c.b16 %v2936, %v2933
        %v2964 = vpack.c.b16 %v2937, %v2934
        %v2965 = vpack.c.b16 %v2938, %v2935
        %v2966 = vpack.c.b16 %v2942, %v2939
        %v2967 = vpack.c.b16 %v2943, %v2940
        %v2968 = vpack.c.b16 %v2944, %v2941
        %2993 = vmatprep.subr.bf16.mxu0 %v2946
        %2994 = vmatpush1.bf16.msra.mxu0 %v2945
        %2995 = vmatprep.subr.bf16.mxu0 %v2949
        %2996 = vmatpush1.bf16.msra.mxu0 %v2948
        %2997 = vmatprep.subr.bf16.mxu0 %v2952
        %2998 = vmatpush1.bf16.msra.mxu0 %v2951
        %2999 = vmatprep.subr.bf16.mxu0 %v2955
        %3000 = vmatpush1.bf16.msra.mxu0 %v2954
        %3001 = vmatprep.subr.bf16.mxu0 %v2958
        %3002 = vmatpush1.bf16.msra.mxu0 %v2957
        %3003 = vmatprep.subr.bf16.mxu0 %v2961
        %3004 = vmatpush1.bf16.msra.mxu0 %v2960
        %3005 = vmatprep.subr.bf16.mxu0 %v2964
        %3006 = vmatpush1.bf16.msra.mxu0 %v2963
        %3007 = vmatprep.subr.bf16.mxu0 %v2967
        %3008 = vmatpush1.bf16.msra.mxu0 %v2966
        %3009 = vmatprep.subr.bf16.mxu0 0
        %3010 = vmatpush1.bf16.msra.mxu0 0
        %3011 = vmatprep.subr.bf16.mxu0 0
        %3012 = vmatpush1.bf16.msra.mxu0 0
        %3013 = vmatprep.subr.bf16.mxu0 0
        %3014 = vmatpush1.bf16.msra.mxu0 0
        %3015 = vmatprep.subr.bf16.mxu0 0
        %3016 = vmatpush1.bf16.msra.mxu0 0
        %3017 = vmatprep.subr.bf16.mxu0 0
        %3018 = vmatpush1.bf16.msra.mxu0 0
        %3019 = vmatprep.subr.bf16.mxu0 0
        %3020 = vmatpush1.bf16.msra.mxu0 0
        %3021 = vmatprep.subr.bf16.mxu0 0
        %3022 = vmatpush1.bf16.msra.mxu0 0
        %3023 = vmatprep.subr.bf16.mxu0 0
        %3024 = vmatpush1.bf16.msra.mxu0 0
        %3025 = vmatprep.mubr.bf16.mxu0 0
        %3026 = vmatmul.mubr.bf16.gmra.mrb[0].mxu0 %v2832
        %v3027 = vpop.f32.mrb[0].mxu0
        %v3028 = vadd.f32 0.0, %v3027
        %v3029 = vpop.f32.mrb[0].mxu0
        %v3030 = vadd.f32 0.0, %v3029
        %v3031 = vpop.f32.mrb[0].mxu0
        %v3032 = vadd.f32 0.0, %v3031
        %v3033 = vpop.f32.mrb[0].mxu0
        %v3034 = vadd.f32 0.0, %v3033
        %3035 = vdwg.mxu0
        %3036 = vmatprep.subr.bf16.mxu0 0
        %3037 = vmatpush1.bf16.msra.mxu0 %v2947
        %3038 = vmatprep.subr.bf16.mxu0 0
        %3039 = vmatpush1.bf16.msra.mxu0 %v2950
        %3040 = vmatprep.subr.bf16.mxu0 0
        %3041 = vmatpush1.bf16.msra.mxu0 %v2953
        %3042 = vmatprep.subr.bf16.mxu0 0
        %3043 = vmatpush1.bf16.msra.mxu0 %v2956
        %3044 = vmatprep.subr.bf16.mxu0 0
        %3045 = vmatpush1.bf16.msra.mxu0 %v2959
        %3046 = vmatprep.subr.bf16.mxu0 0
        %3047 = vmatpush1.bf16.msra.mxu0 %v2962
        %3048 = vmatprep.subr.bf16.mxu0 0
        %3049 = vmatpush1.bf16.msra.mxu0 %v2965
        %3050 = vmatprep.subr.bf16.mxu0 0
        %3051 = vmatpush1.bf16.msra.mxu0 %v2968
        %3052 = vmatprep.subr.bf16.mxu0 0
        %3053 = vmatpush1.bf16.msra.mxu0 0
        %3054 = vmatprep.subr.bf16.mxu0 0
        %3055 = vmatpush1.bf16.msra.mxu0 0
        %3056 = vmatprep.subr.bf16.mxu0 0
        %3057 = vmatpush1.bf16.msra.mxu0 0
        %3058 = vmatprep.subr.bf16.mxu0 0
        %3059 = vmatpush1.bf16.msra.mxu0 0
        %3060 = vmatprep.subr.bf16.mxu0 0
        %3061 = vmatpush1.bf16.msra.mxu0 0
        %3062 = vmatprep.subr.bf16.mxu0 0
        %3063 = vmatpush1.bf16.msra.mxu0 0
        %3064 = vmatprep.subr.bf16.mxu0 0
        %3065 = vmatpush1.bf16.msra.mxu0 0
        %3066 = vmatprep.subr.bf16.mxu0 0
        %3067 = vmatpush1.bf16.msra.mxu0 0
        %3068 = vmatprep.mubr.bf16.mxu0 0
        %3069 = vmatmul.mubr.bf16.gmra.mrb[0].mxu0 %v2832
        %v3070 = vpop.f32.mrb[0].mxu0
        %v3071 = vadd.f32 0.0, %v3070
        %v3072 = vpop.f32.mrb[0].mxu0
        %v3073 = vpop.f32.mrb[0].mxu0
        %v3074 = vadd.f32 0.0, %v3073
        %v3075 = vpop.f32.mrb[0].mxu0
        %3076 = vdwg.mxu0
        %3079 = vrot.lane.b32.xlu0 %v3028, 112
        %v3080 = vpop.permute.xlu0 %3079
        %3081 = vrot.lane.b32.xlu0 %v3032, 112
        %v3082 = vpop.permute.xlu0 %3081
        %3085 = vrot.lane.b32.xlu0 %v3028, 96
        %v3086 = vpop.permute.xlu0 %3085
        %3087 = vrot.lane.b32.xlu0 %v3032, 96
        %v3088 = vpop.permute.xlu0 %3087
        %3091 = vrot.lane.b32.xlu0 %v3028, 80
        %v3092 = vpop.permute.xlu0 %3091
        %3093 = vrot.lane.b32.xlu0 %v3032, 80
        %v3094 = vpop.permute.xlu0 %3093
        %3097 = vrot.lane.b32.xlu0 %v3028, 64
        %v3098 = vpop.permute.xlu0 %3097
        %3099 = vrot.lane.b32.xlu0 %v3032, 64
        %v3100 = vpop.permute.xlu0 %3099
        %3103 = vrot.lane.b32.xlu0 %v3028, 48
        %v3104 = vpop.permute.xlu0 %3103
        %3105 = vrot.lane.b32.xlu0 %v3032, 48
        %v3106 = vpop.permute.xlu0 %3105
        %3109 = vrot.lane.b32.xlu0 %v3028, 32
        %v3110 = vpop.permute.xlu0 %3109
        %3111 = vrot.lane.b32.xlu0 %v3032, 32
        %v3112 = vpop.permute.xlu0 %3111
        %3115 = vrot.lane.b32.xlu0 %v3028, 16
        %v3116 = vpop.permute.xlu0 %3115
        %3117 = vrot.lane.b32.xlu0 %v3032, 16
        %v3118 = vpop.permute.xlu0 %3117
        %v3121 = vpack.c.bf16 %v3028, %v3028
        %v3122 = vpack.c.bf16 %v3080, %v3080
        %v3123 = vpack.c.bf16 %v3086, %v3086
        %v3124 = vpack.c.bf16 %v3092, %v3092
        %v3125 = vpack.c.bf16 %v3098, %v3098
        %v3126 = vpack.c.bf16 %v3104, %v3104
        %v3127 = vpack.c.bf16 %v3110, %v3110
        %v3128 = vpack.c.bf16 %v3116, %v3116
        %v3129 = vpack.c.bf16 %v3032, %v3032
        %v3130 = vpack.c.bf16 %v3082, %v3082
        %v3131 = vpack.c.bf16 %v3088, %v3088
        %v3132 = vpack.c.bf16 %v3094, %v3094
        %v3133 = vpack.c.bf16 %v3100, %v3100
        %v3134 = vpack.c.bf16 %v3106, %v3106
        %v3135 = vpack.c.bf16 %v3112, %v3112
        %v3136 = vpack.c.bf16 %v3118, %v3118
        %3139 = vrot.lane.b32.xlu0 %v3030, 112
        %v3140 = vpop.permute.xlu0 %3139
        %3141 = vrot.lane.b32.xlu0 %v3034, 112
        %v3142 = vpop.permute.xlu0 %3141
        %3145 = vrot.lane.b32.xlu0 %v3030, 96
        %v3146 = vpop.permute.xlu0 %3145
        %3147 = vrot.lane.b32.xlu0 %v3034, 96
        %v3148 = vpop.permute.xlu0 %3147
        %3151 = vrot.lane.b32.xlu0 %v3030, 80
        %v3152 = vpop.permute.xlu0 %3151
        %3153 = vrot.lane.b32.xlu0 %v3034, 80
        %v3154 = vpop.permute.xlu0 %3153
        %3157 = vrot.lane.b32.xlu0 %v3030, 64
        %v3158 = vpop.permute.xlu0 %3157
        %3159 = vrot.lane.b32.xlu0 %v3034, 64
        %v3160 = vpop.permute.xlu0 %3159
        %3163 = vrot.lane.b32.xlu0 %v3030, 48
        %v3164 = vpop.permute.xlu0 %3163
        %3165 = vrot.lane.b32.xlu0 %v3034, 48
        %v3166 = vpop.permute.xlu0 %3165
        %3169 = vrot.lane.b32.xlu0 %v3030, 32
        %v3170 = vpop.permute.xlu0 %3169
        %3171 = vrot.lane.b32.xlu0 %v3034, 32
        %v3172 = vpop.permute.xlu0 %3171
        %3175 = vrot.lane.b32.xlu0 %v3030, 16
        %v3176 = vpop.permute.xlu0 %3175
        %3177 = vrot.lane.b32.xlu0 %v3034, 16
        %v3178 = vpop.permute.xlu0 %3177
        %v3181 = vpack.c.bf16 %v3030, %v3030
        %v3182 = vpack.c.bf16 %v3140, %v3140
        %v3183 = vpack.c.bf16 %v3146, %v3146
        %v3184 = vpack.c.bf16 %v3152, %v3152
        %v3185 = vpack.c.bf16 %v3158, %v3158
        %v3186 = vpack.c.bf16 %v3164, %v3164
        %v3187 = vpack.c.bf16 %v3170, %v3170
        %v3188 = vpack.c.bf16 %v3176, %v3176
        %v3189 = vpack.c.bf16 %v3034, %v3034
        %v3190 = vpack.c.bf16 %v3142, %v3142
        %v3191 = vpack.c.bf16 %v3148, %v3148
        %v3192 = vpack.c.bf16 %v3154, %v3154
        %v3193 = vpack.c.bf16 %v3160, %v3160
        %v3194 = vpack.c.bf16 %v3166, %v3166
        %v3195 = vpack.c.bf16 %v3172, %v3172
        %v3196 = vpack.c.bf16 %v3178, %v3178
        %3199 = vrot.lane.b32.xlu0 %v3071, 96
        %v3200 = vpop.permute.xlu0 %3199
        %3201 = vrot.lane.b32.xlu0 %v3074, 96
        %v3202 = vpop.permute.xlu0 %3201
        %3205 = vrot.lane.b32.xlu0 %v3071, 64
        %v3206 = vpop.permute.xlu0 %3205
        %3207 = vrot.lane.b32.xlu0 %v3074, 64
        %v3208 = vpop.permute.xlu0 %3207
        %3211 = vrot.lane.b32.xlu0 %v3071, 32
        %v3212 = vpop.permute.xlu0 %3211
        %3213 = vrot.lane.b32.xlu0 %v3074, 32
        %v3214 = vpop.permute.xlu0 %3213
        %v3217 = vpack.c.bf16 %v3071, %v3071
        %v3218 = vpack.c.bf16 %v3200, %v3200
        %v3219 = vpack.c.bf16 %v3206, %v3206
        %v3220 = vpack.c.bf16 %v3212, %v3212
        %v3221 = vpack.c.bf16 %v3074, %v3074
        %v3222 = vpack.c.bf16 %v3202, %v3202
        %v3223 = vpack.c.bf16 %v3208, %v3208
        %v3224 = vpack.c.bf16 %v3214, %v3214
        %v3226 = vsel %vm1293, %v3121, 0
        %v3229 = vsel %vm1293, %v3181, 0
        %3231 = vmatprep.subr.bf16.mxu0 0
        %3232 = vmatpush1.bf16.xpose.msra.mxu0 %v3229
        %3233 = vmatprep.subr.bf16.mxu0 0
        %3234 = vmatpush1.bf16.xpose.msra.mxu0 0
        %3235 = vmatprep.subr.bf16.mxu0 0
        %3236 = vmatpush1.bf16.xpose.msra.mxu0 0
        %3237 = vmatprep.subr.bf16.mxu0 0
        %3238 = vmatpush1.bf16.xpose.msra.mxu0 0
        %3239 = vmatprep.subr.bf16.mxu0 0
        %3240 = vmatpush1.bf16.xpose.msra.mxu0 0
        %3241 = vmatprep.subr.bf16.mxu0 0
        %3242 = vmatpush1.bf16.xpose.msra.mxu0 0
        %3243 = vmatprep.subr.bf16.mxu0 0
        %3244 = vmatpush1.bf16.xpose.msra.mxu0 0
        %3245 = vmatprep.subr.bf16.mxu0 0
        %3246 = vmatpush1.bf16.xpose.msra.mxu0 0
        %3247 = vmatprep.subr.bf16.mxu0 0
        %3248 = vmatpush1.bf16.xpose.msra.mxu0 0
        %3249 = vmatprep.subr.bf16.mxu0 0
        %3250 = vmatpush1.bf16.xpose.msra.mxu0 0
        %3251 = vmatprep.subr.bf16.mxu0 0
        %3252 = vmatpush1.bf16.xpose.msra.mxu0 0
        %3253 = vmatprep.subr.bf16.mxu0 0
        %3254 = vmatpush1.bf16.xpose.msra.mxu0 0
        %3255 = vmatprep.subr.bf16.mxu0 0
        %3256 = vmatpush1.bf16.xpose.msra.mxu0 0
        %3257 = vmatprep.subr.bf16.mxu0 0
        %3258 = vmatpush1.bf16.xpose.msra.mxu0 0
        %3259 = vmatprep.subr.bf16.mxu0 0
        %3260 = vmatpush1.bf16.xpose.msra.mxu0 0
        %3261 = vmatprep.subr.bf16.mxu0 0
        %3262 = vmatpush1.bf16.xpose.msra.mxu0 0
        %3263 = vmatprep.mubr.bf16.mxu0 0
        %3264 = vmatmul.mubr.bf16.gmra.mrb[0].mxu0 %v3226
        %v3265 = vpop.f32.mrb[0].mxu0
        %v3266 = vadd.f32 0.0, %v3265
        %v3267 = vpop.f32.mrb[0].mxu0
        %v3268 = vpop.f32.mrb[0].mxu0
        %v3269 = vpop.f32.mrb[0].mxu0
        %3270 = vdwg.mxu0
        %v3272 = vsel %vm1293, %v3122, 0
        %v3275 = vsel %vm1293, %v3182, 0
        %3277 = vmatprep.subr.bf16.mxu0 0
        %3278 = vmatpush1.bf16.xpose.msra.mxu0 %v3275
        %3279 = vmatprep.subr.bf16.mxu0 0
        %3280 = vmatpush1.bf16.xpose.msra.mxu0 0
        %3281 = vmatprep.subr.bf16.mxu0 0
        %3282 = vmatpush1.bf16.xpose.msra.mxu0 0
        %3283 = vmatprep.subr.bf16.mxu0 0
        %3284 = vmatpush1.bf16.xpose.msra.mxu0 0
        %3285 = vmatprep.subr.bf16.mxu0 0
        %3286 = vmatpush1.bf16.xpose.msra.mxu0 0
        %3287 = vmatprep.subr.bf16.mxu0 0
        %3288 = vmatpush1.bf16.xpose.msra.mxu0 0
        %3289 = vmatprep.subr.bf16.mxu0 0
        %3290 = vmatpush1.bf16.xpose.msra.mxu0 0
        %3291 = vmatprep.subr.bf16.mxu0 0
        %3292 = vmatpush1.bf16.xpose.msra.mxu0 0
        %3293 = vmatprep.subr.bf16.mxu0 0
        %3294 = vmatpush1.bf16.xpose.msra.mxu0 0
        %3295 = vmatprep.subr.bf16.mxu0 0
        %3296 = vmatpush1.bf16.xpose.msra.mxu0 0
        %3297 = vmatprep.subr.bf16.mxu0 0
        %3298 = vmatpush1.bf16.xpose.msra.mxu0 0
        %3299 = vmatprep.subr.bf16.mxu0 0
        %3300 = vmatpush1.bf16.xpose.msra.mxu0 0
        %3301 = vmatprep.subr.bf16.mxu0 0
        %3302 = vmatpush1.bf16.xpose.msra.mxu0 0
        %3303 = vmatprep.subr.bf16.mxu0 0
        %3304 = vmatpush1.bf16.xpose.msra.mxu0 0
        %3305 = vmatprep.subr.bf16.mxu0 0
        %3306 = vmatpush1.bf16.xpose.msra.mxu0 0
        %3307 = vmatprep.subr.bf16.mxu0 0
        %3308 = vmatpush1.bf16.xpose.msra.mxu0 0
        %3309 = vmatprep.mubr.bf16.mxu0 0
        %3310 = vmatmul.mubr.bf16.gmra.mrb[0].mxu0 %v3272
        %v3311 = vpop.f32.mrb[0].mxu0
        %v3312 = vadd.f32 0.0, %v3311
        %v3313 = vpop.f32.mrb[0].mxu0
        %v3314 = vpop.f32.mrb[0].mxu0
        %v3315 = vpop.f32.mrb[0].mxu0
        %3316 = vdwg.mxu0
        %v3318 = vsel %vm1293, %v3123, 0
        %v3321 = vsel %vm1293, %v3183, 0
        %3323 = vmatprep.subr.bf16.mxu0 0
        %3324 = vmatpush1.bf16.xpose.msra.mxu0 %v3321
        %3325 = vmatprep.subr.bf16.mxu0 0
        %3326 = vmatpush1.bf16.xpose.msra.mxu0 0
        %3327 = vmatprep.subr.bf16.mxu0 0
        %3328 = vmatpush1.bf16.xpose.msra.mxu0 0
        %3329 = vmatprep.subr.bf16.mxu0 0
        %3330 = vmatpush1.bf16.xpose.msra.mxu0 0
        %3331 = vmatprep.subr.bf16.mxu0 0
        %3332 = vmatpush1.bf16.xpose.msra.mxu0 0
        %3333 = vmatprep.subr.bf16.mxu0 0
        %3334 = vmatpush1.bf16.xpose.msra.mxu0 0
        %3335 = vmatprep.subr.bf16.mxu0 0
        %3336 = vmatpush1.bf16.xpose.msra.mxu0 0
        %3337 = vmatprep.subr.bf16.mxu0 0
        %3338 = vmatpush1.bf16.xpose.msra.mxu0 0
        %3339 = vmatprep.subr.bf16.mxu0 0
        %3340 = vmatpush1.bf16.xpose.msra.mxu0 0
        %3341 = vmatprep.subr.bf16.mxu0 0
        %3342 = vmatpush1.bf16.xpose.msra.mxu0 0
        %3343 = vmatprep.subr.bf16.mxu0 0
        %3344 = vmatpush1.bf16.xpose.msra.mxu0 0
        %3345 = vmatprep.subr.bf16.mxu0 0
        %3346 = vmatpush1.bf16.xpose.msra.mxu0 0
        %3347 = vmatprep.subr.bf16.mxu0 0
        %3348 = vmatpush1.bf16.xpose.msra.mxu0 0
        %3349 = vmatprep.subr.bf16.mxu0 0
        %3350 = vmatpush1.bf16.xpose.msra.mxu0 0
        %3351 = vmatprep.subr.bf16.mxu0 0
        %3352 = vmatpush1.bf16.xpose.msra.mxu0 0
        %3353 = vmatprep.subr.bf16.mxu0 0
        %3354 = vmatpush1.bf16.xpose.msra.mxu0 0
        %3355 = vmatprep.mubr.bf16.mxu0 0
        %3356 = vmatmul.mubr.bf16.gmra.mrb[0].mxu0 %v3318
        %v3357 = vpop.f32.mrb[0].mxu0
        %v3358 = vadd.f32 0.0, %v3357
        %v3359 = vpop.f32.mrb[0].mxu0
        %v3360 = vpop.f32.mrb[0].mxu0
        %v3361 = vpop.f32.mrb[0].mxu0
        %3362 = vdwg.mxu0
        %v3364 = vsel %vm1293, %v3124, 0
        %v3367 = vsel %vm1293, %v3184, 0
        %3369 = vmatprep.subr.bf16.mxu0 0
        %3370 = vmatpush1.bf16.xpose.msra.mxu0 %v3367
        %3371 = vmatprep.subr.bf16.mxu0 0
        %3372 = vmatpush1.bf16.xpose.msra.mxu0 0
        %3373 = vmatprep.subr.bf16.mxu0 0
        %3374 = vmatpush1.bf16.xpose.msra.mxu0 0
        %3375 = vmatprep.subr.bf16.mxu0 0
        %3376 = vmatpush1.bf16.xpose.msra.mxu0 0
        %3377 = vmatprep.subr.bf16.mxu0 0
        %3378 = vmatpush1.bf16.xpose.msra.mxu0 0
        %3379 = vmatprep.subr.bf16.mxu0 0
        %3380 = vmatpush1.bf16.xpose.msra.mxu0 0
        %3381 = vmatprep.subr.bf16.mxu0 0
        %3382 = vmatpush1.bf16.xpose.msra.mxu0 0
        %3383 = vmatprep.subr.bf16.mxu0 0
        %3384 = vmatpush1.bf16.xpose.msra.mxu0 0
        %3385 = vmatprep.subr.bf16.mxu0 0
        %3386 = vmatpush1.bf16.xpose.msra.mxu0 0
        %3387 = vmatprep.subr.bf16.mxu0 0
        %3388 = vmatpush1.bf16.xpose.msra.mxu0 0
        %3389 = vmatprep.subr.bf16.mxu0 0
        %3390 = vmatpush1.bf16.xpose.msra.mxu0 0
        %3391 = vmatprep.subr.bf16.mxu0 0
        %3392 = vmatpush1.bf16.xpose.msra.mxu0 0
        %3393 = vmatprep.subr.bf16.mxu0 0
        %3394 = vmatpush1.bf16.xpose.msra.mxu0 0
        %3395 = vmatprep.subr.bf16.mxu0 0
        %3396 = vmatpush1.bf16.xpose.msra.mxu0 0
        %3397 = vmatprep.subr.bf16.mxu0 0
        %3398 = vmatpush1.bf16.xpose.msra.mxu0 0
        %3399 = vmatprep.subr.bf16.mxu0 0
        %3400 = vmatpush1.bf16.xpose.msra.mxu0 0
        %3401 = vmatprep.mubr.bf16.mxu0 0
        %3402 = vmatmul.mubr.bf16.gmra.mrb[0].mxu0 %v3364
        %v3403 = vpop.f32.mrb[0].mxu0
        %v3404 = vadd.f32 0.0, %v3403
        %v3405 = vpop.f32.mrb[0].mxu0
        %v3406 = vpop.f32.mrb[0].mxu0
        %v3407 = vpop.f32.mrb[0].mxu0
        %3408 = vdwg.mxu0
        %v3410 = vsel %vm1293, %v3125, 0
        %v3413 = vsel %vm1293, %v3185, 0
        %3415 = vmatprep.subr.bf16.mxu0 0
        %3416 = vmatpush1.bf16.xpose.msra.mxu0 %v3413
        %3417 = vmatprep.subr.bf16.mxu0 0
        %3418 = vmatpush1.bf16.xpose.msra.mxu0 0
        %3419 = vmatprep.subr.bf16.mxu0 0
        %3420 = vmatpush1.bf16.xpose.msra.mxu0 0
        %3421 = vmatprep.subr.bf16.mxu0 0
        %3422 = vmatpush1.bf16.xpose.msra.mxu0 0
        %3423 = vmatprep.subr.bf16.mxu0 0
        %3424 = vmatpush1.bf16.xpose.msra.mxu0 0
        %3425 = vmatprep.subr.bf16.mxu0 0
        %3426 = vmatpush1.bf16.xpose.msra.mxu0 0
        %3427 = vmatprep.subr.bf16.mxu0 0
        %3428 = vmatpush1.bf16.xpose.msra.mxu0 0
        %3429 = vmatprep.subr.bf16.mxu0 0
        %3430 = vmatpush1.bf16.xpose.msra.mxu0 0
        %3431 = vmatprep.subr.bf16.mxu0 0
        %3432 = vmatpush1.bf16.xpose.msra.mxu0 0
        %3433 = vmatprep.subr.bf16.mxu0 0
        %3434 = vmatpush1.bf16.xpose.msra.mxu0 0
        %3435 = vmatprep.subr.bf16.mxu0 0
        %3436 = vmatpush1.bf16.xpose.msra.mxu0 0
        %3437 = vmatprep.subr.bf16.mxu0 0
        %3438 = vmatpush1.bf16.xpose.msra.mxu0 0
        %3439 = vmatprep.subr.bf16.mxu0 0
        %3440 = vmatpush1.bf16.xpose.msra.mxu0 0
        %3441 = vmatprep.subr.bf16.mxu0 0
        %3442 = vmatpush1.bf16.xpose.msra.mxu0 0
        %3443 = vmatprep.subr.bf16.mxu0 0
        %3444 = vmatpush1.bf16.xpose.msra.mxu0 0
        %3445 = vmatprep.subr.bf16.mxu0 0
        %3446 = vmatpush1.bf16.xpose.msra.mxu0 0
        %3447 = vmatprep.mubr.bf16.mxu0 0
        %3448 = vmatmul.mubr.bf16.gmra.mrb[0].mxu0 %v3410
        %v3449 = vpop.f32.mrb[0].mxu0
        %v3450 = vadd.f32 0.0, %v3449
        %v3451 = vpop.f32.mrb[0].mxu0
        %v3452 = vpop.f32.mrb[0].mxu0
        %v3453 = vpop.f32.mrb[0].mxu0
        %3454 = vdwg.mxu0
        %v3456 = vsel %vm1293, %v3126, 0
        %v3459 = vsel %vm1293, %v3186, 0
        %3461 = vmatprep.subr.bf16.mxu0 0
        %3462 = vmatpush1.bf16.xpose.msra.mxu0 %v3459
        %3463 = vmatprep.subr.bf16.mxu0 0
        %3464 = vmatpush1.bf16.xpose.msra.mxu0 0
        %3465 = vmatprep.subr.bf16.mxu0 0
        %3466 = vmatpush1.bf16.xpose.msra.mxu0 0
        %3467 = vmatprep.subr.bf16.mxu0 0
        %3468 = vmatpush1.bf16.xpose.msra.mxu0 0
        %3469 = vmatprep.subr.bf16.mxu0 0
        %3470 = vmatpush1.bf16.xpose.msra.mxu0 0
        %3471 = vmatprep.subr.bf16.mxu0 0
        %3472 = vmatpush1.bf16.xpose.msra.mxu0 0
        %3473 = vmatprep.subr.bf16.mxu0 0
        %3474 = vmatpush1.bf16.xpose.msra.mxu0 0
        %3475 = vmatprep.subr.bf16.mxu0 0
        %3476 = vmatpush1.bf16.xpose.msra.mxu0 0
        %3477 = vmatprep.subr.bf16.mxu0 0
        %3478 = vmatpush1.bf16.xpose.msra.mxu0 0
        %3479 = vmatprep.subr.bf16.mxu0 0
        %3480 = vmatpush1.bf16.xpose.msra.mxu0 0
        %3481 = vmatprep.subr.bf16.mxu0 0
        %3482 = vmatpush1.bf16.xpose.msra.mxu0 0
        %3483 = vmatprep.subr.bf16.mxu0 0
        %3484 = vmatpush1.bf16.xpose.msra.mxu0 0
        %3485 = vmatprep.subr.bf16.mxu0 0
        %3486 = vmatpush1.bf16.xpose.msra.mxu0 0
        %3487 = vmatprep.subr.bf16.mxu0 0
        %3488 = vmatpush1.bf16.xpose.msra.mxu0 0
        %3489 = vmatprep.subr.bf16.mxu0 0
        %3490 = vmatpush1.bf16.xpose.msra.mxu0 0
        %3491 = vmatprep.subr.bf16.mxu0 0
        %3492 = vmatpush1.bf16.xpose.msra.mxu0 0
        %3493 = vmatprep.mubr.bf16.mxu0 0
        %3494 = vmatmul.mubr.bf16.gmra.mrb[0].mxu0 %v3456
        %v3495 = vpop.f32.mrb[0].mxu0
        %v3496 = vadd.f32 0.0, %v3495
        %v3497 = vpop.f32.mrb[0].mxu0
        %v3498 = vpop.f32.mrb[0].mxu0
        %v3499 = vpop.f32.mrb[0].mxu0
        %3500 = vdwg.mxu0
        %v3502 = vsel %vm1293, %v3127, 0
        %v3505 = vsel %vm1293, %v3187, 0
        %3507 = vmatprep.subr.bf16.mxu0 0
        %3508 = vmatpush1.bf16.xpose.msra.mxu0 %v3505
        %3509 = vmatprep.subr.bf16.mxu0 0
        %3510 = vmatpush1.bf16.xpose.msra.mxu0 0
        %3511 = vmatprep.subr.bf16.mxu0 0
        %3512 = vmatpush1.bf16.xpose.msra.mxu0 0
        %3513 = vmatprep.subr.bf16.mxu0 0
        %3514 = vmatpush1.bf16.xpose.msra.mxu0 0
        %3515 = vmatprep.subr.bf16.mxu0 0
        %3516 = vmatpush1.bf16.xpose.msra.mxu0 0
        %3517 = vmatprep.subr.bf16.mxu0 0
        %3518 = vmatpush1.bf16.xpose.msra.mxu0 0
        %3519 = vmatprep.subr.bf16.mxu0 0
        %3520 = vmatpush1.bf16.xpose.msra.mxu0 0
        %3521 = vmatprep.subr.bf16.mxu0 0
        %3522 = vmatpush1.bf16.xpose.msra.mxu0 0
        %3523 = vmatprep.subr.bf16.mxu0 0
        %3524 = vmatpush1.bf16.xpose.msra.mxu0 0
        %3525 = vmatprep.subr.bf16.mxu0 0
        %3526 = vmatpush1.bf16.xpose.msra.mxu0 0
        %3527 = vmatprep.subr.bf16.mxu0 0
        %3528 = vmatpush1.bf16.xpose.msra.mxu0 0
        %3529 = vmatprep.subr.bf16.mxu0 0
        %3530 = vmatpush1.bf16.xpose.msra.mxu0 0
        %3531 = vmatprep.subr.bf16.mxu0 0
        %3532 = vmatpush1.bf16.xpose.msra.mxu0 0
        %3533 = vmatprep.subr.bf16.mxu0 0
        %3534 = vmatpush1.bf16.xpose.msra.mxu0 0
        %3535 = vmatprep.subr.bf16.mxu0 0
        %3536 = vmatpush1.bf16.xpose.msra.mxu0 0
        %3537 = vmatprep.subr.bf16.mxu0 0
        %3538 = vmatpush1.bf16.xpose.msra.mxu0 0
        %3539 = vmatprep.mubr.bf16.mxu0 0
        %3540 = vmatmul.mubr.bf16.gmra.mrb[0].mxu0 %v3502
        %v3541 = vpop.f32.mrb[0].mxu0
        %v3542 = vadd.f32 0.0, %v3541
        %v3543 = vpop.f32.mrb[0].mxu0
        %v3544 = vpop.f32.mrb[0].mxu0
        %v3545 = vpop.f32.mrb[0].mxu0
        %3546 = vdwg.mxu0
        %v3548 = vsel %vm1293, %v3128, 0
        %v3551 = vsel %vm1293, %v3188, 0
        %3553 = vmatprep.subr.bf16.mxu0 0
        %3554 = vmatpush1.bf16.xpose.msra.mxu0 %v3551
        %3555 = vmatprep.subr.bf16.mxu0 0
        %3556 = vmatpush1.bf16.xpose.msra.mxu0 0
        %3557 = vmatprep.subr.bf16.mxu0 0
        %3558 = vmatpush1.bf16.xpose.msra.mxu0 0
        %3559 = vmatprep.subr.bf16.mxu0 0
        %3560 = vmatpush1.bf16.xpose.msra.mxu0 0
        %3561 = vmatprep.subr.bf16.mxu0 0
        %3562 = vmatpush1.bf16.xpose.msra.mxu0 0
        %3563 = vmatprep.subr.bf16.mxu0 0
        %3564 = vmatpush1.bf16.xpose.msra.mxu0 0
        %3565 = vmatprep.subr.bf16.mxu0 0
        %3566 = vmatpush1.bf16.xpose.msra.mxu0 0
        %3567 = vmatprep.subr.bf16.mxu0 0
        %3568 = vmatpush1.bf16.xpose.msra.mxu0 0
        %3569 = vmatprep.subr.bf16.mxu0 0
        %3570 = vmatpush1.bf16.xpose.msra.mxu0 0
        %3571 = vmatprep.subr.bf16.mxu0 0
        %3572 = vmatpush1.bf16.xpose.msra.mxu0 0
        %3573 = vmatprep.subr.bf16.mxu0 0
        %3574 = vmatpush1.bf16.xpose.msra.mxu0 0
        %3575 = vmatprep.subr.bf16.mxu0 0
        %3576 = vmatpush1.bf16.xpose.msra.mxu0 0
        %3577 = vmatprep.subr.bf16.mxu0 0
        %3578 = vmatpush1.bf16.xpose.msra.mxu0 0
        %3579 = vmatprep.subr.bf16.mxu0 0
        %3580 = vmatpush1.bf16.xpose.msra.mxu0 0
        %3581 = vmatprep.subr.bf16.mxu0 0
        %3582 = vmatpush1.bf16.xpose.msra.mxu0 0
        %3583 = vmatprep.subr.bf16.mxu0 0
        %3584 = vmatpush1.bf16.xpose.msra.mxu0 0
        %3585 = vmatprep.mubr.bf16.mxu0 0
        %3586 = vmatmul.mubr.bf16.gmra.mrb[0].mxu0 %v3548
        %v3587 = vpop.f32.mrb[0].mxu0
        %v3588 = vadd.f32 0.0, %v3587
        %v3589 = vpop.f32.mrb[0].mxu0
        %v3590 = vpop.f32.mrb[0].mxu0
        %v3591 = vpop.f32.mrb[0].mxu0
        %3592 = vdwg.mxu0
        %v3594 = vsel %vm1293, %v3129, 0
        %v3597 = vsel %vm1293, %v3189, 0
        %3599 = vmatprep.subr.bf16.mxu0 0
        %3600 = vmatpush1.bf16.xpose.msra.mxu0 %v3597
        %3601 = vmatprep.subr.bf16.mxu0 0
        %3602 = vmatpush1.bf16.xpose.msra.mxu0 0
        %3603 = vmatprep.subr.bf16.mxu0 0
        %3604 = vmatpush1.bf16.xpose.msra.mxu0 0
        %3605 = vmatprep.subr.bf16.mxu0 0
        %3606 = vmatpush1.bf16.xpose.msra.mxu0 0
        %3607 = vmatprep.subr.bf16.mxu0 0
        %3608 = vmatpush1.bf16.xpose.msra.mxu0 0
        %3609 = vmatprep.subr.bf16.mxu0 0
        %3610 = vmatpush1.bf16.xpose.msra.mxu0 0
        %3611 = vmatprep.subr.bf16.mxu0 0
        %3612 = vmatpush1.bf16.xpose.msra.mxu0 0
        %3613 = vmatprep.subr.bf16.mxu0 0
        %3614 = vmatpush1.bf16.xpose.msra.mxu0 0
        %3615 = vmatprep.subr.bf16.mxu0 0
        %3616 = vmatpush1.bf16.xpose.msra.mxu0 0
        %3617 = vmatprep.subr.bf16.mxu0 0
        %3618 = vmatpush1.bf16.xpose.msra.mxu0 0
        %3619 = vmatprep.subr.bf16.mxu0 0
        %3620 = vmatpush1.bf16.xpose.msra.mxu0 0
        %3621 = vmatprep.subr.bf16.mxu0 0
        %3622 = vmatpush1.bf16.xpose.msra.mxu0 0
        %3623 = vmatprep.subr.bf16.mxu0 0
        %3624 = vmatpush1.bf16.xpose.msra.mxu0 0
        %3625 = vmatprep.subr.bf16.mxu0 0
        %3626 = vmatpush1.bf16.xpose.msra.mxu0 0
        %3627 = vmatprep.subr.bf16.mxu0 0
        %3628 = vmatpush1.bf16.xpose.msra.mxu0 0
        %3629 = vmatprep.subr.bf16.mxu0 0
        %3630 = vmatpush1.bf16.xpose.msra.mxu0 0
        %3631 = vmatprep.mubr.bf16.mxu0 0
        %3632 = vmatmul.mubr.bf16.gmra.mrb[0].mxu0 %v3594
        %v3633 = vpop.f32.mrb[0].mxu0
        %v3634 = vadd.f32 0.0, %v3633
        %v3635 = vpop.f32.mrb[0].mxu0
        %v3636 = vpop.f32.mrb[0].mxu0
        %v3637 = vpop.f32.mrb[0].mxu0
        %3638 = vdwg.mxu0
        %v3640 = vsel %vm1293, %v3130, 0
        %v3643 = vsel %vm1293, %v3190, 0
        %3645 = vmatprep.subr.bf16.mxu0 0
        %3646 = vmatpush1.bf16.xpose.msra.mxu0 %v3643
        %3647 = vmatprep.subr.bf16.mxu0 0
        %3648 = vmatpush1.bf16.xpose.msra.mxu0 0
        %3649 = vmatprep.subr.bf16.mxu0 0
        %3650 = vmatpush1.bf16.xpose.msra.mxu0 0
        %3651 = vmatprep.subr.bf16.mxu0 0
        %3652 = vmatpush1.bf16.xpose.msra.mxu0 0
        %3653 = vmatprep.subr.bf16.mxu0 0
        %3654 = vmatpush1.bf16.xpose.msra.mxu0 0
        %3655 = vmatprep.subr.bf16.mxu0 0
        %3656 = vmatpush1.bf16.xpose.msra.mxu0 0
        %3657 = vmatprep.subr.bf16.mxu0 0
        %3658 = vmatpush1.bf16.xpose.msra.mxu0 0
        %3659 = vmatprep.subr.bf16.mxu0 0
        %3660 = vmatpush1.bf16.xpose.msra.mxu0 0
        %3661 = vmatprep.subr.bf16.mxu0 0
        %3662 = vmatpush1.bf16.xpose.msra.mxu0 0
        %3663 = vmatprep.subr.bf16.mxu0 0
        %3664 = vmatpush1.bf16.xpose.msra.mxu0 0
        %3665 = vmatprep.subr.bf16.mxu0 0
        %3666 = vmatpush1.bf16.xpose.msra.mxu0 0
        %3667 = vmatprep.subr.bf16.mxu0 0
        %3668 = vmatpush1.bf16.xpose.msra.mxu0 0
        %3669 = vmatprep.subr.bf16.mxu0 0
        %3670 = vmatpush1.bf16.xpose.msra.mxu0 0
        %3671 = vmatprep.subr.bf16.mxu0 0
        %3672 = vmatpush1.bf16.xpose.msra.mxu0 0
        %3673 = vmatprep.subr.bf16.mxu0 0
        %3674 = vmatpush1.bf16.xpose.msra.mxu0 0
        %3675 = vmatprep.subr.bf16.mxu0 0
        %3676 = vmatpush1.bf16.xpose.msra.mxu0 0
        %3677 = vmatprep.mubr.bf16.mxu0 0
        %3678 = vmatmul.mubr.bf16.gmra.mrb[0].mxu0 %v3640
        %v3679 = vpop.f32.mrb[0].mxu0
        %v3680 = vadd.f32 0.0, %v3679
        %v3681 = vpop.f32.mrb[0].mxu0
        %v3682 = vpop.f32.mrb[0].mxu0
        %v3683 = vpop.f32.mrb[0].mxu0
        %3684 = vdwg.mxu0
        %v3686 = vsel %vm1293, %v3131, 0
        %v3689 = vsel %vm1293, %v3191, 0
        %3691 = vmatprep.subr.bf16.mxu0 0
        %3692 = vmatpush1.bf16.xpose.msra.mxu0 %v3689
        %3693 = vmatprep.subr.bf16.mxu0 0
        %3694 = vmatpush1.bf16.xpose.msra.mxu0 0
        %3695 = vmatprep.subr.bf16.mxu0 0
        %3696 = vmatpush1.bf16.xpose.msra.mxu0 0
        %3697 = vmatprep.subr.bf16.mxu0 0
        %3698 = vmatpush1.bf16.xpose.msra.mxu0 0
        %3699 = vmatprep.subr.bf16.mxu0 0
        %3700 = vmatpush1.bf16.xpose.msra.mxu0 0
        %3701 = vmatprep.subr.bf16.mxu0 0
        %3702 = vmatpush1.bf16.xpose.msra.mxu0 0
        %3703 = vmatprep.subr.bf16.mxu0 0
        %3704 = vmatpush1.bf16.xpose.msra.mxu0 0
        %3705 = vmatprep.subr.bf16.mxu0 0
        %3706 = vmatpush1.bf16.xpose.msra.mxu0 0
        %3707 = vmatprep.subr.bf16.mxu0 0
        %3708 = vmatpush1.bf16.xpose.msra.mxu0 0
        %3709 = vmatprep.subr.bf16.mxu0 0
        %3710 = vmatpush1.bf16.xpose.msra.mxu0 0
        %3711 = vmatprep.subr.bf16.mxu0 0
        %3712 = vmatpush1.bf16.xpose.msra.mxu0 0
        %3713 = vmatprep.subr.bf16.mxu0 0
        %3714 = vmatpush1.bf16.xpose.msra.mxu0 0
        %3715 = vmatprep.subr.bf16.mxu0 0
        %3716 = vmatpush1.bf16.xpose.msra.mxu0 0
        %3717 = vmatprep.subr.bf16.mxu0 0
        %3718 = vmatpush1.bf16.xpose.msra.mxu0 0
        %3719 = vmatprep.subr.bf16.mxu0 0
        %3720 = vmatpush1.bf16.xpose.msra.mxu0 0
        %3721 = vmatprep.subr.bf16.mxu0 0
        %3722 = vmatpush1.bf16.xpose.msra.mxu0 0
        %3723 = vmatprep.mubr.bf16.mxu0 0
        %3724 = vmatmul.mubr.bf16.gmra.mrb[0].mxu0 %v3686
        %v3725 = vpop.f32.mrb[0].mxu0
        %v3726 = vadd.f32 0.0, %v3725
        %v3727 = vpop.f32.mrb[0].mxu0
        %v3728 = vpop.f32.mrb[0].mxu0
        %v3729 = vpop.f32.mrb[0].mxu0
        %3730 = vdwg.mxu0
        %v3732 = vsel %vm1293, %v3132, 0
        %v3735 = vsel %vm1293, %v3192, 0
        %3737 = vmatprep.subr.bf16.mxu0 0
        %3738 = vmatpush1.bf16.xpose.msra.mxu0 %v3735
        %3739 = vmatprep.subr.bf16.mxu0 0
        %3740 = vmatpush1.bf16.xpose.msra.mxu0 0
        %3741 = vmatprep.subr.bf16.mxu0 0
        %3742 = vmatpush1.bf16.xpose.msra.mxu0 0
        %3743 = vmatprep.subr.bf16.mxu0 0
        %3744 = vmatpush1.bf16.xpose.msra.mxu0 0
        %3745 = vmatprep.subr.bf16.mxu0 0
        %3746 = vmatpush1.bf16.xpose.msra.mxu0 0
        %3747 = vmatprep.subr.bf16.mxu0 0
        %3748 = vmatpush1.bf16.xpose.msra.mxu0 0
        %3749 = vmatprep.subr.bf16.mxu0 0
        %3750 = vmatpush1.bf16.xpose.msra.mxu0 0
        %3751 = vmatprep.subr.bf16.mxu0 0
        %3752 = vmatpush1.bf16.xpose.msra.mxu0 0
        %3753 = vmatprep.subr.bf16.mxu0 0
        %3754 = vmatpush1.bf16.xpose.msra.mxu0 0
        %3755 = vmatprep.subr.bf16.mxu0 0
        %3756 = vmatpush1.bf16.xpose.msra.mxu0 0
        %3757 = vmatprep.subr.bf16.mxu0 0
        %3758 = vmatpush1.bf16.xpose.msra.mxu0 0
        %3759 = vmatprep.subr.bf16.mxu0 0
        %3760 = vmatpush1.bf16.xpose.msra.mxu0 0
        %3761 = vmatprep.subr.bf16.mxu0 0
        %3762 = vmatpush1.bf16.xpose.msra.mxu0 0
        %3763 = vmatprep.subr.bf16.mxu0 0
        %3764 = vmatpush1.bf16.xpose.msra.mxu0 0
        %3765 = vmatprep.subr.bf16.mxu0 0
        %3766 = vmatpush1.bf16.xpose.msra.mxu0 0
        %3767 = vmatprep.subr.bf16.mxu0 0
        %3768 = vmatpush1.bf16.xpose.msra.mxu0 0
        %3769 = vmatprep.mubr.bf16.mxu0 0
        %3770 = vmatmul.mubr.bf16.gmra.mrb[0].mxu0 %v3732
        %v3771 = vpop.f32.mrb[0].mxu0
        %v3772 = vadd.f32 0.0, %v3771
        %v3773 = vpop.f32.mrb[0].mxu0
        %v3774 = vpop.f32.mrb[0].mxu0
        %v3775 = vpop.f32.mrb[0].mxu0
        %3776 = vdwg.mxu0
        %v3778 = vsel %vm1293, %v3133, 0
        %v3781 = vsel %vm1293, %v3193, 0
        %3783 = vmatprep.subr.bf16.mxu0 0
        %3784 = vmatpush1.bf16.xpose.msra.mxu0 %v3781
        %3785 = vmatprep.subr.bf16.mxu0 0
        %3786 = vmatpush1.bf16.xpose.msra.mxu0 0
        %3787 = vmatprep.subr.bf16.mxu0 0
        %3788 = vmatpush1.bf16.xpose.msra.mxu0 0
        %3789 = vmatprep.subr.bf16.mxu0 0
        %3790 = vmatpush1.bf16.xpose.msra.mxu0 0
        %3791 = vmatprep.subr.bf16.mxu0 0
        %3792 = vmatpush1.bf16.xpose.msra.mxu0 0
        %3793 = vmatprep.subr.bf16.mxu0 0
        %3794 = vmatpush1.bf16.xpose.msra.mxu0 0
        %3795 = vmatprep.subr.bf16.mxu0 0
        %3796 = vmatpush1.bf16.xpose.msra.mxu0 0
        %3797 = vmatprep.subr.bf16.mxu0 0
        %3798 = vmatpush1.bf16.xpose.msra.mxu0 0
        %3799 = vmatprep.subr.bf16.mxu0 0
        %3800 = vmatpush1.bf16.xpose.msra.mxu0 0
        %3801 = vmatprep.subr.bf16.mxu0 0
        %3802 = vmatpush1.bf16.xpose.msra.mxu0 0
        %3803 = vmatprep.subr.bf16.mxu0 0
        %3804 = vmatpush1.bf16.xpose.msra.mxu0 0
        %3805 = vmatprep.subr.bf16.mxu0 0
        %3806 = vmatpush1.bf16.xpose.msra.mxu0 0
        %3807 = vmatprep.subr.bf16.mxu0 0
        %3808 = vmatpush1.bf16.xpose.msra.mxu0 0
        %3809 = vmatprep.subr.bf16.mxu0 0
        %3810 = vmatpush1.bf16.xpose.msra.mxu0 0
        %3811 = vmatprep.subr.bf16.mxu0 0
        %3812 = vmatpush1.bf16.xpose.msra.mxu0 0
        %3813 = vmatprep.subr.bf16.mxu0 0
        %3814 = vmatpush1.bf16.xpose.msra.mxu0 0
        %3815 = vmatprep.mubr.bf16.mxu0 0
        %3816 = vmatmul.mubr.bf16.gmra.mrb[0].mxu0 %v3778
        %v3817 = vpop.f32.mrb[0].mxu0
        %v3818 = vadd.f32 0.0, %v3817
        %v3819 = vpop.f32.mrb[0].mxu0
        %v3820 = vpop.f32.mrb[0].mxu0
        %v3821 = vpop.f32.mrb[0].mxu0
        %3822 = vdwg.mxu0
        %v3824 = vsel %vm1293, %v3134, 0
        %v3827 = vsel %vm1293, %v3194, 0
        %3829 = vmatprep.subr.bf16.mxu0 0
        %3830 = vmatpush1.bf16.xpose.msra.mxu0 %v3827
        %3831 = vmatprep.subr.bf16.mxu0 0
        %3832 = vmatpush1.bf16.xpose.msra.mxu0 0
        %3833 = vmatprep.subr.bf16.mxu0 0
        %3834 = vmatpush1.bf16.xpose.msra.mxu0 0
        %3835 = vmatprep.subr.bf16.mxu0 0
        %3836 = vmatpush1.bf16.xpose.msra.mxu0 0
        %3837 = vmatprep.subr.bf16.mxu0 0
        %3838 = vmatpush1.bf16.xpose.msra.mxu0 0
        %3839 = vmatprep.subr.bf16.mxu0 0
        %3840 = vmatpush1.bf16.xpose.msra.mxu0 0
        %3841 = vmatprep.subr.bf16.mxu0 0
        %3842 = vmatpush1.bf16.xpose.msra.mxu0 0
        %3843 = vmatprep.subr.bf16.mxu0 0
        %3844 = vmatpush1.bf16.xpose.msra.mxu0 0
        %3845 = vmatprep.subr.bf16.mxu0 0
        %3846 = vmatpush1.bf16.xpose.msra.mxu0 0
        %3847 = vmatprep.subr.bf16.mxu0 0
        %3848 = vmatpush1.bf16.xpose.msra.mxu0 0
        %3849 = vmatprep.subr.bf16.mxu0 0
        %3850 = vmatpush1.bf16.xpose.msra.mxu0 0
        %3851 = vmatprep.subr.bf16.mxu0 0
        %3852 = vmatpush1.bf16.xpose.msra.mxu0 0
        %3853 = vmatprep.subr.bf16.mxu0 0
        %3854 = vmatpush1.bf16.xpose.msra.mxu0 0
        %3855 = vmatprep.subr.bf16.mxu0 0
        %3856 = vmatpush1.bf16.xpose.msra.mxu0 0
        %3857 = vmatprep.subr.bf16.mxu0 0
        %3858 = vmatpush1.bf16.xpose.msra.mxu0 0
        %3859 = vmatprep.subr.bf16.mxu0 0
        %3860 = vmatpush1.bf16.xpose.msra.mxu0 0
        %3861 = vmatprep.mubr.bf16.mxu0 0
        %3862 = vmatmul.mubr.bf16.gmra.mrb[0].mxu0 %v3824
        %v3863 = vpop.f32.mrb[0].mxu0
        %v3864 = vadd.f32 0.0, %v3863
        %v3865 = vpop.f32.mrb[0].mxu0
        %v3866 = vpop.f32.mrb[0].mxu0
        %v3867 = vpop.f32.mrb[0].mxu0
        %3868 = vdwg.mxu0
        %v3870 = vsel %vm1293, %v3135, 0
        %v3873 = vsel %vm1293, %v3195, 0
        %3875 = vmatprep.subr.bf16.mxu0 0
        %3876 = vmatpush1.bf16.xpose.msra.mxu0 %v3873
        %3877 = vmatprep.subr.bf16.mxu0 0
        %3878 = vmatpush1.bf16.xpose.msra.mxu0 0
        %3879 = vmatprep.subr.bf16.mxu0 0
        %3880 = vmatpush1.bf16.xpose.msra.mxu0 0
        %3881 = vmatprep.subr.bf16.mxu0 0
        %3882 = vmatpush1.bf16.xpose.msra.mxu0 0
        %3883 = vmatprep.subr.bf16.mxu0 0
        %3884 = vmatpush1.bf16.xpose.msra.mxu0 0
        %3885 = vmatprep.subr.bf16.mxu0 0
        %3886 = vmatpush1.bf16.xpose.msra.mxu0 0
        %3887 = vmatprep.subr.bf16.mxu0 0
        %3888 = vmatpush1.bf16.xpose.msra.mxu0 0
        %3889 = vmatprep.subr.bf16.mxu0 0
        %3890 = vmatpush1.bf16.xpose.msra.mxu0 0
        %3891 = vmatprep.subr.bf16.mxu0 0
        %3892 = vmatpush1.bf16.xpose.msra.mxu0 0
        %3893 = vmatprep.subr.bf16.mxu0 0
        %3894 = vmatpush1.bf16.xpose.msra.mxu0 0
        %3895 = vmatprep.subr.bf16.mxu0 0
        %3896 = vmatpush1.bf16.xpose.msra.mxu0 0
        %3897 = vmatprep.subr.bf16.mxu0 0
        %3898 = vmatpush1.bf16.xpose.msra.mxu0 0
        %3899 = vmatprep.subr.bf16.mxu0 0
        %3900 = vmatpush1.bf16.xpose.msra.mxu0 0
        %3901 = vmatprep.subr.bf16.mxu0 0
        %3902 = vmatpush1.bf16.xpose.msra.mxu0 0
        %3903 = vmatprep.subr.bf16.mxu0 0
        %3904 = vmatpush1.bf16.xpose.msra.mxu0 0
        %3905 = vmatprep.subr.bf16.mxu0 0
        %3906 = vmatpush1.bf16.xpose.msra.mxu0 0
        %3907 = vmatprep.mubr.bf16.mxu0 0
        %3908 = vmatmul.mubr.bf16.gmra.mrb[0].mxu0 %v3870
        %v3909 = vpop.f32.mrb[0].mxu0
        %v3910 = vadd.f32 0.0, %v3909
        %v3911 = vpop.f32.mrb[0].mxu0
        %v3912 = vpop.f32.mrb[0].mxu0
        %v3913 = vpop.f32.mrb[0].mxu0
        %3914 = vdwg.mxu0
        %v3916 = vsel %vm1293, %v3136, 0
        %v3919 = vsel %vm1293, %v3196, 0
        %3921 = vmatprep.subr.bf16.mxu0 0
        %3922 = vmatpush1.bf16.xpose.msra.mxu0 %v3919
        %3923 = vmatprep.subr.bf16.mxu0 0
        %3924 = vmatpush1.bf16.xpose.msra.mxu0 0
        %3925 = vmatprep.subr.bf16.mxu0 0
        %3926 = vmatpush1.bf16.xpose.msra.mxu0 0
        %3927 = vmatprep.subr.bf16.mxu0 0
        %3928 = vmatpush1.bf16.xpose.msra.mxu0 0
        %3929 = vmatprep.subr.bf16.mxu0 0
        %3930 = vmatpush1.bf16.xpose.msra.mxu0 0
        %3931 = vmatprep.subr.bf16.mxu0 0
        %3932 = vmatpush1.bf16.xpose.msra.mxu0 0
        %3933 = vmatprep.subr.bf16.mxu0 0
        %3934 = vmatpush1.bf16.xpose.msra.mxu0 0
        %3935 = vmatprep.subr.bf16.mxu0 0
        %3936 = vmatpush1.bf16.xpose.msra.mxu0 0
        %3937 = vmatprep.subr.bf16.mxu0 0
        %3938 = vmatpush1.bf16.xpose.msra.mxu0 0
        %3939 = vmatprep.subr.bf16.mxu0 0
        %3940 = vmatpush1.bf16.xpose.msra.mxu0 0
        %3941 = vmatprep.subr.bf16.mxu0 0
        %3942 = vmatpush1.bf16.xpose.msra.mxu0 0
        %3943 = vmatprep.subr.bf16.mxu0 0
        %3944 = vmatpush1.bf16.xpose.msra.mxu0 0
        %3945 = vmatprep.subr.bf16.mxu0 0
        %3946 = vmatpush1.bf16.xpose.msra.mxu0 0
        %3947 = vmatprep.subr.bf16.mxu0 0
        %3948 = vmatpush1.bf16.xpose.msra.mxu0 0
        %3949 = vmatprep.subr.bf16.mxu0 0
        %3950 = vmatpush1.bf16.xpose.msra.mxu0 0
        %3951 = vmatprep.subr.bf16.mxu0 0
        %3952 = vmatpush1.bf16.xpose.msra.mxu0 0
        %3953 = vmatprep.mubr.bf16.mxu0 0
        %3954 = vmatmul.mubr.bf16.gmra.mrb[0].mxu0 %v3916
        %v3955 = vpop.f32.mrb[0].mxu0
        %v3956 = vadd.f32 0.0, %v3955
        %v3957 = vpop.f32.mrb[0].mxu0
        %v3958 = vpop.f32.mrb[0].mxu0
        %v3959 = vpop.f32.mrb[0].mxu0
        %3960 = vdwg.mxu0
        %vm3961 = vcmask 64512
        %v3962 = vsel %vm3961, %v3266, -inf
        %3963 = vmax.xlane.f32.xlu0 %v3962
        %v3964 = vpop.xlane.xlu0 %3963
        %v3965 = vsel %vm3961, %v3312, -inf
        %3966 = vmax.xlane.f32.xlu0 %v3965
        %v3967 = vpop.xlane.xlu0 %3966
        %v3968 = vsel %vm3961, %v3358, -inf
        %3969 = vmax.xlane.f32.xlu0 %v3968
        %v3970 = vpop.xlane.xlu0 %3969
        %v3971 = vsel %vm3961, %v3404, -inf
        %3972 = vmax.xlane.f32.xlu0 %v3971
        %v3973 = vpop.xlane.xlu0 %3972
        %v3974 = vsel %vm3961, %v3450, -inf
        %3975 = vmax.xlane.f32.xlu0 %v3974
        %v3976 = vpop.xlane.xlu0 %3975
        %v3977 = vsel %vm3961, %v3496, -inf
        %3978 = vmax.xlane.f32.xlu0 %v3977
        %v3979 = vpop.xlane.xlu0 %3978
        %v3980 = vsel %vm3961, %v3542, -inf
        %3981 = vmax.xlane.f32.xlu0 %v3980
        %v3982 = vpop.xlane.xlu0 %3981
        %v3983 = vsel %vm3961, %v3588, -inf
        %3984 = vmax.xlane.f32.xlu0 %v3983
        %v3985 = vpop.xlane.xlu0 %3984
        %v3986 = vsel %vm3961, %v3634, -inf
        %3987 = vmax.xlane.f32.xlu0 %v3986
        %v3988 = vpop.xlane.xlu0 %3987
        %v3989 = vsel %vm3961, %v3680, -inf
        %3990 = vmax.xlane.f32.xlu0 %v3989
        %v3991 = vpop.xlane.xlu0 %3990
        %v3992 = vsel %vm3961, %v3726, -inf
        %3993 = vmax.xlane.f32.xlu0 %v3992
        %v3994 = vpop.xlane.xlu0 %3993
        %v3995 = vsel %vm3961, %v3772, -inf
        %3996 = vmax.xlane.f32.xlu0 %v3995
        %v3997 = vpop.xlane.xlu0 %3996
        %v3998 = vsel %vm3961, %v3818, -inf
        %3999 = vmax.xlane.f32.xlu0 %v3998
        %v4000 = vpop.xlane.xlu0 %3999
        %v4001 = vsel %vm3961, %v3864, -inf
        %4002 = vmax.xlane.f32.xlu0 %v4001
        %v4003 = vpop.xlane.xlu0 %4002
        %v4004 = vsel %vm3961, %v3910, -inf
        %4005 = vmax.xlane.f32.xlu0 %v4004
        %v4006 = vpop.xlane.xlu0 %4005
        %v4007 = vsel %vm3961, %v3956, -inf
        %4008 = vmax.xlane.f32.xlu0 %v4007
        %v4009 = vpop.xlane.xlu0 %4008
        %v4010 = vsub.f32 %v3266, %v3964
        %v4011 = vsub.f32 %v3312, %v3967
        %v4012 = vsub.f32 %v3358, %v3970
        %v4013 = vsub.f32 %v3404, %v3973
        %v4014 = vsub.f32 %v3450, %v3976
        %v4015 = vsub.f32 %v3496, %v3979
        %v4016 = vsub.f32 %v3542, %v3982
        %v4017 = vsub.f32 %v3588, %v3985
        %v4018 = vsub.f32 %v3634, %v3988
        %v4019 = vsub.f32 %v3680, %v3991
        %v4020 = vsub.f32 %v3726, %v3994
        %v4021 = vsub.f32 %v3772, %v3997
        %v4022 = vsub.f32 %v3818, %v4000
        %v4023 = vsub.f32 %v3864, %v4003
        %v4024 = vsub.f32 %v3910, %v4006
        %v4025 = vsub.f32 %v3956, %v4009
        %v4026 = vmul.f32 %v4010, 1.442695
        %v4027 = vpow.pop %v4026
        %v4028 = vmul.f32 %v4011, 1.442695
        %v4029 = vpow.pop %v4028
        %v4030 = vmul.f32 %v4012, 1.442695
        %v4031 = vpow.pop %v4030
        %v4032 = vmul.f32 %v4013, 1.442695
        %v4033 = vpow.pop %v4032
        %v4034 = vmul.f32 %v4014, 1.442695
        %v4035 = vpow.pop %v4034
        %v4036 = vmul.f32 %v4015, 1.442695
        %v4037 = vpow.pop %v4036
        %v4038 = vmul.f32 %v4016, 1.442695
        %v4039 = vpow.pop %v4038
        %v4040 = vmul.f32 %v4017, 1.442695
        %v4041 = vpow.pop %v4040
        %v4042 = vmul.f32 %v4018, 1.442695
        %v4043 = vpow.pop %v4042
        %v4044 = vmul.f32 %v4019, 1.442695
        %v4045 = vpow.pop %v4044
        %v4046 = vmul.f32 %v4020, 1.442695
        %v4047 = vpow.pop %v4046
        %v4048 = vmul.f32 %v4021, 1.442695
        %v4049 = vpow.pop %v4048
        %v4050 = vmul.f32 %v4022, 1.442695
        %v4051 = vpow.pop %v4050
        %v4052 = vmul.f32 %v4023, 1.442695
        %v4053 = vpow.pop %v4052
        %v4054 = vmul.f32 %v4024, 1.442695
        %v4055 = vpow.pop %v4054
        %v4056 = vmul.f32 %v4025, 1.442695
        %v4057 = vpow.pop %v4056
        %v4058 = vsel %vm3961, %v4027, 0.0
        %4059 = vadd.xlane.f32.xlu0 %v4058
        %v4060 = vpop.xlane.xlu0 %4059
        %v4061 = vsel %vm3961, %v4029, 0.0
        %4062 = vadd.xlane.f32.xlu0 %v4061
        %v4063 = vpop.xlane.xlu0 %4062
        %v4064 = vsel %vm3961, %v4031, 0.0
        %4065 = vadd.xlane.f32.xlu0 %v4064
        %v4066 = vpop.xlane.xlu0 %4065
        %v4067 = vsel %vm3961, %v4033, 0.0
        %4068 = vadd.xlane.f32.xlu0 %v4067
        %v4069 = vpop.xlane.xlu0 %4068
        %v4070 = vsel %vm3961, %v4035, 0.0
        %4071 = vadd.xlane.f32.xlu0 %v4070
        %v4072 = vpop.xlane.xlu0 %4071
        %v4073 = vsel %vm3961, %v4037, 0.0
        %4074 = vadd.xlane.f32.xlu0 %v4073
        %v4075 = vpop.xlane.xlu0 %4074
        %v4076 = vsel %vm3961, %v4039, 0.0
        %4077 = vadd.xlane.f32.xlu0 %v4076
        %v4078 = vpop.xlane.xlu0 %4077
        %v4079 = vsel %vm3961, %v4041, 0.0
        %4080 = vadd.xlane.f32.xlu0 %v4079
        %v4081 = vpop.xlane.xlu0 %4080
        %v4082 = vsel %vm3961, %v4043, 0.0
        %4083 = vadd.xlane.f32.xlu0 %v4082
        %v4084 = vpop.xlane.xlu0 %4083
        %v4085 = vsel %vm3961, %v4045, 0.0
        %4086 = vadd.xlane.f32.xlu0 %v4085
        %v4087 = vpop.xlane.xlu0 %4086
        %v4088 = vsel %vm3961, %v4047, 0.0
        %4089 = vadd.xlane.f32.xlu0 %v4088
        %v4090 = vpop.xlane.xlu0 %4089
        %v4091 = vsel %vm3961, %v4049, 0.0
        %4092 = vadd.xlane.f32.xlu0 %v4091
        %v4093 = vpop.xlane.xlu0 %4092
        %v4094 = vsel %vm3961, %v4051, 0.0
        %4095 = vadd.xlane.f32.xlu0 %v4094
        %v4096 = vpop.xlane.xlu0 %4095
        %v4097 = vsel %vm3961, %v4053, 0.0
        %4098 = vadd.xlane.f32.xlu0 %v4097
        %v4099 = vpop.xlane.xlu0 %4098
        %v4100 = vsel %vm3961, %v4055, 0.0
        %4101 = vadd.xlane.f32.xlu0 %v4100
        %v4102 = vpop.xlane.xlu0 %4101
        %v4103 = vsel %vm3961, %v4057, 0.0
        %4104 = vadd.xlane.f32.xlu0 %v4103
        %v4105 = vpop.xlane.xlu0 %4104
        %v4106 = vrcp.pop %v4060
        %v4107 = vrcp.pop %v4063
        %v4108 = vrcp.pop %v4066
        %v4109 = vrcp.pop %v4069
        %v4110 = vrcp.pop %v4072
        %v4111 = vrcp.pop %v4075
        %v4112 = vrcp.pop %v4078
        %v4113 = vrcp.pop %v4081
        %v4114 = vrcp.pop %v4084
        %v4115 = vrcp.pop %v4087
        %v4116 = vrcp.pop %v4090
        %v4117 = vrcp.pop %v4093
        %v4118 = vrcp.pop %v4096
        %v4119 = vrcp.pop %v4099
        %v4120 = vrcp.pop %v4102
        %v4121 = vrcp.pop %v4105
        %v4122 = vmul.f32 %v4027, %v4106
        %v4123 = vmul.f32 %v4029, %v4107
        %v4124 = vmul.f32 %v4031, %v4108
        %v4125 = vmul.f32 %v4033, %v4109
        %v4126 = vmul.f32 %v4035, %v4110
        %v4127 = vmul.f32 %v4037, %v4111
        %v4128 = vmul.f32 %v4039, %v4112
        %v4129 = vmul.f32 %v4041, %v4113
        %v4130 = vmul.f32 %v4043, %v4114
        %v4131 = vmul.f32 %v4045, %v4115
        %v4132 = vmul.f32 %v4047, %v4116
        %v4133 = vmul.f32 %v4049, %v4117
        %v4134 = vmul.f32 %v4051, %v4118
        %v4135 = vmul.f32 %v4053, %v4119
        %v4136 = vmul.f32 %v4055, %v4120
        %v4137 = vmul.f32 %v4057, %v4121
        %v4138 = vstv %s770
        %v4139 = vmul.f32 %v4138, %v4126
        %v4140 = vmul.f32 %v4138, %v4127
        %v4141 = vmul.f32 %v4138, %v4128
        %v4142 = vmul.f32 %v4138, %v4129
        %v4143 = vmul.f32 %v4138, %v4134
        %v4144 = vmul.f32 %v4138, %v4135
        %v4145 = vmul.f32 %v4138, %v4136
        %v4146 = vmul.f32 %v4138, %v4137
        %v4147 = vsub.f32 %v4122, %v4139
        %v4148 = vsub.f32 %v4123, %v4140
        %v4149 = vsub.f32 %v4124, %v4141
        %v4150 = vsub.f32 %v4125, %v4142
        %v4151 = vsub.f32 %v4130, %v4143
        %v4152 = vsub.f32 %v4131, %v4144
        %v4153 = vsub.f32 %v4132, %v4145
        %v4154 = vsub.f32 %v4133, %v4146
        %v4155 = vpack.c.bf16 %v4147, %v4147
        %v4156 = vpack.c.bf16 %v4148, %v4148
        %v4157 = vpack.c.bf16 %v4149, %v4149
        %v4158 = vpack.c.bf16 %v4150, %v4150
        %v4159 = vpack.c.bf16 %v4151, %v4151
        %v4160 = vpack.c.bf16 %v4152, %v4152
        %v4161 = vpack.c.bf16 %v4153, %v4153
        %v4162 = vpack.c.bf16 %v4154, %v4154
        %v4164 = vsel %vm3961, %v4155, 0
        %vm4166 = vcmask 1043456
        %v4168 = vsel %vm4166, %v3217, 0
        %4170 = vmatprep.subr.bf16.mxu0 0
        %4171 = vmatpush1.bf16.msra.mxu0 %v4168
        %4172 = vmatprep.subr.bf16.mxu0 0
        %4173 = vmatpush1.bf16.msra.mxu0 0
        %4174 = vmatprep.subr.bf16.mxu0 0
        %4175 = vmatpush1.bf16.msra.mxu0 0
        %4176 = vmatprep.subr.bf16.mxu0 0
        %4177 = vmatpush1.bf16.msra.mxu0 0
        %4178 = vmatprep.subr.bf16.mxu0 0
        %4179 = vmatpush1.bf16.msra.mxu0 0
        %4180 = vmatprep.subr.bf16.mxu0 0
        %4181 = vmatpush1.bf16.msra.mxu0 0
        %4182 = vmatprep.subr.bf16.mxu0 0
        %4183 = vmatpush1.bf16.msra.mxu0 0
        %4184 = vmatprep.subr.bf16.mxu0 0
        %4185 = vmatpush1.bf16.msra.mxu0 0
        %4186 = vmatprep.subr.bf16.mxu0 0
        %4187 = vmatpush1.bf16.msra.mxu0 0
        %4188 = vmatprep.subr.bf16.mxu0 0
        %4189 = vmatpush1.bf16.msra.mxu0 0
        %4190 = vmatprep.subr.bf16.mxu0 0
        %4191 = vmatpush1.bf16.msra.mxu0 0
        %4192 = vmatprep.subr.bf16.mxu0 0
        %4193 = vmatpush1.bf16.msra.mxu0 0
        %4194 = vmatprep.subr.bf16.mxu0 0
        %4195 = vmatpush1.bf16.msra.mxu0 0
        %4196 = vmatprep.subr.bf16.mxu0 0
        %4197 = vmatpush1.bf16.msra.mxu0 0
        %4198 = vmatprep.subr.bf16.mxu0 0
        %4199 = vmatpush1.bf16.msra.mxu0 0
        %4200 = vmatprep.subr.bf16.mxu0 0
        %4201 = vmatpush1.bf16.msra.mxu0 0
        %4202 = vmatprep.mubr.bf16.mxu0 0
        %4203 = vmatmul.mubr.bf16.gmra.mrb[0].mxu0 %v4164
        %v4204 = vpop.f32.mrb[0].mxu0
        %v4205 = vadd.f32 0.0, %v4204
        %v4206 = vpop.f32.mrb[0].mxu0
        %v4207 = vpop.f32.mrb[0].mxu0
        %v4208 = vpop.f32.mrb[0].mxu0
        %4209 = vdwg.mxu0
        %v4211 = vsel %vm3961, %v4156, 0
        %v4214 = vsel %vm4166, %v3218, 0
        %4216 = vmatprep.subr.bf16.mxu0 0
        %4217 = vmatpush1.bf16.msra.mxu0 %v4214
        %4218 = vmatprep.subr.bf16.mxu0 0
        %4219 = vmatpush1.bf16.msra.mxu0 0
        %4220 = vmatprep.subr.bf16.mxu0 0
        %4221 = vmatpush1.bf16.msra.mxu0 0
        %4222 = vmatprep.subr.bf16.mxu0 0
        %4223 = vmatpush1.bf16.msra.mxu0 0
        %4224 = vmatprep.subr.bf16.mxu0 0
        %4225 = vmatpush1.bf16.msra.mxu0 0
        %4226 = vmatprep.subr.bf16.mxu0 0
        %4227 = vmatpush1.bf16.msra.mxu0 0
        %4228 = vmatprep.subr.bf16.mxu0 0
        %4229 = vmatpush1.bf16.msra.mxu0 0
        %4230 = vmatprep.subr.bf16.mxu0 0
        %4231 = vmatpush1.bf16.msra.mxu0 0
        %4232 = vmatprep.subr.bf16.mxu0 0
        %4233 = vmatpush1.bf16.msra.mxu0 0
        %4234 = vmatprep.subr.bf16.mxu0 0
        %4235 = vmatpush1.bf16.msra.mxu0 0
        %4236 = vmatprep.subr.bf16.mxu0 0
        %4237 = vmatpush1.bf16.msra.mxu0 0
        %4238 = vmatprep.subr.bf16.mxu0 0
        %4239 = vmatpush1.bf16.msra.mxu0 0
        %4240 = vmatprep.subr.bf16.mxu0 0
        %4241 = vmatpush1.bf16.msra.mxu0 0
        %4242 = vmatprep.subr.bf16.mxu0 0
        %4243 = vmatpush1.bf16.msra.mxu0 0
        %4244 = vmatprep.subr.bf16.mxu0 0
        %4245 = vmatpush1.bf16.msra.mxu0 0
        %4246 = vmatprep.subr.bf16.mxu0 0
        %4247 = vmatpush1.bf16.msra.mxu0 0
        %4248 = vmatprep.mubr.bf16.mxu0 0
        %4249 = vmatmul.mubr.bf16.gmra.mrb[0].mxu0 %v4211
        %v4250 = vpop.f32.mrb[0].mxu0
        %v4251 = vadd.f32 0.0, %v4250
        %v4252 = vpop.f32.mrb[0].mxu0
        %v4253 = vpop.f32.mrb[0].mxu0
        %v4254 = vpop.f32.mrb[0].mxu0
        %4255 = vdwg.mxu0
        %v4257 = vsel %vm3961, %v4157, 0
        %v4260 = vsel %vm4166, %v3219, 0
        %4262 = vmatprep.subr.bf16.mxu0 0
        %4263 = vmatpush1.bf16.msra.mxu0 %v4260
        %4264 = vmatprep.subr.bf16.mxu0 0
        %4265 = vmatpush1.bf16.msra.mxu0 0
        %4266 = vmatprep.subr.bf16.mxu0 0
        %4267 = vmatpush1.bf16.msra.mxu0 0
        %4268 = vmatprep.subr.bf16.mxu0 0
        %4269 = vmatpush1.bf16.msra.mxu0 0
        %4270 = vmatprep.subr.bf16.mxu0 0
        %4271 = vmatpush1.bf16.msra.mxu0 0
        %4272 = vmatprep.subr.bf16.mxu0 0
        %4273 = vmatpush1.bf16.msra.mxu0 0
        %4274 = vmatprep.subr.bf16.mxu0 0
        %4275 = vmatpush1.bf16.msra.mxu0 0
        %4276 = vmatprep.subr.bf16.mxu0 0
        %4277 = vmatpush1.bf16.msra.mxu0 0
        %4278 = vmatprep.subr.bf16.mxu0 0
        %4279 = vmatpush1.bf16.msra.mxu0 0
        %4280 = vmatprep.subr.bf16.mxu0 0
        %4281 = vmatpush1.bf16.msra.mxu0 0
        %4282 = vmatprep.subr.bf16.mxu0 0
        %4283 = vmatpush1.bf16.msra.mxu0 0
        %4284 = vmatprep.subr.bf16.mxu0 0
        %4285 = vmatpush1.bf16.msra.mxu0 0
        %4286 = vmatprep.subr.bf16.mxu0 0
        %4287 = vmatpush1.bf16.msra.mxu0 0
        %4288 = vmatprep.subr.bf16.mxu0 0
        %4289 = vmatpush1.bf16.msra.mxu0 0
        %4290 = vmatprep.subr.bf16.mxu0 0
        %4291 = vmatpush1.bf16.msra.mxu0 0
        %4292 = vmatprep.subr.bf16.mxu0 0
        %4293 = vmatpush1.bf16.msra.mxu0 0
        %4294 = vmatprep.mubr.bf16.mxu0 0
        %4295 = vmatmul.mubr.bf16.gmra.mrb[0].mxu0 %v4257
        %v4296 = vpop.f32.mrb[0].mxu0
        %v4297 = vadd.f32 0.0, %v4296
        %v4298 = vpop.f32.mrb[0].mxu0
        %v4299 = vpop.f32.mrb[0].mxu0
        %v4300 = vpop.f32.mrb[0].mxu0
        %4301 = vdwg.mxu0
        %v4303 = vsel %vm3961, %v4158, 0
        %v4306 = vsel %vm4166, %v3220, 0
        %4308 = vmatprep.subr.bf16.mxu0 0
        %4309 = vmatpush1.bf16.msra.mxu0 %v4306
        %4310 = vmatprep.subr.bf16.mxu0 0
        %4311 = vmatpush1.bf16.msra.mxu0 0
        %4312 = vmatprep.subr.bf16.mxu0 0
        %4313 = vmatpush1.bf16.msra.mxu0 0
        %4314 = vmatprep.subr.bf16.mxu0 0
        %4315 = vmatpush1.bf16.msra.mxu0 0
        %4316 = vmatprep.subr.bf16.mxu0 0
        %4317 = vmatpush1.bf16.msra.mxu0 0
        %4318 = vmatprep.subr.bf16.mxu0 0
        %4319 = vmatpush1.bf16.msra.mxu0 0
        %4320 = vmatprep.subr.bf16.mxu0 0
        %4321 = vmatpush1.bf16.msra.mxu0 0
        %4322 = vmatprep.subr.bf16.mxu0 0
        %4323 = vmatpush1.bf16.msra.mxu0 0
        %4324 = vmatprep.subr.bf16.mxu0 0
        %4325 = vmatpush1.bf16.msra.mxu0 0
        %4326 = vmatprep.subr.bf16.mxu0 0
        %4327 = vmatpush1.bf16.msra.mxu0 0
        %4328 = vmatprep.subr.bf16.mxu0 0
        %4329 = vmatpush1.bf16.msra.mxu0 0
        %4330 = vmatprep.subr.bf16.mxu0 0
        %4331 = vmatpush1.bf16.msra.mxu0 0
        %4332 = vmatprep.subr.bf16.mxu0 0
        %4333 = vmatpush1.bf16.msra.mxu0 0
        %4334 = vmatprep.subr.bf16.mxu0 0
        %4335 = vmatpush1.bf16.msra.mxu0 0
        %4336 = vmatprep.subr.bf16.mxu0 0
        %4337 = vmatpush1.bf16.msra.mxu0 0
        %4338 = vmatprep.subr.bf16.mxu0 0
        %4339 = vmatpush1.bf16.msra.mxu0 0
        %4340 = vmatprep.mubr.bf16.mxu0 0
        %4341 = vmatmul.mubr.bf16.gmra.mrb[0].mxu0 %v4303
        %v4342 = vpop.f32.mrb[0].mxu0
        %v4343 = vadd.f32 0.0, %v4342
        %v4344 = vpop.f32.mrb[0].mxu0
        %v4345 = vpop.f32.mrb[0].mxu0
        %v4346 = vpop.f32.mrb[0].mxu0
        %4347 = vdwg.mxu0
        %v4349 = vsel %vm3961, %v4159, 0
        %v4352 = vsel %vm4166, %v3221, 0
        %4354 = vmatprep.subr.bf16.mxu0 0
        %4355 = vmatpush1.bf16.msra.mxu0 %v4352
        %4356 = vmatprep.subr.bf16.mxu0 0
        %4357 = vmatpush1.bf16.msra.mxu0 0
        %4358 = vmatprep.subr.bf16.mxu0 0
        %4359 = vmatpush1.bf16.msra.mxu0 0
        %4360 = vmatprep.subr.bf16.mxu0 0
        %4361 = vmatpush1.bf16.msra.mxu0 0
        %4362 = vmatprep.subr.bf16.mxu0 0
        %4363 = vmatpush1.bf16.msra.mxu0 0
        %4364 = vmatprep.subr.bf16.mxu0 0
        %4365 = vmatpush1.bf16.msra.mxu0 0
        %4366 = vmatprep.subr.bf16.mxu0 0
        %4367 = vmatpush1.bf16.msra.mxu0 0
        %4368 = vmatprep.subr.bf16.mxu0 0
        %4369 = vmatpush1.bf16.msra.mxu0 0
        %4370 = vmatprep.subr.bf16.mxu0 0
        %4371 = vmatpush1.bf16.msra.mxu0 0
        %4372 = vmatprep.subr.bf16.mxu0 0
        %4373 = vmatpush1.bf16.msra.mxu0 0
        %4374 = vmatprep.subr.bf16.mxu0 0
        %4375 = vmatpush1.bf16.msra.mxu0 0
        %4376 = vmatprep.subr.bf16.mxu0 0
        %4377 = vmatpush1.bf16.msra.mxu0 0
        %4378 = vmatprep.subr.bf16.mxu0 0
        %4379 = vmatpush1.bf16.msra.mxu0 0
        %4380 = vmatprep.subr.bf16.mxu0 0
        %4381 = vmatpush1.bf16.msra.mxu0 0
        %4382 = vmatprep.subr.bf16.mxu0 0
        %4383 = vmatpush1.bf16.msra.mxu0 0
        %4384 = vmatprep.subr.bf16.mxu0 0
        %4385 = vmatpush1.bf16.msra.mxu0 0
        %4386 = vmatprep.mubr.bf16.mxu0 0
        %4387 = vmatmul.mubr.bf16.gmra.mrb[0].mxu0 %v4349
        %v4388 = vpop.f32.mrb[0].mxu0
        %v4389 = vadd.f32 0.0, %v4388
        %v4390 = vpop.f32.mrb[0].mxu0
        %v4391 = vpop.f32.mrb[0].mxu0
        %v4392 = vpop.f32.mrb[0].mxu0
        %4393 = vdwg.mxu0
        %v4395 = vsel %vm3961, %v4160, 0
        %v4398 = vsel %vm4166, %v3222, 0
        %4400 = vmatprep.subr.bf16.mxu0 0
        %4401 = vmatpush1.bf16.msra.mxu0 %v4398
        %4402 = vmatprep.subr.bf16.mxu0 0
        %4403 = vmatpush1.bf16.msra.mxu0 0
        %4404 = vmatprep.subr.bf16.mxu0 0
        %4405 = vmatpush1.bf16.msra.mxu0 0
        %4406 = vmatprep.subr.bf16.mxu0 0
        %4407 = vmatpush1.bf16.msra.mxu0 0
        %4408 = vmatprep.subr.bf16.mxu0 0
        %4409 = vmatpush1.bf16.msra.mxu0 0
        %4410 = vmatprep.subr.bf16.mxu0 0
        %4411 = vmatpush1.bf16.msra.mxu0 0
        %4412 = vmatprep.subr.bf16.mxu0 0
        %4413 = vmatpush1.bf16.msra.mxu0 0
        %4414 = vmatprep.subr.bf16.mxu0 0
        %4415 = vmatpush1.bf16.msra.mxu0 0
        %4416 = vmatprep.subr.bf16.mxu0 0
        %4417 = vmatpush1.bf16.msra.mxu0 0
        %4418 = vmatprep.subr.bf16.mxu0 0
        %4419 = vmatpush1.bf16.msra.mxu0 0
        %4420 = vmatprep.subr.bf16.mxu0 0
        %4421 = vmatpush1.bf16.msra.mxu0 0
        %4422 = vmatprep.subr.bf16.mxu0 0
        %4423 = vmatpush1.bf16.msra.mxu0 0
        %4424 = vmatprep.subr.bf16.mxu0 0
        %4425 = vmatpush1.bf16.msra.mxu0 0
        %4426 = vmatprep.subr.bf16.mxu0 0
        %4427 = vmatpush1.bf16.msra.mxu0 0
        %4428 = vmatprep.subr.bf16.mxu0 0
        %4429 = vmatpush1.bf16.msra.mxu0 0
        %4430 = vmatprep.subr.bf16.mxu0 0
        %4431 = vmatpush1.bf16.msra.mxu0 0
        %4432 = vmatprep.mubr.bf16.mxu0 0
        %4433 = vmatmul.mubr.bf16.gmra.mrb[0].mxu0 %v4395
        %v4434 = vpop.f32.mrb[0].mxu0
        %v4435 = vadd.f32 0.0, %v4434
        %v4436 = vpop.f32.mrb[0].mxu0
        %v4437 = vpop.f32.mrb[0].mxu0
        %v4438 = vpop.f32.mrb[0].mxu0
        %4439 = vdwg.mxu0
        %v4441 = vsel %vm3961, %v4161, 0
        %v4444 = vsel %vm4166, %v3223, 0
        %4446 = vmatprep.subr.bf16.mxu0 0
        %4447 = vmatpush1.bf16.msra.mxu0 %v4444
        %4448 = vmatprep.subr.bf16.mxu0 0
        %4449 = vmatpush1.bf16.msra.mxu0 0
        %4450 = vmatprep.subr.bf16.mxu0 0
        %4451 = vmatpush1.bf16.msra.mxu0 0
        %4452 = vmatprep.subr.bf16.mxu0 0
        %4453 = vmatpush1.bf16.msra.mxu0 0
        %4454 = vmatprep.subr.bf16.mxu0 0
        %4455 = vmatpush1.bf16.msra.mxu0 0
        %4456 = vmatprep.subr.bf16.mxu0 0
        %4457 = vmatpush1.bf16.msra.mxu0 0
        %4458 = vmatprep.subr.bf16.mxu0 0
        %4459 = vmatpush1.bf16.msra.mxu0 0
        %4460 = vmatprep.subr.bf16.mxu0 0
        %4461 = vmatpush1.bf16.msra.mxu0 0
        %4462 = vmatprep.subr.bf16.mxu0 0
        %4463 = vmatpush1.bf16.msra.mxu0 0
        %4464 = vmatprep.subr.bf16.mxu0 0
        %4465 = vmatpush1.bf16.msra.mxu0 0
        %4466 = vmatprep.subr.bf16.mxu0 0
        %4467 = vmatpush1.bf16.msra.mxu0 0
        %4468 = vmatprep.subr.bf16.mxu0 0
        %4469 = vmatpush1.bf16.msra.mxu0 0
        %4470 = vmatprep.subr.bf16.mxu0 0
        %4471 = vmatpush1.bf16.msra.mxu0 0
        %4472 = vmatprep.subr.bf16.mxu0 0
        %4473 = vmatpush1.bf16.msra.mxu0 0
        %4474 = vmatprep.subr.bf16.mxu0 0
        %4475 = vmatpush1.bf16.msra.mxu0 0
        %4476 = vmatprep.subr.bf16.mxu0 0
        %4477 = vmatpush1.bf16.msra.mxu0 0
        %4478 = vmatprep.mubr.bf16.mxu0 0
        %4479 = vmatmul.mubr.bf16.gmra.mrb[0].mxu0 %v4441
        %v4480 = vpop.f32.mrb[0].mxu0
        %v4481 = vadd.f32 0.0, %v4480
        %v4482 = vpop.f32.mrb[0].mxu0
        %v4483 = vpop.f32.mrb[0].mxu0
        %v4484 = vpop.f32.mrb[0].mxu0
        %4485 = vdwg.mxu0
        %v4487 = vsel %vm3961, %v4162, 0
        %v4490 = vsel %vm4166, %v3224, 0
        %4492 = vmatprep.subr.bf16.mxu0 0
        %4493 = vmatpush1.bf16.msra.mxu0 %v4490
        %4494 = vmatprep.subr.bf16.mxu0 0
        %4495 = vmatpush1.bf16.msra.mxu0 0
        %4496 = vmatprep.subr.bf16.mxu0 0
        %4497 = vmatpush1.bf16.msra.mxu0 0
        %4498 = vmatprep.subr.bf16.mxu0 0
        %4499 = vmatpush1.bf16.msra.mxu0 0
        %4500 = vmatprep.subr.bf16.mxu0 0
        %4501 = vmatpush1.bf16.msra.mxu0 0
        %4502 = vmatprep.subr.bf16.mxu0 0
        %4503 = vmatpush1.bf16.msra.mxu0 0
        %4504 = vmatprep.subr.bf16.mxu0 0
        %4505 = vmatpush1.bf16.msra.mxu0 0
        %4506 = vmatprep.subr.bf16.mxu0 0
        %4507 = vmatpush1.bf16.msra.mxu0 0
        %4508 = vmatprep.subr.bf16.mxu0 0
        %4509 = vmatpush1.bf16.msra.mxu0 0
        %4510 = vmatprep.subr.bf16.mxu0 0
        %4511 = vmatpush1.bf16.msra.mxu0 0
        %4512 = vmatprep.subr.bf16.mxu0 0
        %4513 = vmatpush1.bf16.msra.mxu0 0
        %4514 = vmatprep.subr.bf16.mxu0 0
        %4515 = vmatpush1.bf16.msra.mxu0 0
        %4516 = vmatprep.subr.bf16.mxu0 0
        %4517 = vmatpush1.bf16.msra.mxu0 0
        %4518 = vmatprep.subr.bf16.mxu0 0
        %4519 = vmatpush1.bf16.msra.mxu0 0
        %4520 = vmatprep.subr.bf16.mxu0 0
        %4521 = vmatpush1.bf16.msra.mxu0 0
        %4522 = vmatprep.subr.bf16.mxu0 0
        %4523 = vmatpush1.bf16.msra.mxu0 0
        %4524 = vmatprep.mubr.bf16.mxu0 0
        %4525 = vmatmul.mubr.bf16.gmra.mrb[0].mxu0 %v4487
        %v4526 = vpop.f32.mrb[0].mxu0
        %v4527 = vadd.f32 0.0, %v4526
        %v4528 = vpop.f32.mrb[0].mxu0
        %v4529 = vpop.f32.mrb[0].mxu0
        %v4530 = vpop.f32.mrb[0].mxu0
        %4531 = vdwg.mxu0
        %v4532 = vmul.f32 %v4205, %v4205
        %v4533 = vmul.f32 %v4251, %v4251
        %v4534 = vmul.f32 %v4297, %v4297
        %v4535 = vmul.f32 %v4343, %v4343
        %v4536 = vmul.f32 %v4389, %v4389
        %v4537 = vmul.f32 %v4435, %v4435
        %v4538 = vmul.f32 %v4481, %v4481
        %v4539 = vmul.f32 %v4527, %v4527
        %v4540 = vsel %vm2583, %v4532, 0.0
        %4541 = vadd.xlane.f32.xlu0 %v4540
        %v4542 = vpop.xlane.xlu0 %4541
        %v4543 = vsel %vm2583, %v4533, 0.0
        %4544 = vadd.xlane.f32.xlu0 %v4543
        %v4545 = vpop.xlane.xlu0 %4544
        %v4546 = vsel %vm2583, %v4534, 0.0
        %4547 = vadd.xlane.f32.xlu0 %v4546
        %v4548 = vpop.xlane.xlu0 %4547
        %v4549 = vsel %vm2583, %v4535, 0.0
        %4550 = vadd.xlane.f32.xlu0 %v4549
        %v4551 = vpop.xlane.xlu0 %4550
        %v4552 = vsel %vm2583, %v4536, 0.0
        %4553 = vadd.xlane.f32.xlu0 %v4552
        %v4554 = vpop.xlane.xlu0 %4553
        %v4555 = vsel %vm2583, %v4537, 0.0
        %4556 = vadd.xlane.f32.xlu0 %v4555
        %v4557 = vpop.xlane.xlu0 %4556
        %v4558 = vsel %vm2583, %v4538, 0.0
        %4559 = vadd.xlane.f32.xlu0 %v4558
        %v4560 = vpop.xlane.xlu0 %4559
        %v4561 = vsel %vm2583, %v4539, 0.0
        %4562 = vadd.xlane.f32.xlu0 %v4561
        %v4563 = vpop.xlane.xlu0 %4562
        %v4564 = vmul.f32 %v4542, %v2608
        %v4565 = vmul.f32 %v4545, %v2608
        %v4566 = vmul.f32 %v4548, %v2608
        %v4567 = vmul.f32 %v4551, %v2608
        %v4568 = vmul.f32 %v4554, %v2608
        %v4569 = vmul.f32 %v4557, %v2608
        %v4570 = vmul.f32 %v4560, %v2608
        %v4571 = vmul.f32 %v4563, %v2608
        %v4572 = vadd.f32 %v4564, 1e-05
        %v4573 = vadd.f32 %v4565, 1e-05
        %v4574 = vadd.f32 %v4566, 1e-05
        %v4575 = vadd.f32 %v4567, 1e-05
        %v4576 = vadd.f32 %v4568, 1e-05
        %v4577 = vadd.f32 %v4569, 1e-05
        %v4578 = vadd.f32 %v4570, 1e-05
        %v4579 = vadd.f32 %v4571, 1e-05
        %v4580 = vrsqrt.pop %v4572
        %v4581 = vrsqrt.pop %v4573
        %v4582 = vrsqrt.pop %v4574
        %v4583 = vrsqrt.pop %v4575
        %v4584 = vrsqrt.pop %v4576
        %v4585 = vrsqrt.pop %v4577
        %v4586 = vrsqrt.pop %v4578
        %v4587 = vrsqrt.pop %v4579
        %v4588 = vmul.f32 %v4205, %v4580
        %v4589 = vmul.f32 %v4251, %v4581
        %v4590 = vmul.f32 %v4297, %v4582
        %v4591 = vmul.f32 %v4343, %v4583
        %v4592 = vmul.f32 %v4389, %v4584
        %v4593 = vmul.f32 %v4435, %v4585
        %v4594 = vmul.f32 %v4481, %v4586
        %v4595 = vmul.f32 %v4527, %v4587
        %v4596 = vld [vmem:[%s750] sm:$0x1]
        %v4598 = vlaneseq
        %v4599 = vshrl.u32 %v4598, 7
        %v4600 = vsub.s32 0, %v4599
        %v4601 = vrot.slane %v4596, %v4600
        %v4603 = vmul.f32 %v4588, %v4601
        %v4604 = vmul.f32 %v4589, %v4601
        %v4605 = vmul.f32 %v4590, %v4601
        %v4606 = vmul.f32 %v4591, %v4601
        %v4607 = vmul.f32 %v4592, %v4601
        %v4608 = vmul.f32 %v4593, %v4601
        %v4609 = vmul.f32 %v4594, %v4601
        %v4610 = vmul.f32 %v4595, %v4601
        %4613 = vrot.lane.b32.xlu0 %v4604, 32
        %v4614 = vpop.permute.xlu0 %4613
        %4615 = vrot.lane.b32.xlu0 %v4608, 32
        %v4616 = vpop.permute.xlu0 %4615
        %4621 = vrot.lane.b32.xlu0 %v4605, 64
        %v4622 = vpop.permute.xlu0 %4621
        %4623 = vrot.lane.b32.xlu0 %v4609, 64
        %v4624 = vpop.permute.xlu0 %4623
        %4629 = vrot.lane.b32.xlu0 %v4606, 96
        %v4630 = vpop.permute.xlu0 %4629
        %4631 = vrot.lane.b32.xlu0 %v4610, 96
        %v4632 = vpop.permute.xlu0 %4631
        %v4635 = vsel %vm2583, %v4603, %v4614
        %v4636 = vsel %vm2583, %v4607, %v4616
        %v4637 = vsel %vm2682, %v4635, %v4622
        %v4638 = vsel %vm2682, %v4636, %v4624
        %v4639 = vsel %vm2685, %v4637, %v4630
        %v4640 = vsel %vm2685, %v4638, %v4632
        %v4641 = vpack.c.bf16 %v4640, %v4639
        %v4642 = vld [vmem:[%s640] sm:$0xf]
        %v4643 = vld [vmem:[%s640 + $0x4] sm:$0xf]
        %v4644 = vld [vmem:[%s640 + $0x8] sm:$0xf]
        %v4645 = vld [vmem:[%s640 + $0xc] sm:$0xf]
        %v4646 = vld [vmem:[%s640 + $0x10] sm:$0xf]
        %v4647 = vld [vmem:[%s640 + $0x14] sm:$0xf]
        %v4648 = vld [vmem:[%s640 + $0x18] sm:$0xf]
        %v4649 = vld [vmem:[%s640 + $0x1c] sm:$0xf]
        %v4650 = vld [vmem:[%s640 + $0x20] sm:$0xf]
        %v4651 = vld [vmem:[%s640 + $0x24] sm:$0xf]
        %v4652 = vld [vmem:[%s640 + $0x28] sm:$0xf]
        %v4653 = vld [vmem:[%s640 + $0x2c] sm:$0xf]
        %v4654 = vld [vmem:[%s640 + $0x30] sm:$0xf]
        %v4655 = vld [vmem:[%s640 + $0x34] sm:$0xf]
        %v4656 = vld [vmem:[%s640 + $0x38] sm:$0xf]
        %v4657 = vld [vmem:[%s640 + $0x3c] sm:$0xf]
        %v4674 = vunpack.c.l.b16 %v4642
        %v4675 = vunpack.c.l.b16 %v4643
        %v4676 = vunpack.c.l.b16 %v4644
        %v4677 = vunpack.c.l.b16 %v4645
        %v4678 = vunpack.c.l.b16 %v4646
        %v4679 = vunpack.c.l.b16 %v4647
        %v4680 = vunpack.c.l.b16 %v4648
        %v4681 = vunpack.c.l.b16 %v4649
        %v4682 = vunpack.c.l.b16 %v4650
        %v4683 = vunpack.c.l.b16 %v4651
        %v4684 = vunpack.c.l.b16 %v4652
        %v4685 = vunpack.c.l.b16 %v4653
        %v4686 = vunpack.c.l.b16 %v4654
        %v4687 = vunpack.c.l.b16 %v4655
        %v4688 = vunpack.c.l.b16 %v4656
        %v4689 = vunpack.c.l.b16 %v4657
        %v4690 = vpack.c.b16 %v4675, %v4674
        %v4691 = vpack.c.b16 %v4677, %v4676
        %v4692 = vpack.c.b16 %v4679, %v4678
        %v4693 = vpack.c.b16 %v4681, %v4680
        %v4694 = vpack.c.b16 %v4683, %v4682
        %v4695 = vpack.c.b16 %v4685, %v4684
        %v4696 = vpack.c.b16 %v4687, %v4686
        %v4697 = vpack.c.b16 %v4689, %v4688
        %4706 = vmatprep.subr.bf16.mxu0 0
        %4707 = vmatpush1.bf16.msra.mxu0 %v4690
        %4708 = vmatprep.subr.bf16.mxu0 0
        %4709 = vmatpush1.bf16.msra.mxu0 %v4691
        %4710 = vmatprep.subr.bf16.mxu0 0
        %4711 = vmatpush1.bf16.msra.mxu0 %v4692
        %4712 = vmatprep.subr.bf16.mxu0 0
        %4713 = vmatpush1.bf16.msra.mxu0 %v4693
        %4714 = vmatprep.subr.bf16.mxu0 0
        %4715 = vmatpush1.bf16.msra.mxu0 %v4694
        %4716 = vmatprep.subr.bf16.mxu0 0
        %4717 = vmatpush1.bf16.msra.mxu0 %v4695
        %4718 = vmatprep.subr.bf16.mxu0 0
        %4719 = vmatpush1.bf16.msra.mxu0 %v4696
        %4720 = vmatprep.subr.bf16.mxu0 0
        %4721 = vmatpush1.bf16.msra.mxu0 %v4697
        %4722 = vmatprep.subr.bf16.mxu0 0
        %4723 = vmatpush1.bf16.msra.mxu0 0
        %4724 = vmatprep.subr.bf16.mxu0 0
        %4725 = vmatpush1.bf16.msra.mxu0 0
        %4726 = vmatprep.subr.bf16.mxu0 0
        %4727 = vmatpush1.bf16.msra.mxu0 0
        %4728 = vmatprep.subr.bf16.mxu0 0
        %4729 = vmatpush1.bf16.msra.mxu0 0
        %4730 = vmatprep.subr.bf16.mxu0 0
        %4731 = vmatpush1.bf16.msra.mxu0 0
        %4732 = vmatprep.subr.bf16.mxu0 0
        %4733 = vmatpush1.bf16.msra.mxu0 0
        %4734 = vmatprep.subr.bf16.mxu0 0
        %4735 = vmatpush1.bf16.msra.mxu0 0
        %4736 = vmatprep.subr.bf16.mxu0 0
        %4737 = vmatpush1.bf16.msra.mxu0 0
        %4738 = vmatprep.mubr.bf16.mxu0 0
        %4739 = vmatmul.mubr.bf16.gmra.mrb[0].mxu0 %v4641
        %v4740 = vpop.f32.mrb[0].mxu0
        %v4741 = vadd.f32 0.0, %v4740
        %v4742 = vpop.f32.mrb[0].mxu0
        %v4743 = vpop.f32.mrb[0].mxu0
        %v4744 = vadd.f32 0.0, %v4743
        %v4745 = vpop.f32.mrb[0].mxu0
        %4746 = vdwg.mxu0
        %v4747 = vadd.f32 %v2794, %v4741
        %v4748 = vadd.f32 %v2795, %v4744
        %v4749 = vld [vmem:[%s744 + $0x4] sm:$0x1]
        %v4750 = vld [vmem:[%s744 + $0x5] sm:$0x1]
        %4751 = vadd.xlane.f32.xlu0 %v4747
        %v4752 = vpop.xlane.xlu0 %4751
        %4753 = vadd.xlane.f32.xlu0 %v4748
        %v4754 = vpop.xlane.xlu0 %4753
        %v4755 = vmul.f32 %v4752, %v783
        %v4756 = vmul.f32 %v4754, %v783
        %v4757 = vsub.f32 %v4747, %v4755
        %v4758 = vsub.f32 %v4748, %v4756
        %v4759 = vmul.f32 %v4757, %v4757
        %v4760 = vmul.f32 %v4758, %v4758
        %4761 = vadd.xlane.f32.xlu0 %v4759
        %v4762 = vpop.xlane.xlu0 %4761
        %4763 = vadd.xlane.f32.xlu0 %v4760
        %v4764 = vpop.xlane.xlu0 %4763
        %v4765 = vmul.f32 %v4762, %v783
        %v4766 = vmul.f32 %v4764, %v783
        %v4767 = vadd.f32 %v4765, 1e-05
        %v4768 = vadd.f32 %v4766, 1e-05
        %v4769 = vrsqrt.pop %v4767
        %v4770 = vrsqrt.pop %v4768
        %v4771 = vmul.f32 %v4757, %v4769
        %v4772 = vmul.f32 %v4758, %v4770
        %v4773 = vlaneseq
        %v4774 = vshrl.u32 %v4773, 7
        %v4775 = vsub.s32 0, %v4774
        %v4776 = vrot.slane %v4749, %v4775
        %v4777 = vmul.f32 %v4771, %v4776
        %v4778 = vmul.f32 %v4772, %v4776
        %v4779 = vlaneseq
        %v4780 = vshrl.u32 %v4779, 7
        %v4781 = vsub.s32 0, %v4780
        %v4782 = vrot.slane %v4750, %v4781
        %v4783 = vadd.f32 %v4777, %v4782
        %v4784 = vadd.f32 %v4778, %v4782
        %v4785 = vpack.c.bf16 %v4784, %v4783
        %v4786 = vld [vmem:[%s649] sm:$0xff]
        %v4787 = vld [vmem:[%s649 + $0x8] sm:$0xff]
        %v4788 = vld [vmem:[%s649 + $0x10] sm:$0xff]
        %v4789 = vld [vmem:[%s649 + $0x18] sm:$0xff]
        %v4790 = vld [vmem:[%s649 + $0x20] sm:$0xff]
        %v4791 = vld [vmem:[%s649 + $0x28] sm:$0xff]
        %v4792 = vld [vmem:[%s649 + $0x30] sm:$0xff]
        %v4793 = vld [vmem:[%s649 + $0x38] sm:$0xff]
        %v4794 = vld [vmem:[%s649 + $0x40] sm:$0xff]
        %v4795 = vld [vmem:[%s649 + $0x48] sm:$0xff]
        %v4796 = vld [vmem:[%s649 + $0x50] sm:$0xff]
        %v4797 = vld [vmem:[%s649 + $0x58] sm:$0xff]
        %v4798 = vld [vmem:[%s649 + $0x60] sm:$0xff]
        %v4799 = vld [vmem:[%s649 + $0x68] sm:$0xff]
        %v4800 = vld [vmem:[%s649 + $0x70] sm:$0xff]
        %v4801 = vld [vmem:[%s649 + $0x78] sm:$0xff]
        %v4802 = vld [vmem:[%s649 + $0x80] sm:$0xff]
        %v4803 = vld [vmem:[%s649 + $0x88] sm:$0xff]
        %v4804 = vld [vmem:[%s649 + $0x90] sm:$0xff]
        %v4805 = vld [vmem:[%s649 + $0x98] sm:$0xff]
        %v4806 = vld [vmem:[%s649 + $0xa0] sm:$0xff]
        %v4807 = vld [vmem:[%s649 + $0xa8] sm:$0xff]
        %v4808 = vld [vmem:[%s649 + $0xb0] sm:$0xff]
        %v4809 = vld [vmem:[%s649 + $0xb8] sm:$0xff]
        %v4810 = vld [vmem:[%s649 + $0xc0] sm:$0xff]
        %v4811 = vld [vmem:[%s649 + $0xc8] sm:$0xff]
        %v4812 = vld [vmem:[%s649 + $0xd0] sm:$0xff]
        %v4813 = vld [vmem:[%s649 + $0xd8] sm:$0xff]
        %v4814 = vld [vmem:[%s649 + $0xe0] sm:$0xff]
        %v4815 = vld [vmem:[%s649 + $0xe8] sm:$0xff]
        %v4816 = vld [vmem:[%s649 + $0xf0] sm:$0xff]
        %v4817 = vld [vmem:[%s649 + $0xf8] sm:$0xff]
        %v4818 = vld [vmem:[%s754] sm:$0xf]
        %v4820 = vlaneseq
        %v4821 = vshrl.u32 %v4820, 7
        %v4822 = vsub.s32 0, %v4821
        %v4823 = vrot.slane %v4818, %v4822
        %v4824 = vlaneseq
        %v4825 = vshrl.u32 %v4824, 7
        %v4826 = vsub.s32 1, %v4825
        %v4827 = vrot.slane %v4818, %v4826
        %v4828 = vlaneseq
        %v4829 = vshrl.u32 %v4828, 7
        %v4830 = vsub.s32 2, %v4829
        %v4831 = vrot.slane %v4818, %v4830
        %v4832 = vlaneseq
        %v4833 = vshrl.u32 %v4832, 7
        %v4834 = vsub.s32 3, %v4833
        %v4835 = vrot.slane %v4818, %v4834
        %v4872 = vunpack.c.l.b16 %v4786
        %v4873 = vunpack.c.h.b16 %v4786
        %v4874 = vunpack.c.l.b16 %v4787
        %v4875 = vunpack.c.h.b16 %v4787
        %v4876 = vunpack.c.l.b16 %v4788
        %v4877 = vunpack.c.h.b16 %v4788
        %v4878 = vunpack.c.l.b16 %v4789
        %v4879 = vunpack.c.h.b16 %v4789
        %v4880 = vunpack.c.l.b16 %v4790
        %v4881 = vunpack.c.h.b16 %v4790
        %v4882 = vunpack.c.l.b16 %v4791
        %v4883 = vunpack.c.h.b16 %v4791
        %v4884 = vunpack.c.l.b16 %v4792
        %v4885 = vunpack.c.h.b16 %v4792
        %v4886 = vunpack.c.l.b16 %v4793
        %v4887 = vunpack.c.h.b16 %v4793
        %v4888 = vunpack.c.l.b16 %v4794
        %v4889 = vunpack.c.h.b16 %v4794
        %v4890 = vunpack.c.l.b16 %v4795
        %v4891 = vunpack.c.h.b16 %v4795
        %v4892 = vunpack.c.l.b16 %v4796
        %v4893 = vunpack.c.h.b16 %v4796
        %v4894 = vunpack.c.l.b16 %v4797
        %v4895 = vunpack.c.h.b16 %v4797
        %v4896 = vunpack.c.l.b16 %v4798
        %v4897 = vunpack.c.h.b16 %v4798
        %v4898 = vunpack.c.l.b16 %v4799
        %v4899 = vunpack.c.h.b16 %v4799
        %v4900 = vunpack.c.l.b16 %v4800
        %v4901 = vunpack.c.h.b16 %v4800
        %v4902 = vunpack.c.l.b16 %v4801
        %v4903 = vunpack.c.h.b16 %v4801
        %v4904 = vunpack.c.l.b16 %v4802
        %v4905 = vunpack.c.h.b16 %v4802
        %v4906 = vunpack.c.l.b16 %v4803
        %v4907 = vunpack.c.h.b16 %v4803
        %v4908 = vunpack.c.l.b16 %v4804
        %v4909 = vunpack.c.h.b16 %v4804
        %v4910 = vunpack.c.l.b16 %v4805
        %v4911 = vunpack.c.h.b16 %v4805
        %v4912 = vunpack.c.l.b16 %v4806
        %v4913 = vunpack.c.h.b16 %v4806
        %v4914 = vunpack.c.l.b16 %v4807
        %v4915 = vunpack.c.h.b16 %v4807
        %v4916 = vunpack.c.l.b16 %v4808
        %v4917 = vunpack.c.h.b16 %v4808
        %v4918 = vunpack.c.l.b16 %v4809
        %v4919 = vunpack.c.h.b16 %v4809
        %v4920 = vunpack.c.l.b16 %v4810
        %v4921 = vunpack.c.h.b16 %v4810
        %v4922 = vunpack.c.l.b16 %v4811
        %v4923 = vunpack.c.h.b16 %v4811
        %v4924 = vunpack.c.l.b16 %v4812
        %v4925 = vunpack.c.h.b16 %v4812
        %v4926 = vunpack.c.l.b16 %v4813
        %v4927 = vunpack.c.h.b16 %v4813
        %v4928 = vunpack.c.l.b16 %v4814
        %v4929 = vunpack.c.h.b16 %v4814
        %v4930 = vunpack.c.l.b16 %v4815
        %v4931 = vunpack.c.h.b16 %v4815
        %v4932 = vunpack.c.l.b16 %v4816
        %v4933 = vunpack.c.h.b16 %v4816
        %v4934 = vunpack.c.l.b16 %v4817
        %v4935 = vunpack.c.h.b16 %v4817
        %v4936 = vpack.c.b16 %v4876, %v4872
        %v4937 = vpack.c.b16 %v4877, %v4873
        %v4938 = vpack.c.b16 %v4878, %v4874
        %v4939 = vpack.c.b16 %v4879, %v4875
        %v4940 = vpack.c.b16 %v4884, %v4880
        %v4941 = vpack.c.b16 %v4885, %v4881
        %v4942 = vpack.c.b16 %v4886, %v4882
        %v4943 = vpack.c.b16 %v4887, %v4883
        %v4944 = vpack.c.b16 %v4892, %v4888
        %v4945 = vpack.c.b16 %v4893, %v4889
        %v4946 = vpack.c.b16 %v4894, %v4890
        %v4947 = vpack.c.b16 %v4895, %v4891
        %v4948 = vpack.c.b16 %v4900, %v4896
        %v4949 = vpack.c.b16 %v4901, %v4897
        %v4950 = vpack.c.b16 %v4902, %v4898
        %v4951 = vpack.c.b16 %v4903, %v4899
        %v4952 = vpack.c.b16 %v4908, %v4904
        %v4953 = vpack.c.b16 %v4909, %v4905
        %v4954 = vpack.c.b16 %v4910, %v4906
        %v4955 = vpack.c.b16 %v4911, %v4907
        %v4956 = vpack.c.b16 %v4916, %v4912
        %v4957 = vpack.c.b16 %v4917, %v4913
        %v4958 = vpack.c.b16 %v4918, %v4914
        %v4959 = vpack.c.b16 %v4919, %v4915
        %v4960 = vpack.c.b16 %v4924, %v4920
        %v4961 = vpack.c.b16 %v4925, %v4921
        %v4962 = vpack.c.b16 %v4926, %v4922
        %v4963 = vpack.c.b16 %v4927, %v4923
        %v4964 = vpack.c.b16 %v4932, %v4928
        %v4965 = vpack.c.b16 %v4933, %v4929
        %v4966 = vpack.c.b16 %v4934, %v4930
        %v4967 = vpack.c.b16 %v4935, %v4931
        %5000 = vmatprep.subr.bf16.mxu0 %v4937
        %5001 = vmatpush1.bf16.msra.mxu0 %v4936
        %5002 = vmatprep.subr.bf16.mxu0 %v4941
        %5003 = vmatpush1.bf16.msra.mxu0 %v4940
        %5004 = vmatprep.subr.bf16.mxu0 %v4945
        %5005 = vmatpush1.bf16.msra.mxu0 %v4944
        %5006 = vmatprep.subr.bf16.mxu0 %v4949
        %5007 = vmatpush1.bf16.msra.mxu0 %v4948
        %5008 = vmatprep.subr.bf16.mxu0 %v4953
        %5009 = vmatpush1.bf16.msra.mxu0 %v4952
        %5010 = vmatprep.subr.bf16.mxu0 %v4957
        %5011 = vmatpush1.bf16.msra.mxu0 %v4956
        %5012 = vmatprep.subr.bf16.mxu0 %v4961
        %5013 = vmatpush1.bf16.msra.mxu0 %v4960
        %5014 = vmatprep.subr.bf16.mxu0 %v4965
        %5015 = vmatpush1.bf16.msra.mxu0 %v4964
        %5016 = vmatprep.subr.bf16.mxu0 0
        %5017 = vmatpush1.bf16.msra.mxu0 0
        %5018 = vmatprep.subr.bf16.mxu0 0
        %5019 = vmatpush1.bf16.msra.mxu0 0
        %5020 = vmatprep.subr.bf16.mxu0 0
        %5021 = vmatpush1.bf16.msra.mxu0 0
        %5022 = vmatprep.subr.bf16.mxu0 0
        %5023 = vmatpush1.bf16.msra.mxu0 0
        %5024 = vmatprep.subr.bf16.mxu0 0
        %5025 = vmatpush1.bf16.msra.mxu0 0
        %5026 = vmatprep.subr.bf16.mxu0 0
        %5027 = vmatpush1.bf16.msra.mxu0 0
        %5028 = vmatprep.subr.bf16.mxu0 0
        %5029 = vmatpush1.bf16.msra.mxu0 0
        %5030 = vmatprep.subr.bf16.mxu0 0
        %5031 = vmatpush1.bf16.msra.mxu0 0
        %5032 = vmatprep.mubr.bf16.mxu0 0
        %5033 = vmatmul.mubr.bf16.gmra.mrb[0].mxu0 %v4785
        %v5034 = vpop.f32.mrb[0].mxu0
        %v5035 = vadd.f32 %v4823, %v5034
        %v5036 = vpop.f32.mrb[0].mxu0
        %v5037 = vadd.f32 %v4827, %v5036
        %v5038 = vpop.f32.mrb[0].mxu0
        %v5039 = vadd.f32 %v4823, %v5038
        %v5040 = vpop.f32.mrb[0].mxu0
        %v5041 = vadd.f32 %v4827, %v5040
        %5042 = vdwg.mxu0
        %5043 = vmatprep.subr.bf16.mxu0 %v4939
        %5044 = vmatpush1.bf16.msra.mxu0 %v4938
        %5045 = vmatprep.subr.bf16.mxu0 %v4943
        %5046 = vmatpush1.bf16.msra.mxu0 %v4942
        %5047 = vmatprep.subr.bf16.mxu0 %v4947
        %5048 = vmatpush1.bf16.msra.mxu0 %v4946
        %5049 = vmatprep.subr.bf16.mxu0 %v4951
        %5050 = vmatpush1.bf16.msra.mxu0 %v4950
        %5051 = vmatprep.subr.bf16.mxu0 %v4955
        %5052 = vmatpush1.bf16.msra.mxu0 %v4954
        %5053 = vmatprep.subr.bf16.mxu0 %v4959
        %5054 = vmatpush1.bf16.msra.mxu0 %v4958
        %5055 = vmatprep.subr.bf16.mxu0 %v4963
        %5056 = vmatpush1.bf16.msra.mxu0 %v4962
        %5057 = vmatprep.subr.bf16.mxu0 %v4967
        %5058 = vmatpush1.bf16.msra.mxu0 %v4966
        %5059 = vmatprep.subr.bf16.mxu0 0
        %5060 = vmatpush1.bf16.msra.mxu0 0
        %5061 = vmatprep.subr.bf16.mxu0 0
        %5062 = vmatpush1.bf16.msra.mxu0 0
        %5063 = vmatprep.subr.bf16.mxu0 0
        %5064 = vmatpush1.bf16.msra.mxu0 0
        %5065 = vmatprep.subr.bf16.mxu0 0
        %5066 = vmatpush1.bf16.msra.mxu0 0
        %5067 = vmatprep.subr.bf16.mxu0 0
        %5068 = vmatpush1.bf16.msra.mxu0 0
        %5069 = vmatprep.subr.bf16.mxu0 0
        %5070 = vmatpush1.bf16.msra.mxu0 0
        %5071 = vmatprep.subr.bf16.mxu0 0
        %5072 = vmatpush1.bf16.msra.mxu0 0
        %5073 = vmatprep.subr.bf16.mxu0 0
        %5074 = vmatpush1.bf16.msra.mxu0 0
        %5075 = vmatprep.mubr.bf16.mxu0 0
        %5076 = vmatmul.mubr.bf16.gmra.mrb[0].mxu0 %v4785
        %v5077 = vpop.f32.mrb[0].mxu0
        %v5078 = vadd.f32 %v4831, %v5077
        %v5079 = vpop.f32.mrb[0].mxu0
        %v5080 = vadd.f32 %v4835, %v5079
        %v5081 = vpop.f32.mrb[0].mxu0
        %v5082 = vadd.f32 %v4831, %v5081
        %v5083 = vpop.f32.mrb[0].mxu0
        %v5084 = vadd.f32 %v4835, %v5083
        %5085 = vdwg.mxu0
        %v5086 = vmul.f32 %v5035, 0.5
        %v5087 = vmul.f32 %v5037, 0.5
        %v5088 = vmul.f32 %v5078, 0.5
        %v5089 = vmul.f32 %v5080, 0.5
        %v5090 = vmul.f32 %v5039, 0.5
        %v5091 = vmul.f32 %v5041, 0.5
        %v5092 = vmul.f32 %v5082, 0.5
        %v5093 = vmul.f32 %v5084, 0.5
        %v5094 = vmul.f32 %v5035, 0.70710677
        %v5095 = vmul.f32 %v5037, 0.70710677
        %v5096 = vmul.f32 %v5078, 0.70710677
        %v5097 = vmul.f32 %v5080, 0.70710677
        %v5098 = vmul.f32 %v5039, 0.70710677
        %v5099 = vmul.f32 %v5041, 0.70710677
        %v5100 = vmul.f32 %v5082, 0.70710677
        %v5101 = vmul.f32 %v5084, 0.70710677
        %v5102 = verf.f32.pop %v5094
        %v5103 = verf.f32.pop %v5095
        %v5104 = verf.f32.pop %v5096
        %v5105 = verf.f32.pop %v5097
        %v5106 = verf.f32.pop %v5098
        %v5107 = verf.f32.pop %v5099
        %v5108 = verf.f32.pop %v5100
        %v5109 = verf.f32.pop %v5101
        %v5110 = vadd.f32 %v5102, 1.0
        %v5111 = vadd.f32 %v5103, 1.0
        %v5112 = vadd.f32 %v5104, 1.0
        %v5113 = vadd.f32 %v5105, 1.0
        %v5114 = vadd.f32 %v5106, 1.0
        %v5115 = vadd.f32 %v5107, 1.0
        %v5116 = vadd.f32 %v5108, 1.0
        %v5117 = vadd.f32 %v5109, 1.0
        %v5118 = vmul.f32 %v5086, %v5110
        %v5119 = vmul.f32 %v5087, %v5111
        %v5120 = vmul.f32 %v5088, %v5112
        %v5121 = vmul.f32 %v5089, %v5113
        %v5122 = vmul.f32 %v5090, %v5114
        %v5123 = vmul.f32 %v5091, %v5115
        %v5124 = vmul.f32 %v5092, %v5116
        %v5125 = vmul.f32 %v5093, %v5117
        %v5126 = vpack.c.bf16 %v5122, %v5118
        %v5127 = vpack.c.bf16 %v5123, %v5119
        %v5128 = vpack.c.bf16 %v5124, %v5120
        %v5129 = vpack.c.bf16 %v5125, %v5121
        %v5130 = vld [vmem:[%s658] sm:$0xf]
        %v5131 = vld [vmem:[%s658 + $0x4] sm:$0xf]
        %v5132 = vld [vmem:[%s658 + $0x8] sm:$0xf]
        %v5133 = vld [vmem:[%s658 + $0xc] sm:$0xf]
        %v5134 = vld [vmem:[%s658 + $0x10] sm:$0xf]
        %v5135 = vld [vmem:[%s658 + $0x14] sm:$0xf]
        %v5136 = vld [vmem:[%s658 + $0x18] sm:$0xf]
        %v5137 = vld [vmem:[%s658 + $0x1c] sm:$0xf]
        %v5138 = vld [vmem:[%s658 + $0x20] sm:$0xf]
        %v5139 = vld [vmem:[%s658 + $0x24] sm:$0xf]
        %v5140 = vld [vmem:[%s658 + $0x28] sm:$0xf]
        %v5141 = vld [vmem:[%s658 + $0x2c] sm:$0xf]
        %v5142 = vld [vmem:[%s658 + $0x30] sm:$0xf]
        %v5143 = vld [vmem:[%s658 + $0x34] sm:$0xf]
        %v5144 = vld [vmem:[%s658 + $0x38] sm:$0xf]
        %v5145 = vld [vmem:[%s658 + $0x3c] sm:$0xf]
        %v5146 = vld [vmem:[%s658 + $0x40] sm:$0xf]
        %v5147 = vld [vmem:[%s658 + $0x44] sm:$0xf]
        %v5148 = vld [vmem:[%s658 + $0x48] sm:$0xf]
        %v5149 = vld [vmem:[%s658 + $0x4c] sm:$0xf]
        %v5150 = vld [vmem:[%s658 + $0x50] sm:$0xf]
        %v5151 = vld [vmem:[%s658 + $0x54] sm:$0xf]
        %v5152 = vld [vmem:[%s658 + $0x58] sm:$0xf]
        %v5153 = vld [vmem:[%s658 + $0x5c] sm:$0xf]
        %v5154 = vld [vmem:[%s658 + $0x60] sm:$0xf]
        %v5155 = vld [vmem:[%s658 + $0x64] sm:$0xf]
        %v5156 = vld [vmem:[%s658 + $0x68] sm:$0xf]
        %v5157 = vld [vmem:[%s658 + $0x6c] sm:$0xf]
        %v5158 = vld [vmem:[%s658 + $0x70] sm:$0xf]
        %v5159 = vld [vmem:[%s658 + $0x74] sm:$0xf]
        %v5160 = vld [vmem:[%s658 + $0x78] sm:$0xf]
        %v5161 = vld [vmem:[%s658 + $0x7c] sm:$0xf]
        %v5162 = vld [vmem:[%s658 + $0x80] sm:$0xf]
        %v5163 = vld [vmem:[%s658 + $0x84] sm:$0xf]
        %v5164 = vld [vmem:[%s658 + $0x88] sm:$0xf]
        %v5165 = vld [vmem:[%s658 + $0x8c] sm:$0xf]
        %v5166 = vld [vmem:[%s658 + $0x90] sm:$0xf]
        %v5167 = vld [vmem:[%s658 + $0x94] sm:$0xf]
        %v5168 = vld [vmem:[%s658 + $0x98] sm:$0xf]
        %v5169 = vld [vmem:[%s658 + $0x9c] sm:$0xf]
        %v5170 = vld [vmem:[%s658 + $0xa0] sm:$0xf]
        %v5171 = vld [vmem:[%s658 + $0xa4] sm:$0xf]
        %v5172 = vld [vmem:[%s658 + $0xa8] sm:$0xf]
        %v5173 = vld [vmem:[%s658 + $0xac] sm:$0xf]
        %v5174 = vld [vmem:[%s658 + $0xb0] sm:$0xf]
        %v5175 = vld [vmem:[%s658 + $0xb4] sm:$0xf]
        %v5176 = vld [vmem:[%s658 + $0xb8] sm:$0xf]
        %v5177 = vld [vmem:[%s658 + $0xbc] sm:$0xf]
        %v5178 = vld [vmem:[%s658 + $0xc0] sm:$0xf]
        %v5179 = vld [vmem:[%s658 + $0xc4] sm:$0xf]
        %v5180 = vld [vmem:[%s658 + $0xc8] sm:$0xf]
        %v5181 = vld [vmem:[%s658 + $0xcc] sm:$0xf]
        %v5182 = vld [vmem:[%s658 + $0xd0] sm:$0xf]
        %v5183 = vld [vmem:[%s658 + $0xd4] sm:$0xf]
        %v5184 = vld [vmem:[%s658 + $0xd8] sm:$0xf]
        %v5185 = vld [vmem:[%s658 + $0xdc] sm:$0xf]
        %v5186 = vld [vmem:[%s658 + $0xe0] sm:$0xf]
        %v5187 = vld [vmem:[%s658 + $0xe4] sm:$0xf]
        %v5188 = vld [vmem:[%s658 + $0xe8] sm:$0xf]
        %v5189 = vld [vmem:[%s658 + $0xec] sm:$0xf]
        %v5190 = vld [vmem:[%s658 + $0xf0] sm:$0xf]
        %v5191 = vld [vmem:[%s658 + $0xf4] sm:$0xf]
        %v5192 = vld [vmem:[%s658 + $0xf8] sm:$0xf]
        %v5193 = vld [vmem:[%s658 + $0xfc] sm:$0xf]
        %v5194 = vld [vmem:[%s757] sm:$0x1]
        %v5196 = vlaneseq
        %v5197 = vshrl.u32 %v5196, 7
        %v5198 = vsub.s32 0, %v5197
        %v5199 = vrot.slane %v5194, %v5198
        %v5265 = vunpack.c.l.b16 %v5130
        %v5266 = vunpack.c.l.b16 %v5131
        %v5267 = vunpack.c.l.b16 %v5132
        %v5268 = vunpack.c.l.b16 %v5133
        %v5269 = vunpack.c.l.b16 %v5134
        %v5270 = vunpack.c.l.b16 %v5135
        %v5271 = vunpack.c.l.b16 %v5136
        %v5272 = vunpack.c.l.b16 %v5137
        %v5273 = vunpack.c.l.b16 %v5138
        %v5274 = vunpack.c.l.b16 %v5139
        %v5275 = vunpack.c.l.b16 %v5140
        %v5276 = vunpack.c.l.b16 %v5141
        %v5277 = vunpack.c.l.b16 %v5142
        %v5278 = vunpack.c.l.b16 %v5143
        %v5279 = vunpack.c.l.b16 %v5144
        %v5280 = vunpack.c.l.b16 %v5145
        %v5281 = vunpack.c.l.b16 %v5146
        %v5282 = vunpack.c.l.b16 %v5147
        %v5283 = vunpack.c.l.b16 %v5148
        %v5284 = vunpack.c.l.b16 %v5149
        %v5285 = vunpack.c.l.b16 %v5150
        %v5286 = vunpack.c.l.b16 %v5151
        %v5287 = vunpack.c.l.b16 %v5152
        %v5288 = vunpack.c.l.b16 %v5153
        %v5289 = vunpack.c.l.b16 %v5154
        %v5290 = vunpack.c.l.b16 %v5155
        %v5291 = vunpack.c.l.b16 %v5156
        %v5292 = vunpack.c.l.b16 %v5157
        %v5293 = vunpack.c.l.b16 %v5158
        %v5294 = vunpack.c.l.b16 %v5159
        %v5295 = vunpack.c.l.b16 %v5160
        %v5296 = vunpack.c.l.b16 %v5161
        %v5297 = vunpack.c.l.b16 %v5162
        %v5298 = vunpack.c.l.b16 %v5163
        %v5299 = vunpack.c.l.b16 %v5164
        %v5300 = vunpack.c.l.b16 %v5165
        %v5301 = vunpack.c.l.b16 %v5166
        %v5302 = vunpack.c.l.b16 %v5167
        %v5303 = vunpack.c.l.b16 %v5168
        %v5304 = vunpack.c.l.b16 %v5169
        %v5305 = vunpack.c.l.b16 %v5170
        %v5306 = vunpack.c.l.b16 %v5171
        %v5307 = vunpack.c.l.b16 %v5172
        %v5308 = vunpack.c.l.b16 %v5173
        %v5309 = vunpack.c.l.b16 %v5174
        %v5310 = vunpack.c.l.b16 %v5175
        %v5311 = vunpack.c.l.b16 %v5176
        %v5312 = vunpack.c.l.b16 %v5177
        %v5313 = vunpack.c.l.b16 %v5178
        %v5314 = vunpack.c.l.b16 %v5179
        %v5315 = vunpack.c.l.b16 %v5180
        %v5316 = vunpack.c.l.b16 %v5181
        %v5317 = vunpack.c.l.b16 %v5182
        %v5318 = vunpack.c.l.b16 %v5183
        %v5319 = vunpack.c.l.b16 %v5184
        %v5320 = vunpack.c.l.b16 %v5185
        %v5321 = vunpack.c.l.b16 %v5186
        %v5322 = vunpack.c.l.b16 %v5187
        %v5323 = vunpack.c.l.b16 %v5188
        %v5324 = vunpack.c.l.b16 %v5189
        %v5325 = vunpack.c.l.b16 %v5190
        %v5326 = vunpack.c.l.b16 %v5191
        %v5327 = vunpack.c.l.b16 %v5192
        %v5328 = vunpack.c.l.b16 %v5193
        %v5329 = vpack.c.b16 %v5266, %v5265
        %v5330 = vpack.c.b16 %v5268, %v5267
        %v5331 = vpack.c.b16 %v5270, %v5269
        %v5332 = vpack.c.b16 %v5272, %v5271
        %v5333 = vpack.c.b16 %v5274, %v5273
        %v5334 = vpack.c.b16 %v5276, %v5275
        %v5335 = vpack.c.b16 %v5278, %v5277
        %v5336 = vpack.c.b16 %v5280, %v5279
        %v5337 = vpack.c.b16 %v5282, %v5281
        %v5338 = vpack.c.b16 %v5284, %v5283
        %v5339 = vpack.c.b16 %v5286, %v5285
        %v5340 = vpack.c.b16 %v5288, %v5287
        %v5341 = vpack.c.b16 %v5290, %v5289
        %v5342 = vpack.c.b16 %v5292, %v5291
        %v5343 = vpack.c.b16 %v5294, %v5293
        %v5344 = vpack.c.b16 %v5296, %v5295
        %v5345 = vpack.c.b16 %v5298, %v5297
        %v5346 = vpack.c.b16 %v5300, %v5299
        %v5347 = vpack.c.b16 %v5302, %v5301
        %v5348 = vpack.c.b16 %v5304, %v5303
        %v5349 = vpack.c.b16 %v5306, %v5305
        %v5350 = vpack.c.b16 %v5308, %v5307
        %v5351 = vpack.c.b16 %v5310, %v5309
        %v5352 = vpack.c.b16 %v5312, %v5311
        %v5353 = vpack.c.b16 %v5314, %v5313
        %v5354 = vpack.c.b16 %v5316, %v5315
        %v5355 = vpack.c.b16 %v5318, %v5317
        %v5356 = vpack.c.b16 %v5320, %v5319
        %v5357 = vpack.c.b16 %v5322, %v5321
        %v5358 = vpack.c.b16 %v5324, %v5323
        %v5359 = vpack.c.b16 %v5326, %v5325
        %v5360 = vpack.c.b16 %v5328, %v5327
        %5393 = vmatprep.subr.bf16.mxu0 0
        %5394 = vmatpush1.bf16.msra.mxu0 %v5329
        %5395 = vmatprep.subr.bf16.mxu0 0
        %5396 = vmatpush1.bf16.msra.mxu0 %v5330
        %5397 = vmatprep.subr.bf16.mxu0 0
        %5398 = vmatpush1.bf16.msra.mxu0 %v5331
        %5399 = vmatprep.subr.bf16.mxu0 0
        %5400 = vmatpush1.bf16.msra.mxu0 %v5332
        %5401 = vmatprep.subr.bf16.mxu0 0
        %5402 = vmatpush1.bf16.msra.mxu0 %v5333
        %5403 = vmatprep.subr.bf16.mxu0 0
        %5404 = vmatpush1.bf16.msra.mxu0 %v5334
        %5405 = vmatprep.subr.bf16.mxu0 0
        %5406 = vmatpush1.bf16.msra.mxu0 %v5335
        %5407 = vmatprep.subr.bf16.mxu0 0
        %5408 = vmatpush1.bf16.msra.mxu0 %v5336
        %5409 = vmatprep.subr.bf16.mxu0 0
        %5410 = vmatpush1.bf16.msra.mxu0 %v5337
        %5411 = vmatprep.subr.bf16.mxu0 0
        %5412 = vmatpush1.bf16.msra.mxu0 %v5338
        %5413 = vmatprep.subr.bf16.mxu0 0
        %5414 = vmatpush1.bf16.msra.mxu0 %v5339
        %5415 = vmatprep.subr.bf16.mxu0 0
        %5416 = vmatpush1.bf16.msra.mxu0 %v5340
        %5417 = vmatprep.subr.bf16.mxu0 0
        %5418 = vmatpush1.bf16.msra.mxu0 %v5341
        %5419 = vmatprep.subr.bf16.mxu0 0
        %5420 = vmatpush1.bf16.msra.mxu0 %v5342
        %5421 = vmatprep.subr.bf16.mxu0 0
        %5422 = vmatpush1.bf16.msra.mxu0 %v5343
        %5423 = vmatprep.subr.bf16.mxu0 0
        %5424 = vmatpush1.bf16.msra.mxu0 %v5344
        %5425 = vmatprep.mubr.bf16.mxu0 %v5127
        %5426 = vmatmul.mubr.bf16.gmra.mrb[0].mxu0 %v5126
        %v5427 = vpop.f32.mrb[0].mxu0
        %v5428 = vadd.f32 %v5199, %v5427
        %v5429 = vpop.f32.mrb[0].mxu0
        %v5430 = vpop.f32.mrb[0].mxu0
        %v5431 = vadd.f32 %v5199, %v5430
        %v5432 = vpop.f32.mrb[0].mxu0
        %5433 = vdwg.mxu0
        %5434 = vmatprep.subr.bf16.mxu0 0
        %5435 = vmatpush1.bf16.msra.mxu0 %v5345
        %5436 = vmatprep.subr.bf16.mxu0 0
        %5437 = vmatpush1.bf16.msra.mxu0 %v5346
        %5438 = vmatprep.subr.bf16.mxu0 0
        %5439 = vmatpush1.bf16.msra.mxu0 %v5347
        %5440 = vmatprep.subr.bf16.mxu0 0
        %5441 = vmatpush1.bf16.msra.mxu0 %v5348
        %5442 = vmatprep.subr.bf16.mxu0 0
        %5443 = vmatpush1.bf16.msra.mxu0 %v5349
        %5444 = vmatprep.subr.bf16.mxu0 0
        %5445 = vmatpush1.bf16.msra.mxu0 %v5350
        %5446 = vmatprep.subr.bf16.mxu0 0
        %5447 = vmatpush1.bf16.msra.mxu0 %v5351
        %5448 = vmatprep.subr.bf16.mxu0 0
        %5449 = vmatpush1.bf16.msra.mxu0 %v5352
        %5450 = vmatprep.subr.bf16.mxu0 0
        %5451 = vmatpush1.bf16.msra.mxu0 %v5353
        %5452 = vmatprep.subr.bf16.mxu0 0
        %5453 = vmatpush1.bf16.msra.mxu0 %v5354
        %5454 = vmatprep.subr.bf16.mxu0 0
        %5455 = vmatpush1.bf16.msra.mxu0 %v5355
        %5456 = vmatprep.subr.bf16.mxu0 0
        %5457 = vmatpush1.bf16.msra.mxu0 %v5356
        %5458 = vmatprep.subr.bf16.mxu0 0
        %5459 = vmatpush1.bf16.msra.mxu0 %v5357
        %5460 = vmatprep.subr.bf16.mxu0 0
        %5461 = vmatpush1.bf16.msra.mxu0 %v5358
        %5462 = vmatprep.subr.bf16.mxu0 0
        %5463 = vmatpush1.bf16.msra.mxu0 %v5359
        %5464 = vmatprep.subr.bf16.mxu0 0
        %5465 = vmatpush1.bf16.msra.mxu0 %v5360
        %5466 = vmatprep.mubr.bf16.mxu0 %v5129
        %5467 = vmatmul.mubr.bf16.gmra.mrb[0].mxu0 %v5128
        %v5468 = vpop.f32.mrb[0].mxu0
        %v5469 = vadd.f32 %v5428, %v5468
        %v5470 = vpop.f32.mrb[0].mxu0
        %v5471 = vpop.f32.mrb[0].mxu0
        %v5472 = vadd.f32 %v5431, %v5471
        %v5473 = vpop.f32.mrb[0].mxu0
        %5474 = vdwg.mxu0
        %v5475 = vadd.f32 %v4747, %v5469
        %v5476 = vadd.f32 %v4748, %v5472
        %5477 = vst [vmem:[#allocation15] sm:$0xff] %v5475
        %5478 = vst [vmem:[#allocation15 + $0x8] sm:$0xff] %v5476
        // Predicated region
        $region109: #{stock_decoder.1} parent=75 // pred_check
          %p5479 = pneg %p401
        $region110: #{stock_decoder.1} parent=75 // pred_check_branch
          %5481 = sbr.rel (%p5479) target = $region112
        $region111: #{stock_decoder.1} parent=75 // pred_region
          %s5483 = ssub.s32 256, 256
          %5484 = vsyncadd [#allocation4], %s5483
          %s5485 = sshll.u32 [#allocation15], 4
          %s5486 = int_to_ptr.vmem [resolvable:$true] %s5485
          %5491 = dma.vmem_to_hbm [thread:$0]  %s5486, 256, %s14, [#allocation4], 128, 128, 8
        $region112: #{stock_decoder.1} parent=75 // pred_fallthru
          _
        // Predicated region
        $region113: #{stock_decoder.1} parent=75 // pred_check
          %p5492 = pneg %p401
        $region114: #{stock_decoder.1} parent=75 // pred_check_branch
          %5494 = sbr.rel (%p5492) target = $region116
        $region115: #{stock_decoder.1} parent=75 // pred_region
          %5495 = dma.done [#allocation4], 256
        $region116: #{stock_decoder.1} parent=75 // pred_fallthru
          _
      $region76: #{stock_decoder.1} parent=5 // pred_fallthru
        _
      %p5496 = scmp.le.s32.totalorder 2, %s34
      // Predicated region
      $region117: #{stock_decoder.1} parent=5 // pred_check
        %p5497 = pneg %p5496
      $region118: #{stock_decoder.1} parent=5 // pred_check_branch
        %5499 = sbr.rel (%p5497) target = $region120
      $region119: #{stock_decoder.1} parent=5 // pred_region
        %s5500 = ssub.s32 %s34, 2
      $region120: #{stock_decoder.1} parent=5 // pred_fallthru
        _
    $region6: #{stock_decoder.1} parent=1 // loop_footer
      %s38 = sadd.s32 1, %s34
    $region7: #{stock_decoder.1} parent=1 // loop_footer_branch
      %33 = sbr.rel target = $region3
    $region8: #{stock_decoder.1} parent=1 // loop_exit
      _
    %5501 = vsyncpa [#allocation3], 1
    %s5502 = scalar_lea.sflag [#allocation3], 1
    %5503 = vsyncpa %s5502, 1
    %5504 = vsyncpa [#allocation8], 1
    %s5505 = scalar_lea.sflag [#allocation8], 1
    %5506 = vsyncpa %s5505, 1
    %5507 = vsyncpa [#allocation11], 1
    %s5508 = scalar_lea.sflag [#allocation11], 1
    %5509 = vsyncpa %s5508, 1
    %5510 = vsyncpa [#allocation14], 1
    %s5511 = scalar_lea.sflag [#allocation14], 1
    %5512 = vsyncpa %s5511, 1
    %5513 = vsyncpa [#allocation4], 1
    %s5514 = scalar_lea.sflag [#allocation4], 1
    %5515 = vsyncpa %s5514, 1
    %5516 = vsyncpa [#allocation5], 1
    %s5517 = scalar_lea.sflag [#allocation5], 1
    %5518 = vsyncpa %s5517, 1

</llo_original>
